<compile_context>
chip_gen: v6e
topology: v6e:2x2x1
jax: 0.10.0
libtpu: 0.0.40
codegen_flags: <defaults>
</compile_context>

<pallas_src>
import math
import functools

import jax
import jax.numpy as jnp
from jax.experimental import pallas as pl
from jax.experimental.pallas import tpu as pltpu


def _mhca_kernel(num_heads, depth, kv_chunk, n_kv_chunks, approx_recip,
                 q_ref, v_ref,
                 wq_ref, bq_ref, wk_ref, bk_ref, wv_ref, bv_ref,
                 wd_ref, bd_ref,
                 out_ref,
                 k_scratch, v_scratch):
    """One (batch, parallel-q-group, q-tile) grid cell.

    q_ref   : (1, TQ, D)   query-input tile
    v_ref   : (1, Lk, D)   key/value input (constant block index per batch)
    w*_ref  : (D, D)       pre-transposed projection weights (f32 or bf16)
    b*_ref  : (1, D)       biases (f32)
    out_ref : (1, TQ, D)
    k/v_scratch : (Lk, D)  cached K/V projections, persist across q-tiles
    """
    compute_dtype = wq_ref.dtype          # bf16 weights -> bf16 MXU operands

    # ---- K/V projections: once per (batch, parallel group), reused for every
    # q-tile of the inner ("arbitrary") grid axis. ----
    @pl.when(pl.program_id(2) == 0)
    def _():
        v_in = v_ref[0].astype(compute_dtype)                       # (Lk, D)
        k_scratch[...] = (jnp.dot(v_in, wk_ref[...],
                                  preferred_element_type=jnp.float32)
                          + bk_ref[...]).astype(compute_dtype)
        v_scratch[...] = (jnp.dot(v_in, wv_ref[...],
                                  preferred_element_type=jnp.float32)
                          + bv_ref[...]).astype(compute_dtype)

    # ---- Q projection, softmax scale folded into q. ----
    q_in = q_ref[0].astype(compute_dtype)                            # (TQ, D)
    scale = 1.0 / math.sqrt(float(depth))
    q = (jnp.dot(q_in, wq_ref[...], preferred_element_type=jnp.float32)
         + bq_ref[...]) * scale
    tq = q.shape[0]
    qh = q.astype(compute_dtype).reshape(tq, num_heads, depth).transpose(1, 0, 2)

    def heads(rows):
        # (C, D) -> (H, C, depth); lane dim stays last. Done only on cached
        # projections (K/V relayout amortized over all q-tiles of the batch).
        c = rows.shape[0]
        return rows.reshape(c, num_heads, depth).transpose(1, 0, 2)

    if n_kv_chunks == 1:
        # Whole key sequence fits the VMEM budget: single-pass stable softmax.
        kh = heads(k_scratch[...])
        vh = heads(v_scratch[...])
        s = jnp.einsum("hqd,hkd->hqk", qh, kh,
                       preferred_element_type=jnp.float32)           # (H,TQ,Lk)
        s = s - jnp.max(s, axis=-1, keepdims=True)
        p = jnp.exp(s)
        l = jnp.sum(p, axis=-1, keepdims=True)
        ctx = jnp.einsum("hqk,hkd->hqd", p.astype(compute_dtype), vh,
                         preferred_element_type=jnp.float32)
    else:
        # Flash-style online softmax: bounds f32 score/prob intermediates to
        # (H, TQ, kv_chunk) regardless of Lk (mandatory for v7x's 64 MiB VMEM).
        def body(c, carry):
            m, l, acc = carry
            start = pl.multiple_of(c * kv_chunk, kv_chunk)
            kh = heads(k_scratch[pl.ds(start, kv_chunk), :])
            vh = heads(v_scratch[pl.ds(start, kv_chunk), :])
            s = jnp.einsum("hqd,hkd->hqk", qh, kh,
                           preferred_element_type=jnp.float32)
            m_new = jnp.maximum(m, jnp.max(s, axis=-1, keepdims=True))
            alpha = jnp.exp(m - m_new)
            p = jnp.exp(s - m_new)
            l = alpha * l + jnp.sum(p, axis=-1, keepdims=True)
            acc = alpha * acc + jnp.einsum("hqk,hkd->hqd",
                                           p.astype(compute_dtype), vh,
                                           preferred_element_type=jnp.float32)
            return m_new, l, acc

        m0 = jnp.full((num_heads, tq, 1), -jnp.inf, jnp.float32)
        l0 = jnp.zeros((num_heads, tq, 1), jnp.float32)
        a0 = jnp.zeros((num_heads, tq, depth), jnp.float32)
        _, l, ctx = jax.lax.fori_loop(0, n_kv_chunks, body, (m0, l0, a0))

    # Normalize once at the end (EUP reciprocal when running the bf16 fast path).
    ctx = (ctx * pl.reciprocal(l, approx=approx_recip)).astype(compute_dtype)

    # ---- Head merge fused into the output projection: out = sum_h ctx_h @ wd_h.
    # Static sublane row-slices of wd are free; output stays lane-dense (width D).
    acc_out = jnp.dot(ctx[0], wd_ref[0:depth, :],
                      preferred_element_type=jnp.float32)
    for h in range(1, num_heads):
        acc_out += jnp.dot(ctx[h], wd_ref[h * depth:(h + 1) * depth, :],
                           preferred_element_type=jnp.float32)
    out_ref[0] = (acc_out + bd_ref[...]).astype(out_ref.dtype)


def _physical_vmem_bytes():
    try:
        return int(pltpu.get_tpu_info().vmem_capacity_bytes)
    except Exception:
        return 64 << 20           # conservative: valid on every TPU generation


def _pick_q_tile(seq_len, prefer_large):
    cands = (512, 256, 128, 64, 32, 16, 8) if prefer_large else (256, 128, 64, 32, 16, 8)
    for cand in cands:
        if seq_len % cand == 0:
            return cand
    return seq_len


def _pick_kv_chunk(lk):
    if lk <= 512:
        return lk
    for cand in (512, 256, 128, 64):
        if lk % cand == 0:
            return cand
    return lk


def _vmem_bytes_estimate(tq, lk, kv_chunk, d_model, num_heads, act_bytes, w_bytes,
                         single_buffer_consts):
    depth = d_model // num_heads
    cbuf = 1 if single_buffer_consts else 2
    q_io = 2 * tq * d_model * (act_bytes + 4)                 # dbl-buffered q in + out tiles
    val = cbuf * lk * d_model * act_bytes                     # value block
    wgt = cbuf * 4 * (d_model * d_model * w_bytes + d_model * 4)
    cache = 2 * lk * d_model * w_bytes                        # cached K/V projections
    inter = 4 * (3 * tq * d_model                             # q f32 / qh / out accumulator
                 + 2 * num_heads * tq * kv_chunk              # scores + probs (f32)
                 + num_heads * tq * depth                     # ctx accumulator
                 + 2 * kv_chunk * d_model)                    # per-chunk kh/vh
    return q_io + val + wgt + cache + inter + (4 << 20)


def multi_head_cross_attention(query, value, params, num_heads, *,
                               q_tile=None, kv_chunk=None, q_parallel=1,
                               approx_recip=None):
    """query: (B, Lq, D), value: (B, Lk, D). Default path of the PyTorch module.

    approx_recip: if None, the EUP approximate reciprocal is used iff the weights
    are non-f32 (bf16 fast path); pass False to force an exact softmax divide.
    q_parallel: split the q-tile axis into this many "parallel" groups (set 2 on
    v7x when B == 1 so both TensorCores get work; each group re-derives K/V).
    """
    B, Lq, D = query.shape
    Bv, Lk, Dv = value.shape
    assert Bv == B and Dv == D and D % num_heads == 0
    depth = D // num_heads

    wq, bq, wk, bk, wv, bv, wd, bd = params
    out_dtype = query.dtype
    if wq.dtype != jnp.float32:
        # bf16 fast path: halves activation DMA bytes; kernel accumulates in f32.
        query = query.astype(wq.dtype)
        value = value.astype(wq.dtype)
    if approx_recip is None:
        approx_recip = bool(wq.dtype != jnp.float32)

    act_bytes = query.dtype.itemsize
    w_bytes = wq.dtype.itemsize
    vmem_cap = max(int(0.85 * _physical_vmem_bytes()), 32 << 20)

    tq = q_tile if q_tile is not None else _pick_q_tile(Lq, vmem_cap > (80 << 20))
    assert Lq % tq == 0, "q_tile must divide Lq"
    kv_c = kv_chunk if kv_chunk is not None else _pick_kv_chunk(Lk)
    assert Lk % kv_c == 0, "kv_chunk must divide Lk"

    # The VMEM estimate drives the tiling: shrink kv_chunk, then the q tile,
    # until the working set fits the per-generation cap (v7x 64 MiB, v5e/v6e 128).
    def est(t, c):
        return _vmem_bytes_estimate(t, Lk, c, D, num_heads, act_bytes, w_bytes, True)

    while est(tq, kv_c) > vmem_cap:
        if kv_c > 128 and kv_c % 2 == 0:
            kv_c //= 2
        elif tq > 32 and tq % 2 == 0:
            tq //= 2
        else:
            break

    n_q_tiles = Lq // tq
    assert n_q_tiles % q_parallel == 0, "q_parallel must divide the number of q tiles"
    n_inner = n_q_tiles // q_parallel
    n_kv_chunks = Lk // kv_c
    vmem_limit = int(min(max(est(tq, kv_c), 32 << 20), vmem_cap))

    kernel = functools.partial(_mhca_kernel, num_heads, depth, kv_c, n_kv_chunks,
                               approx_recip)

    flops = (2 * B * Lq * D * D                       # Q projection
             + 2 * 2 * B * q_parallel * Lk * D * D    # K/V projections (per group)
             + 2 * 2 * B * Lq * Lk * D                # QK^T and PV
             + 2 * B * Lq * D * D)                    # output projection
    transcendentals = B * num_heads * Lq * Lk
    bytes_accessed = (B * Lq * D * act_bytes + B * Lk * D * act_bytes
                      + 4 * D * D * w_bytes + 4 * D * 4
                      + B * Lq * D * jnp.dtype(out_dtype).itemsize)

    def build(single_buffer_consts):
        def const_spec(shape):
            if single_buffer_consts:
                # Fetched once (constant block index): single-buffering halves
                # their resident VMEM footprint (matters on v7x's 64 MiB).
                return pl.BlockSpec(shape, lambda b, p, t: (0, 0),
                                    pipeline_mode=pl.Buffered(1))
            return pl.BlockSpec(shape, lambda b, p, t: (0, 0))

        mat_spec = const_spec((D, D))
        bias_spec = const_spec((1, D))
        if single_buffer_consts:
            val_spec = pl.BlockSpec((1, Lk, D), lambda b, p, t: (b, 0, 0),
                                    pipeline_mode=pl.Buffered(1))
        else:
            val_spec = pl.BlockSpec((1, Lk, D), lambda b, p, t: (b, 0, 0))

        qo_map = lambda b, p, t: (b, p * n_inner + t, 0)

        return pl.pallas_call(
            kernel,
            out_shape=jax.ShapeDtypeStruct((B, Lq, D), out_dtype),
            grid=(B, q_parallel, n_inner),
            in_specs=[
                pl.BlockSpec((1, tq, D), qo_map),     # query tile
                val_spec,                             # key/value input (per batch)
                mat_spec, bias_spec,                  # wq, bq
                mat_spec, bias_spec,                  # wk, bk
                mat_spec, bias_spec,                  # wv, bv
                mat_spec, bias_spec,                  # dense
            ],
            out_specs=pl.BlockSpec((1, tq, D), qo_map),
            scratch_shapes=[
                pltpu.VMEM((Lk, D), wq.dtype),        # cached K projection
                pltpu.VMEM((Lk, D), wq.dtype),        # cached V projection
            ],
            compiler_params=pltpu.CompilerParams(
                # batch / parallel-q-group axes are independent; the q-tile axis
                # is "arbitrary" because the K/V scratch is carried across it.
                dimension_semantics=("parallel", "parallel", "arbitrary"),
                vmem_limit_bytes=vmem_limit,
            ),
            cost_estimate=pl.CostEstimate(
                flops=int(flops),
                transcendentals=int(transcendentals),
                bytes_accessed=int(bytes_accessed)),
        )(query, value, wq, bq, wk, bk, wv, bv, wd, bd)

    try:
        return build(True)
    except Exception:
        # pipeline_mode=pl.Buffered(1) not supported on this jax/Mosaic version:
        # fall back to default double-buffered blocks (correctness unaffected).
        return build(False)


def init_params(key, d_model, dtype=jnp.float32):
    """Xavier-uniform weights stored as [d_in, d_out], zero biases (1, d_model)."""
    limit = math.sqrt(6.0 / (d_model + d_model))
    keys = jax.random.split(key, 4)
    ws = [jax.random.uniform(k, (d_model, d_model), jnp.float32,
                             -limit, limit).astype(dtype) for k in keys]
    bs = [jnp.zeros((1, d_model), jnp.float32) for _ in range(4)]
    # order: wq, bq, wk, bk, wv, bv, wd, bd
    return (ws[0], bs[0], ws[1], bs[1], ws[2], bs[2], ws[3], bs[3])


def _reference(query, value, params, num_heads):
    """Pure-JAX f32 reference mirroring the PyTorch forward."""
    wq, bq, wk, bk, wv, bv, wd, bd = params
    wq, wk, wv, wd = (w.astype(jnp.float32) for w in (wq, wk, wv, wd))
    B, Lq, D = query.shape
    Lk = value.shape[1]
    depth = D // num_heads
    hi = jax.lax.Precision.HIGHEST

    q = jnp.dot(query, wq, precision=hi) + bq
    k = jnp.dot(value, wk, precision=hi) + bk
    v = jnp.dot(value, wv, precision=hi) + bv

    def split(x, L):
        return x.reshape(B, L, num_heads, depth).transpose(0, 2, 1, 3)

    qh, kh, vh = split(q, Lq), split(k, Lk), split(v, Lk)
    scores = jnp.einsum("bhqd,bhkd->bhqk", qh, kh,
                        precision=hi) / jnp.sqrt(jnp.float32(depth))
    attn = jax.nn.softmax(scores, axis=-1)
    ctx = jnp.einsum("bhqk,bhkd->bhqd", attn, vh, precision=hi)
    ctx = ctx.transpose(0, 2, 1, 3).reshape(B, Lq, D)
    return jnp.dot(ctx, wd, precision=hi) + bd


if __name__ == "__main__":
    key = jax.random.PRNGKey(0)
    k_q, k_v, k_p, k_q3, k_v3, k_p3 = jax.random.split(key, 6)

    # ---- Test 1: f32 exact-semantics check (single kv chunk, single q tile) ----
    B, Lq, Lk, D, H = 2, 8, 8, 32, 4
    query = jax.random.normal(k_q, (B, Lq, D), jnp.float32)
    value = jax.random.normal(k_v, (B, Lk, D), jnp.float32)
    params = init_params(k_p, D, dtype=jnp.float32)

    out = jax.block_until_ready(
        multi_head_cross_attention(query, value, params, H))
    ref = _reference(query, value, params, H)
    assert out.shape == (B, Lq, D)
    assert jnp.allclose(out, ref, atol=1e-4, rtol=1e-4), "f32 path mismatch vs reference"

    # ---- Test 2: bf16 fast path (bf16 MXU operands, f32 accumulation,
    #      approximate EUP reciprocal) compared loosely against the f32 reference. ----
    wq, bq, wk, bk, wv, bv, wd, bd = params
    params_bf16 = (wq.astype(jnp.bfloat16), bq, wk.astype(jnp.bfloat16), bk,
                   wv.astype(jnp.bfloat16), bv, wd.astype(jnp.bfloat16), bd)
    out_bf16 = jax.block_until_ready(
        multi_head_cross_attention(query, value, params_bf16, H))
    assert out_bf16.shape == (B, Lq, D)
    assert jnp.allclose(out_bf16.astype(jnp.float32), ref,
                        atol=5e-2, rtol=5e-2), "bf16 path mismatch vs reference"

    # ---- Test 3: multi q-tile path exercising K/V-cache reuse across q tiles,
    #      the chunked online softmax, and the 2-way parallel q split (v7x). ----
    B3, Lq3, Lk3 = 1, 32, 16
    query3 = jax.random.normal(k_q3, (B3, Lq3, D), jnp.float32)
    value3 = jax.random.normal(k_v3, (B3, Lk3, D), jnp.float32)
    params3 = init_params(k_p3, D, dtype=jnp.float32)
    out3 = jax.block_until_ready(
        multi_head_cross_attention(query3, value3, params3, H,
                                   q_tile=8, kv_chunk=8, q_parallel=2))
    ref3 = _reference(query3, value3, params3, H)
    assert out3.shape == (B3, Lq3, D)
    assert jnp.allclose(out3, ref3, atol=1e-4, rtol=1e-4), \
        "chunked online-softmax path mismatch vs reference"

    print("KERNEL_OK")
</pallas_src>

<mosaic_0001>
module attributes {stable_mosaic.version = 11 : i64} {
  func.func @_mhca_kernel(%arg0: i32, %arg1: i32, %arg2: i32, %arg3: memref<1x8x32xf32, #tpu.memory_space<vmem>>, %arg4: memref<1x8x32xf32, #tpu.memory_space<vmem>>, %arg5: memref<32x32xf32, #tpu.memory_space<vmem>>, %arg6: memref<1x32xf32, #tpu.memory_space<vmem>>, %arg7: memref<32x32xf32, #tpu.memory_space<vmem>>, %arg8: memref<1x32xf32, #tpu.memory_space<vmem>>, %arg9: memref<32x32xf32, #tpu.memory_space<vmem>>, %arg10: memref<1x32xf32, #tpu.memory_space<vmem>>, %arg11: memref<32x32xf32, #tpu.memory_space<vmem>>, %arg12: memref<1x32xf32, #tpu.memory_space<vmem>>, %arg13: memref<1x8x32xf32, #tpu.memory_space<vmem>>, %arg14: memref<8x32xf32, #tpu.memory_space<vmem>>, %arg15: memref<8x32xf32, #tpu.memory_space<vmem>>) attributes {dimension_semantics = [#tpu.dimension_semantics<parallel>, #tpu.dimension_semantics<parallel>, #tpu.dimension_semantics<arbitrary>], iteration_bounds = array<i64: 2, 1, 1>, scalar_prefetch = 0 : i64, scratch_operands = 2 : i64, tpu.core_type = #tpu.core_type<tc>, window_params = [{transform_indices = @transform_0, window_bounds = array<i64: 1, 8, 32>}, {pipeline_mode = #tpu.pipeline_mode<synchronous>, transform_indices = @transform_1, window_bounds = array<i64: 1, 8, 32>}, {pipeline_mode = #tpu.pipeline_mode<synchronous>, transform_indices = @transform_2, window_bounds = array<i64: 32, 32>}, {pipeline_mode = #tpu.pipeline_mode<synchronous>, transform_indices = @transform_3, window_bounds = array<i64: 1, 32>}, {pipeline_mode = #tpu.pipeline_mode<synchronous>, transform_indices = @transform_4, window_bounds = array<i64: 32, 32>}, {pipeline_mode = #tpu.pipeline_mode<synchronous>, transform_indices = @transform_5, window_bounds = array<i64: 1, 32>}, {pipeline_mode = #tpu.pipeline_mode<synchronous>, transform_indices = @transform_6, window_bounds = array<i64: 32, 32>}, {pipeline_mode = #tpu.pipeline_mode<synchronous>, transform_indices = @transform_7, window_bounds = array<i64: 1, 32>}, {pipeline_mode = #tpu.pipeline_mode<synchronous>, transform_indices = @transform_8, window_bounds = array<i64: 32, 32>}, {pipeline_mode = #tpu.pipeline_mode<synchronous>, transform_indices = @transform_9, window_bounds = array<i64: 1, 32>}, {transform_indices = @transform_10, window_bounds = array<i64: 1, 8, 32>}]} {
    %c0_i32 = arith.constant 0 : i32
    %0 = arith.cmpi eq, %arg2, %c0_i32 : i32
    %1 = arith.extui %0 : i1 to i32
    %c0_i32_0 = arith.constant 0 : i32
    %2 = arith.cmpi ne, %1, %c0_i32_0 : i32
    scf.if %2 {
      %c0_30 = arith.constant 0 : index
      %c0_31 = arith.constant 0 : index
      %c0_32 = arith.constant 0 : index
      %57 = vector.load %arg4[%c0_30, %c0_31, %c0_32] : memref<1x8x32xf32, #tpu.memory_space<vmem>>, vector<1x8x32xf32>
      %58 = vector.shape_cast %57 : vector<1x8x32xf32> to vector<8x32xf32>
      %c0_33 = arith.constant 0 : index
      %c0_34 = arith.constant 0 : index
      %59 = vector.load %arg7[%c0_33, %c0_34] : memref<32x32xf32, #tpu.memory_space<vmem>>, vector<32x32xf32>
      %cst_35 = arith.constant dense<0.000000e+00> : vector<8x32xf32>
      %60 = tpu.matmul %58, %59, %cst_35 {dimension_numbers = #tpu.dot_dimension_numbers<[1], [0], [0], [1], [0, 0, 1, 1], [], []>} : vector<8x32xf32>, vector<32x32xf32>, vector<8x32xf32> -> vector<8x32xf32>
      %c0_36 = arith.constant 0 : index
      %c0_37 = arith.constant 0 : index
      %61 = vector.load %arg8[%c0_36, %c0_37] : memref<1x32xf32, #tpu.memory_space<vmem>>, vector<1x32xf32>
      %62 = vector.broadcast %61 : vector<1x32xf32> to vector<8x32xf32>
      %63 = arith.addf %60, %62 : vector<8x32xf32>
      %c0_38 = arith.constant 0 : index
      %c0_39 = arith.constant 0 : index
      %64 = vector.load %arg14[%c0_38, %c0_39] : memref<8x32xf32, #tpu.memory_space<vmem>>, vector<8x32xf32>
      tpu.vector_store %arg14[%c0_38, %c0_39], %63 {strides = array<i32>} : memref<8x32xf32, #tpu.memory_space<vmem>>, vector<8x32xf32>,
      %c0_40 = arith.constant 0 : index
      %c0_41 = arith.constant 0 : index
      %65 = vector.load %arg9[%c0_40, %c0_41] : memref<32x32xf32, #tpu.memory_space<vmem>>, vector<32x32xf32>
      %cst_42 = arith.constant dense<0.000000e+00> : vector<8x32xf32>
      %66 = tpu.matmul %58, %65, %cst_42 {dimension_numbers = #tpu.dot_dimension_numbers<[1], [0], [0], [1], [0, 0, 1, 1], [], []>} : vector<8x32xf32>, vector<32x32xf32>, vector<8x32xf32> -> vector<8x32xf32>
      %c0_43 = arith.constant 0 : index
      %c0_44 = arith.constant 0 : index
      %67 = vector.load %arg10[%c0_43, %c0_44] : memref<1x32xf32, #tpu.memory_space<vmem>>, vector<1x32xf32>
      %68 = vector.broadcast %67 : vector<1x32xf32> to vector<8x32xf32>
      %69 = arith.addf %66, %68 : vector<8x32xf32>
      %c0_45 = arith.constant 0 : index
      %c0_46 = arith.constant 0 : index
      %70 = vector.load %arg15[%c0_45, %c0_46] : memref<8x32xf32, #tpu.memory_space<vmem>>, vector<8x32xf32>
      tpu.vector_store %arg15[%c0_45, %c0_46], %69 {strides = array<i32>} : memref<8x32xf32, #tpu.memory_space<vmem>>, vector<8x32xf32>,
    } else {
    }
    %c0 = arith.constant 0 : index
    %c0_1 = arith.constant 0 : index
    %c0_2 = arith.constant 0 : index
    %3 = vector.load %arg3[%c0, %c0_1, %c0_2] : memref<1x8x32xf32, #tpu.memory_space<vmem>>, vector<1x8x32xf32>
    %4 = vector.shape_cast %3 : vector<1x8x32xf32> to vector<8x32xf32>
    %c0_3 = arith.constant 0 : index
    %c0_4 = arith.constant 0 : index
    %5 = vector.load %arg5[%c0_3, %c0_4] : memref<32x32xf32, #tpu.memory_space<vmem>>, vector<32x32xf32>
    %cst = arith.constant dense<0.000000e+00> : vector<8x32xf32>
    %6 = tpu.matmul %4, %5, %cst {dimension_numbers = #tpu.dot_dimension_numbers<[1], [0], [0], [1], [0, 0, 1, 1], [], []>} : vector<8x32xf32>, vector<32x32xf32>, vector<8x32xf32> -> vector<8x32xf32>
    %c0_5 = arith.constant 0 : index
    %c0_6 = arith.constant 0 : index
    %7 = vector.load %arg6[%c0_5, %c0_6] : memref<1x32xf32, #tpu.memory_space<vmem>>, vector<1x32xf32>
    %8 = vector.broadcast %7 : vector<1x32xf32> to vector<8x32xf32>
    %9 = arith.addf %6, %8 : vector<8x32xf32>
    %cst_7 = arith.constant 0.353553385 : f32
    %10 = vector.broadcast %cst_7 : f32 to vector<8x32xf32>
    %11 = arith.mulf %9, %10 : vector<8x32xf32>
    %12 = vector.shape_cast %11 : vector<8x32xf32> to vector<8x4x8xf32>
    %13 = tpu.transpose %12, [1, 0, 2] : vector<8x4x8xf32> -> vector<4x8x8xf32>
    %c0_8 = arith.constant 0 : index
    %c0_9 = arith.constant 0 : index
    %14 = vector.load %arg14[%c0_8, %c0_9] : memref<8x32xf32, #tpu.memory_space<vmem>>, vector<8x32xf32>
    %15 = vector.shape_cast %14 : vector<8x32xf32> to vector<8x4x8xf32>
    %16 = tpu.transpose %15, [1, 0, 2] : vector<8x4x8xf32> -> vector<4x8x8xf32>
    %c0_10 = arith.constant 0 : index
    %c0_11 = arith.constant 0 : index
    %17 = vector.load %arg15[%c0_10, %c0_11] : memref<8x32xf32, #tpu.memory_space<vmem>>, vector<8x32xf32>
    %18 = vector.shape_cast %17 : vector<8x32xf32> to vector<8x4x8xf32>
    %19 = tpu.transpose %18, [1, 0, 2] : vector<8x4x8xf32> -> vector<4x8x8xf32>
    "tpu.trace_start"() <{level = 10 : i32, message = "hqd,hkd->hqk"}> : () -> ()
    %cst_12 = arith.constant dense<0.000000e+00> : vector<4x8x8xf32>
    %20 = tpu.matmul %13, %16, %cst_12 {dimension_numbers = #tpu.dot_dimension_numbers<[2], [2], [1], [1], [0, 0, 0, 1, 1, 1], [0], [0]>} : vector<4x8x8xf32>, vector<4x8x8xf32>, vector<4x8x8xf32> -> vector<4x8x8xf32>
    "tpu.trace_stop"() : () -> ()
    %cst_13 = arith.constant dense<0xFF800000> : vector<4x8xf32>
    %21 = vector.multi_reduction <maximumf>, %20, %cst_13 [2] : vector<4x8x8xf32> to vector<4x8xf32>
    %22 = vector.shape_cast %21 : vector<4x8xf32> to vector<4x8x1xf32>
    %23 = vector.broadcast %22 : vector<4x8x1xf32> to vector<4x8x8xf32>
    %24 = arith.subf %20, %23 : vector<4x8x8xf32>
    %25 = math.exp %24 : vector<4x8x8xf32>
    %cst_14 = arith.constant dense<0.000000e+00> : vector<4x8xf32>
    %26 = vector.multi_reduction <add>, %25, %cst_14 [2] : vector<4x8x8xf32> to vector<4x8xf32>
    %27 = vector.shape_cast %26 : vector<4x8xf32> to vector<4x8x1xf32>
    "tpu.trace_start"() <{level = 10 : i32, message = "hqk,hkd->hqd"}> : () -> ()
    %cst_15 = arith.constant dense<0.000000e+00> : vector<4x8x8xf32>
    %28 = tpu.matmul %25, %19, %cst_15 {dimension_numbers = #tpu.dot_dimension_numbers<[2], [1], [1], [2], [0, 0, 0, 1, 1, 2], [0], [0]>} : vector<4x8x8xf32>, vector<4x8x8xf32>, vector<4x8x8xf32> -> vector<4x8x8xf32>
    "tpu.trace_stop"() : () -> ()
    %29 = tpu.reciprocal %27 : vector<4x8x1xf32> -> vector<4x8x1xf32>
    %30 = vector.broadcast %29 : vector<4x8x1xf32> to vector<4x8x8xf32>
    %31 = arith.mulf %28, %30 : vector<4x8x8xf32>
    %32 = vector.extract_strided_slice %31 {offsets = [0, 0, 0], sizes = [1, 8, 8], strides = [1, 1, 1]} : vector<4x8x8xf32> to vector<1x8x8xf32>
    %33 = vector.shape_cast %32 : vector<1x8x8xf32> to vector<8x8xf32>
    %c0_16 = arith.constant 0 : index
    %c0_17 = arith.constant 0 : index
    %34 = vector.load %arg11[%c0_16, %c0_17] : memref<32x32xf32, #tpu.memory_space<vmem>>, vector<8x32xf32>
    %cst_18 = arith.constant dense<0.000000e+00> : vector<8x32xf32>
    %35 = tpu.matmul %33, %34, %cst_18 {dimension_numbers = #tpu.dot_dimension_numbers<[1], [0], [0], [1], [0, 0, 1, 1], [], []>} : vector<8x8xf32>, vector<8x32xf32>, vector<8x32xf32> -> vector<8x32xf32>
    %36 = vector.extract_strided_slice %31 {offsets = [1, 0, 0], sizes = [1, 8, 8], strides = [1, 1, 1]} : vector<4x8x8xf32> to vector<1x8x8xf32>
    %37 = vector.shape_cast %36 : vector<1x8x8xf32> to vector<8x8xf32>
    %c8 = arith.constant 8 : index
    %c0_19 = arith.constant 0 : index
    %38 = vector.load %arg11[%c8, %c0_19] : memref<32x32xf32, #tpu.memory_space<vmem>>, vector<8x32xf32>
    %cst_20 = arith.constant dense<0.000000e+00> : vector<8x32xf32>
    %39 = tpu.matmul %37, %38, %cst_20 {dimension_numbers = #tpu.dot_dimension_numbers<[1], [0], [0], [1], [0, 0, 1, 1], [], []>} : vector<8x8xf32>, vector<8x32xf32>, vector<8x32xf32> -> vector<8x32xf32>
    %40 = arith.addf %35, %39 : vector<8x32xf32>
    %41 = vector.extract_strided_slice %31 {offsets = [2, 0, 0], sizes = [1, 8, 8], strides = [1, 1, 1]} : vector<4x8x8xf32> to vector<1x8x8xf32>
    %42 = vector.shape_cast %41 : vector<1x8x8xf32> to vector<8x8xf32>
    %c16 = arith.constant 16 : index
    %c0_21 = arith.constant 0 : index
    %43 = vector.load %arg11[%c16, %c0_21] : memref<32x32xf32, #tpu.memory_space<vmem>>, vector<8x32xf32>
    %cst_22 = arith.constant dense<0.000000e+00> : vector<8x32xf32>
    %44 = tpu.matmul %42, %43, %cst_22 {dimension_numbers = #tpu.dot_dimension_numbers<[1], [0], [0], [1], [0, 0, 1, 1], [], []>} : vector<8x8xf32>, vector<8x32xf32>, vector<8x32xf32> -> vector<8x32xf32>
    %45 = arith.addf %40, %44 : vector<8x32xf32>
    %46 = vector.extract_strided_slice %31 {offsets = [3, 0, 0], sizes = [1, 8, 8], strides = [1, 1, 1]} : vector<4x8x8xf32> to vector<1x8x8xf32>
    %47 = vector.shape_cast %46 : vector<1x8x8xf32> to vector<8x8xf32>
    %c24 = arith.constant 24 : index
    %c0_23 = arith.constant 0 : index
    %48 = vector.load %arg11[%c24, %c0_23] : memref<32x32xf32, #tpu.memory_space<vmem>>, vector<8x32xf32>
    %cst_24 = arith.constant dense<0.000000e+00> : vector<8x32xf32>
    %49 = tpu.matmul %47, %48, %cst_24 {dimension_numbers = #tpu.dot_dimension_numbers<[1], [0], [0], [1], [0, 0, 1, 1], [], []>} : vector<8x8xf32>, vector<8x32xf32>, vector<8x32xf32> -> vector<8x32xf32>
    %50 = arith.addf %45, %49 : vector<8x32xf32>
    %c0_25 = arith.constant 0 : index
    %c0_26 = arith.constant 0 : index
    %51 = vector.load %arg12[%c0_25, %c0_26] : memref<1x32xf32, #tpu.memory_space<vmem>>, vector<1x32xf32>
    %52 = vector.broadcast %51 : vector<1x32xf32> to vector<8x32xf32>
    %53 = arith.addf %50, %52 : vector<8x32xf32>
    %c0_27 = arith.constant 0 : index
    %c0_28 = arith.constant 0 : index
    %c0_29 = arith.constant 0 : index
    %54 = vector.load %arg13[%c0_27, %c0_28, %c0_29] : memref<1x8x32xf32, #tpu.memory_space<vmem>>, vector<1x8x32xf32>
    %55 = vector.shape_cast %54 : vector<1x8x32xf32> to vector<8x32xf32>
    %56 = vector.shape_cast %53 : vector<8x32xf32> to vector<1x8x32xf32>
    tpu.vector_store %arg13[%c0_27, %c0_28, %c0_29], %56 {strides = array<i32>} : memref<1x8x32xf32, #tpu.memory_space<vmem>>, vector<1x8x32xf32>,
    return
  }
  func.func @transform_0(%arg0: i32, %arg1: i32, %arg2: i32) -> (i32, i32, i32) {
    %c1_i32 = arith.constant 1 : i32
    %0 = arith.muli %arg1, %c1_i32 : i32
    %1 = arith.addi %0, %arg2 : i32
    %c0_i32 = arith.constant 0 : i32
    %c0_i32_0 = arith.constant 0 : i32
    return %arg0, %1, %c0_i32 : i32, i32, i32
  }
  func.func @transform_1(%arg0: i32, %arg1: i32, %arg2: i32) -> (i32, i32, i32) {
    %c0_i32 = arith.constant 0 : i32
    %c0_i32_0 = arith.constant 0 : i32
    %c0_i32_1 = arith.constant 0 : i32
    return %arg0, %c0_i32, %c0_i32_0 : i32, i32, i32
  }
  func.func @transform_2(%arg0: i32, %arg1: i32, %arg2: i32) -> (i32, i32) {
    %c0_i32 = arith.constant 0 : i32
    %c0_i32_0 = arith.constant 0 : i32
    %c0_i32_1 = arith.constant 0 : i32
    return %c0_i32, %c0_i32_0 : i32, i32
  }
  func.func @transform_3(%arg0: i32, %arg1: i32, %arg2: i32) -> (i32, i32) {
    %c0_i32 = arith.constant 0 : i32
    %c0_i32_0 = arith.constant 0 : i32
    %c0_i32_1 = arith.constant 0 : i32
    return %c0_i32, %c0_i32_0 : i32, i32
  }
  func.func @transform_4(%arg0: i32, %arg1: i32, %arg2: i32) -> (i32, i32) {
    %c0_i32 = arith.constant 0 : i32
    %c0_i32_0 = arith.constant 0 : i32
    %c0_i32_1 = arith.constant 0 : i32
    return %c0_i32, %c0_i32_0 : i32, i32
  }
  func.func @transform_5(%arg0: i32, %arg1: i32, %arg2: i32) -> (i32, i32) {
    %c0_i32 = arith.constant 0 : i32
    %c0_i32_0 = arith.constant 0 : i32
    %c0_i32_1 = arith.constant 0 : i32
    return %c0_i32, %c0_i32_0 : i32, i32
  }
  func.func @transform_6(%arg0: i32, %arg1: i32, %arg2: i32) -> (i32, i32) {
    %c0_i32 = arith.constant 0 : i32
    %c0_i32_0 = arith.constant 0 : i32
    %c0_i32_1 = arith.constant 0 : i32
    return %c0_i32, %c0_i32_0 : i32, i32
  }
  func.func @transform_7(%arg0: i32, %arg1: i32, %arg2: i32) -> (i32, i32) {
    %c0_i32 = arith.constant 0 : i32
    %c0_i32_0 = arith.constant 0 : i32
    %c0_i32_1 = arith.constant 0 : i32
    return %c0_i32, %c0_i32_0 : i32, i32
  }
  func.func @transform_8(%arg0: i32, %arg1: i32, %arg2: i32) -> (i32, i32) {
    %c0_i32 = arith.constant 0 : i32
    %c0_i32_0 = arith.constant 0 : i32
    %c0_i32_1 = arith.constant 0 : i32
    return %c0_i32, %c0_i32_0 : i32, i32
  }
  func.func @transform_9(%arg0: i32, %arg1: i32, %arg2: i32) -> (i32, i32) {
    %c0_i32 = arith.constant 0 : i32
    %c0_i32_0 = arith.constant 0 : i32
    %c0_i32_1 = arith.constant 0 : i32
    return %c0_i32, %c0_i32_0 : i32, i32
  }
  func.func @transform_10(%arg0: i32, %arg1: i32, %arg2: i32) -> (i32, i32, i32) {
    %c1_i32 = arith.constant 1 : i32
    %0 = arith.muli %arg1, %c1_i32 : i32
    %1 = arith.addi %0, %arg2 : i32
    %c0_i32 = arith.constant 0 : i32
    %c0_i32_0 = arith.constant 0 : i32
    return %arg0, %1, %c0_i32 : i32, i32, i32
  }
}

module attributes {stable_mosaic.version = 11 : i64} {
  func.func @_mhca_kernel(%arg0: i32, %arg1: i32, %arg2: i32, %arg3: memref<1x8x32xf32, #tpu.memory_space<vmem>>, %arg4: memref<1x8x32xf32, #tpu.memory_space<vmem>>, %arg5: memref<32x32xf32, #tpu.memory_space<vmem>>, %arg6: memref<1x32xf32, #tpu.memory_space<vmem>>, %arg7: memref<32x32xf32, #tpu.memory_space<vmem>>, %arg8: memref<1x32xf32, #tpu.memory_space<vmem>>, %arg9: memref<32x32xf32, #tpu.memory_space<vmem>>, %arg10: memref<1x32xf32, #tpu.memory_space<vmem>>, %arg11: memref<32x32xf32, #tpu.memory_space<vmem>>, %arg12: memref<1x32xf32, #tpu.memory_space<vmem>>, %arg13: memref<1x8x32xf32, #tpu.memory_space<vmem>>, %arg14: memref<8x32xf32, #tpu.memory_space<vmem>>, %arg15: memref<8x32xf32, #tpu.memory_space<vmem>>) attributes {dimension_semantics = [#tpu.dimension_semantics<parallel>, #tpu.dimension_semantics<parallel>, #tpu.dimension_semantics<arbitrary>], iteration_bounds = array<i64: 2, 1, 1>, scalar_prefetch = 0 : i64, scratch_operands = 2 : i64, tpu.core_type = #tpu.core_type<tc>, window_params = [{transform_indices = @transform_0, window_bounds = array<i64: 1, 8, 32>}, {transform_indices = @transform_1, window_bounds = array<i64: 1, 8, 32>}, {pipeline_mode = #tpu.pipeline_mode<synchronous>, transform_indices = @transform_2, window_bounds = array<i64: 32, 32>}, {pipeline_mode = #tpu.pipeline_mode<synchronous>, transform_indices = @transform_3, window_bounds = array<i64: 1, 32>}, {pipeline_mode = #tpu.pipeline_mode<synchronous>, transform_indices = @transform_4, window_bounds = array<i64: 32, 32>}, {pipeline_mode = #tpu.pipeline_mode<synchronous>, transform_indices = @transform_5, window_bounds = array<i64: 1, 32>}, {pipeline_mode = #tpu.pipeline_mode<synchronous>, transform_indices = @transform_6, window_bounds = array<i64: 32, 32>}, {pipeline_mode = #tpu.pipeline_mode<synchronous>, transform_indices = @transform_7, window_bounds = array<i64: 1, 32>}, {pipeline_mode = #tpu.pipeline_mode<synchronous>, transform_indices = @transform_8, window_bounds = array<i64: 32, 32>}, {pipeline_mode = #tpu.pipeline_mode<synchronous>, transform_indices = @transform_9, window_bounds = array<i64: 1, 32>}, {transform_indices = @transform_10, window_bounds = array<i64: 1, 8, 32>}]} {
    %c0_i32 = arith.constant 0 : i32
    %0 = arith.cmpi eq, %arg2, %c0_i32 : i32
    %1 = arith.extui %0 : i1 to i32
    %c0_i32_0 = arith.constant 0 : i32
    %2 = arith.cmpi ne, %1, %c0_i32_0 : i32
    scf.if %2 {
      %c0_30 = arith.constant 0 : index
      %c0_31 = arith.constant 0 : index
      %c0_32 = arith.constant 0 : index
      %57 = vector.load %arg4[%c0_30, %c0_31, %c0_32] : memref<1x8x32xf32, #tpu.memory_space<vmem>>, vector<1x8x32xf32>
      %58 = vector.shape_cast %57 : vector<1x8x32xf32> to vector<8x32xf32>
      %c0_33 = arith.constant 0 : index
      %c0_34 = arith.constant 0 : index
      %59 = vector.load %arg7[%c0_33, %c0_34] : memref<32x32xf32, #tpu.memory_space<vmem>>, vector<32x32xf32>
      %cst_35 = arith.constant dense<0.000000e+00> : vector<8x32xf32>
      %60 = tpu.matmul %58, %59, %cst_35 {dimension_numbers = #tpu.dot_dimension_numbers<[1], [0], [0], [1], [0, 0, 1, 1], [], []>} : vector<8x32xf32>, vector<32x32xf32>, vector<8x32xf32> -> vector<8x32xf32>
      %c0_36 = arith.constant 0 : index
      %c0_37 = arith.constant 0 : index
      %61 = vector.load %arg8[%c0_36, %c0_37] : memref<1x32xf32, #tpu.memory_space<vmem>>, vector<1x32xf32>
      %62 = vector.broadcast %61 : vector<1x32xf32> to vector<8x32xf32>
      %63 = arith.addf %60, %62 : vector<8x32xf32>
      %c0_38 = arith.constant 0 : index
      %c0_39 = arith.constant 0 : index
      %64 = vector.load %arg14[%c0_38, %c0_39] : memref<8x32xf32, #tpu.memory_space<vmem>>, vector<8x32xf32>
      tpu.vector_store %arg14[%c0_38, %c0_39], %63 {strides = array<i32>} : memref<8x32xf32, #tpu.memory_space<vmem>>, vector<8x32xf32>,
      %c0_40 = arith.constant 0 : index
      %c0_41 = arith.constant 0 : index
      %65 = vector.load %arg9[%c0_40, %c0_41] : memref<32x32xf32, #tpu.memory_space<vmem>>, vector<32x32xf32>
      %cst_42 = arith.constant dense<0.000000e+00> : vector<8x32xf32>
      %66 = tpu.matmul %58, %65, %cst_42 {dimension_numbers = #tpu.dot_dimension_numbers<[1], [0], [0], [1], [0, 0, 1, 1], [], []>} : vector<8x32xf32>, vector<32x32xf32>, vector<8x32xf32> -> vector<8x32xf32>
      %c0_43 = arith.constant 0 : index
      %c0_44 = arith.constant 0 : index
      %67 = vector.load %arg10[%c0_43, %c0_44] : memref<1x32xf32, #tpu.memory_space<vmem>>, vector<1x32xf32>
      %68 = vector.broadcast %67 : vector<1x32xf32> to vector<8x32xf32>
      %69 = arith.addf %66, %68 : vector<8x32xf32>
      %c0_45 = arith.constant 0 : index
      %c0_46 = arith.constant 0 : index
      %70 = vector.load %arg15[%c0_45, %c0_46] : memref<8x32xf32, #tpu.memory_space<vmem>>, vector<8x32xf32>
      tpu.vector_store %arg15[%c0_45, %c0_46], %69 {strides = array<i32>} : memref<8x32xf32, #tpu.memory_space<vmem>>, vector<8x32xf32>,
    } else {
    }
    %c0 = arith.constant 0 : index
    %c0_1 = arith.constant 0 : index
    %c0_2 = arith.constant 0 : index
    %3 = vector.load %arg3[%c0, %c0_1, %c0_2] : memref<1x8x32xf32, #tpu.memory_space<vmem>>, vector<1x8x32xf32>
    %4 = vector.shape_cast %3 : vector<1x8x32xf32> to vector<8x32xf32>
    %c0_3 = arith.constant 0 : index
    %c0_4 = arith.constant 0 : index
    %5 = vector.load %arg5[%c0_3, %c0_4] : memref<32x32xf32, #tpu.memory_space<vmem>>, vector<32x32xf32>
    %cst = arith.constant dense<0.000000e+00> : vector<8x32xf32>
    %6 = tpu.matmul %4, %5, %cst {dimension_numbers = #tpu.dot_dimension_numbers<[1], [0], [0], [1], [0, 0, 1, 1], [], []>} : vector<8x32xf32>, vector<32x32xf32>, vector<8x32xf32> -> vector<8x32xf32>
    %c0_5 = arith.constant 0 : index
    %c0_6 = arith.constant 0 : index
    %7 = vector.load %arg6[%c0_5, %c0_6] : memref<1x32xf32, #tpu.memory_space<vmem>>, vector<1x32xf32>
    %8 = vector.broadcast %7 : vector<1x32xf32> to vector<8x32xf32>
    %9 = arith.addf %6, %8 : vector<8x32xf32>
    %cst_7 = arith.constant 0.353553385 : f32
    %10 = vector.broadcast %cst_7 : f32 to vector<8x32xf32>
    %11 = arith.mulf %9, %10 : vector<8x32xf32>
    %12 = vector.shape_cast %11 : vector<8x32xf32> to vector<8x4x8xf32>
    %13 = tpu.transpose %12, [1, 0, 2] : vector<8x4x8xf32> -> vector<4x8x8xf32>
    %c0_8 = arith.constant 0 : index
    %c0_9 = arith.constant 0 : index
    %14 = vector.load %arg14[%c0_8, %c0_9] : memref<8x32xf32, #tpu.memory_space<vmem>>, vector<8x32xf32>
    %15 = vector.shape_cast %14 : vector<8x32xf32> to vector<8x4x8xf32>
    %16 = tpu.transpose %15, [1, 0, 2] : vector<8x4x8xf32> -> vector<4x8x8xf32>
    %c0_10 = arith.constant 0 : index
    %c0_11 = arith.constant 0 : index
    %17 = vector.load %arg15[%c0_10, %c0_11] : memref<8x32xf32, #tpu.memory_space<vmem>>, vector<8x32xf32>
    %18 = vector.shape_cast %17 : vector<8x32xf32> to vector<8x4x8xf32>
    %19 = tpu.transpose %18, [1, 0, 2] : vector<8x4x8xf32> -> vector<4x8x8xf32>
    "tpu.trace_start"() <{level = 10 : i32, message = "hqd,hkd->hqk"}> : () -> ()
    %cst_12 = arith.constant dense<0.000000e+00> : vector<4x8x8xf32>
    %20 = tpu.matmul %13, %16, %cst_12 {dimension_numbers = #tpu.dot_dimension_numbers<[2], [2], [1], [1], [0, 0, 0, 1, 1, 1], [0], [0]>} : vector<4x8x8xf32>, vector<4x8x8xf32>, vector<4x8x8xf32> -> vector<4x8x8xf32>
    "tpu.trace_stop"() : () -> ()
    %cst_13 = arith.constant dense<0xFF800000> : vector<4x8xf32>
    %21 = vector.multi_reduction <maximumf>, %20, %cst_13 [2] : vector<4x8x8xf32> to vector<4x8xf32>
    %22 = vector.shape_cast %21 : vector<4x8xf32> to vector<4x8x1xf32>
    %23 = vector.broadcast %22 : vector<4x8x1xf32> to vector<4x8x8xf32>
    %24 = arith.subf %20, %23 : vector<4x8x8xf32>
    %25 = math.exp %24 : vector<4x8x8xf32>
    %cst_14 = arith.constant dense<0.000000e+00> : vector<4x8xf32>
    %26 = vector.multi_reduction <add>, %25, %cst_14 [2] : vector<4x8x8xf32> to vector<4x8xf32>
    %27 = vector.shape_cast %26 : vector<4x8xf32> to vector<4x8x1xf32>
    "tpu.trace_start"() <{level = 10 : i32, message = "hqk,hkd->hqd"}> : () -> ()
    %cst_15 = arith.constant dense<0.000000e+00> : vector<4x8x8xf32>
    %28 = tpu.matmul %25, %19, %cst_15 {dimension_numbers = #tpu.dot_dimension_numbers<[2], [1], [1], [2], [0, 0, 0, 1, 1, 2], [0], [0]>} : vector<4x8x8xf32>, vector<4x8x8xf32>, vector<4x8x8xf32> -> vector<4x8x8xf32>
    "tpu.trace_stop"() : () -> ()
    %29 = tpu.reciprocal %27 : vector<4x8x1xf32> -> vector<4x8x1xf32>
    %30 = vector.broadcast %29 : vector<4x8x1xf32> to vector<4x8x8xf32>
    %31 = arith.mulf %28, %30 : vector<4x8x8xf32>
    %32 = vector.extract_strided_slice %31 {offsets = [0, 0, 0], sizes = [1, 8, 8], strides = [1, 1, 1]} : vector<4x8x8xf32> to vector<1x8x8xf32>
    %33 = vector.shape_cast %32 : vector<1x8x8xf32> to vector<8x8xf32>
    %c0_16 = arith.constant 0 : index
    %c0_17 = arith.constant 0 : index
    %34 = vector.load %arg11[%c0_16, %c0_17] : memref<32x32xf32, #tpu.memory_space<vmem>>, vector<8x32xf32>
    %cst_18 = arith.constant dense<0.000000e+00> : vector<8x32xf32>
    %35 = tpu.matmul %33, %34, %cst_18 {dimension_numbers = #tpu.dot_dimension_numbers<[1], [0], [0], [1], [0, 0, 1, 1], [], []>} : vector<8x8xf32>, vector<8x32xf32>, vector<8x32xf32> -> vector<8x32xf32>
    %36 = vector.extract_strided_slice %31 {offsets = [1, 0, 0], sizes = [1, 8, 8], strides = [1, 1, 1]} : vector<4x8x8xf32> to vector<1x8x8xf32>
    %37 = vector.shape_cast %36 : vector<1x8x8xf32> to vector<8x8xf32>
    %c8 = arith.constant 8 : index
    %c0_19 = arith.constant 0 : index
    %38 = vector.load %arg11[%c8, %c0_19] : memref<32x32xf32, #tpu.memory_space<vmem>>, vector<8x32xf32>
    %cst_20 = arith.constant dense<0.000000e+00> : vector<8x32xf32>
    %39 = tpu.matmul %37, %38, %cst_20 {dimension_numbers = #tpu.dot_dimension_numbers<[1], [0], [0], [1], [0, 0, 1, 1], [], []>} : vector<8x8xf32>, vector<8x32xf32>, vector<8x32xf32> -> vector<8x32xf32>
    %40 = arith.addf %35, %39 : vector<8x32xf32>
    %41 = vector.extract_strided_slice %31 {offsets = [2, 0, 0], sizes = [1, 8, 8], strides = [1, 1, 1]} : vector<4x8x8xf32> to vector<1x8x8xf32>
    %42 = vector.shape_cast %41 : vector<1x8x8xf32> to vector<8x8xf32>
    %c16 = arith.constant 16 : index
    %c0_21 = arith.constant 0 : index
    %43 = vector.load %arg11[%c16, %c0_21] : memref<32x32xf32, #tpu.memory_space<vmem>>, vector<8x32xf32>
    %cst_22 = arith.constant dense<0.000000e+00> : vector<8x32xf32>
    %44 = tpu.matmul %42, %43, %cst_22 {dimension_numbers = #tpu.dot_dimension_numbers<[1], [0], [0], [1], [0, 0, 1, 1], [], []>} : vector<8x8xf32>, vector<8x32xf32>, vector<8x32xf32> -> vector<8x32xf32>
    %45 = arith.addf %40, %44 : vector<8x32xf32>
    %46 = vector.extract_strided_slice %31 {offsets = [3, 0, 0], sizes = [1, 8, 8], strides = [1, 1, 1]} : vector<4x8x8xf32> to vector<1x8x8xf32>
    %47 = vector.shape_cast %46 : vector<1x8x8xf32> to vector<8x8xf32>
    %c24 = arith.constant 24 : index
    %c0_23 = arith.constant 0 : index
    %48 = vector.load %arg11[%c24, %c0_23] : memref<32x32xf32, #tpu.memory_space<vmem>>, vector<8x32xf32>
    %cst_24 = arith.constant dense<0.000000e+00> : vector<8x32xf32>
    %49 = tpu.matmul %47, %48, %cst_24 {dimension_numbers = #tpu.dot_dimension_numbers<[1], [0], [0], [1], [0, 0, 1, 1], [], []>} : vector<8x8xf32>, vector<8x32xf32>, vector<8x32xf32> -> vector<8x32xf32>
    %50 = arith.addf %45, %49 : vector<8x32xf32>
    %c0_25 = arith.constant 0 : index
    %c0_26 = arith.constant 0 : index
    %51 = vector.load %arg12[%c0_25, %c0_26] : memref<1x32xf32, #tpu.memory_space<vmem>>, vector<1x32xf32>
    %52 = vector.broadcast %51 : vector<1x32xf32> to vector<8x32xf32>
    %53 = arith.addf %50, %52 : vector<8x32xf32>
    %c0_27 = arith.constant 0 : index
    %c0_28 = arith.constant 0 : index
    %c0_29 = arith.constant 0 : index
    %54 = vector.load %arg13[%c0_27, %c0_28, %c0_29] : memref<1x8x32xf32, #tpu.memory_space<vmem>>, vector<1x8x32xf32>
    %55 = vector.shape_cast %54 : vector<1x8x32xf32> to vector<8x32xf32>
    %56 = vector.shape_cast %53 : vector<8x32xf32> to vector<1x8x32xf32>
    tpu.vector_store %arg13[%c0_27, %c0_28, %c0_29], %56 {strides = array<i32>} : memref<1x8x32xf32, #tpu.memory_space<vmem>>, vector<1x8x32xf32>,
    return
  }
  func.func @transform_0(%arg0: i32, %arg1: i32, %arg2: i32) -> (i32, i32, i32) {
    %c1_i32 = arith.constant 1 : i32
    %0 = arith.muli %arg1, %c1_i32 : i32
    %1 = arith.addi %0, %arg2 : i32
    %c0_i32 = arith.constant 0 : i32
    %c0_i32_0 = arith.constant 0 : i32
    return %arg0, %1, %c0_i32 : i32, i32, i32
  }
  func.func @transform_1(%arg0: i32, %arg1: i32, %arg2: i32) -> (i32, i32, i32) {
    %c0_i32 = arith.constant 0 : i32
    %c0_i32_0 = arith.constant 0 : i32
    %c0_i32_1 = arith.constant 0 : i32
    return %arg0, %c0_i32, %c0_i32_0 : i32, i32, i32
  }
  func.func @transform_2(%arg0: i32, %arg1: i32, %arg2: i32) -> (i32, i32) {
    %c0_i32 = arith.constant 0 : i32
    %c0_i32_0 = arith.constant 0 : i32
    %c0_i32_1 = arith.constant 0 : i32
    return %c0_i32, %c0_i32_0 : i32, i32
  }
  func.func @transform_3(%arg0: i32, %arg1: i32, %arg2: i32) -> (i32, i32) {
    %c0_i32 = arith.constant 0 : i32
    %c0_i32_0 = arith.constant 0 : i32
    %c0_i32_1 = arith.constant 0 : i32
    return %c0_i32, %c0_i32_0 : i32, i32
  }
  func.func @transform_4(%arg0: i32, %arg1: i32, %arg2: i32) -> (i32, i32) {
    %c0_i32 = arith.constant 0 : i32
    %c0_i32_0 = arith.constant 0 : i32
    %c0_i32_1 = arith.constant 0 : i32
    return %c0_i32, %c0_i32_0 : i32, i32
  }
  func.func @transform_5(%arg0: i32, %arg1: i32, %arg2: i32) -> (i32, i32) {
    %c0_i32 = arith.constant 0 : i32
    %c0_i32_0 = arith.constant 0 : i32
    %c0_i32_1 = arith.constant 0 : i32
    return %c0_i32, %c0_i32_0 : i32, i32
  }
  func.func @transform_6(%arg0: i32, %arg1: i32, %arg2: i32) -> (i32, i32) {
    %c0_i32 = arith.constant 0 : i32
    %c0_i32_0 = arith.constant 0 : i32
    %c0_i32_1 = arith.constant 0 : i32
    return %c0_i32, %c0_i32_0 : i32, i32
  }
  func.func @transform_7(%arg0: i32, %arg1: i32, %arg2: i32) -> (i32, i32) {
    %c0_i32 = arith.constant 0 : i32
    %c0_i32_0 = arith.constant 0 : i32
    %c0_i32_1 = arith.constant 0 : i32
    return %c0_i32, %c0_i32_0 : i32, i32
  }
  func.func @transform_8(%arg0: i32, %arg1: i32, %arg2: i32) -> (i32, i32) {
    %c0_i32 = arith.constant 0 : i32
    %c0_i32_0 = arith.constant 0 : i32
    %c0_i32_1 = arith.constant 0 : i32
    return %c0_i32, %c0_i32_0 : i32, i32
  }
  func.func @transform_9(%arg0: i32, %arg1: i32, %arg2: i32) -> (i32, i32) {
    %c0_i32 = arith.constant 0 : i32
    %c0_i32_0 = arith.constant 0 : i32
    %c0_i32_1 = arith.constant 0 : i32
    return %c0_i32, %c0_i32_0 : i32, i32
  }
  func.func @transform_10(%arg0: i32, %arg1: i32, %arg2: i32) -> (i32, i32, i32) {
    %c1_i32 = arith.constant 1 : i32
    %0 = arith.muli %arg1, %c1_i32 : i32
    %1 = arith.addi %0, %arg2 : i32
    %c0_i32 = arith.constant 0 : i32
    %c0_i32_0 = arith.constant 0 : i32
    return %arg0, %1, %c0_i32 : i32, i32, i32
  }
}

</mosaic_0001>

<llo_original>
// kernel: tpu_custom_call.1
$region0: #{tpu_custom_call.1}
  #allocation0 [shape = 'u32[]', space=smem, size = 0x4, offset = 0x4, fixed_abs, tag = 'smem constant byte address 0x4 - core index']
  #allocation1 [shape = 'u32[144,128]{1,0:T(1,128)}', space=vmem, size = 0x12000, scoped, tag = 'internal scratch']
  #allocation2 [shape = 'f32[8,32]{1,0:T(8,128)}', space=vmem, size = 0x1000, scoped, tag = 'scratch operand']
  #allocation3 [shape = 'f32[8,32]{1,0:T(8,128)}', space=vmem, size = 0x1000, scoped, tag = 'scratch operand']
  %s0 = inlined_call_operand.hbm [shape: f32[2,8,32], index: 0, kind: input, shape index: {}]
  %s1 = inlined_call_operand.hbm [shape: f32[2,8,32], index: 1, kind: input, shape index: {}]
  %s2 = inlined_call_operand.hbm [shape: f32[32,32], index: 2, kind: input, shape index: {}]
  %s3 = inlined_call_operand.vmem [shape: f32[1,32], index: 3, kind: input, shape index: {}]
  %s4 = inlined_call_operand.hbm [shape: f32[32,32], index: 4, kind: input, shape index: {}]
  %s5 = inlined_call_operand.vmem [shape: f32[1,32], index: 5, kind: input, shape index: {}]
  %s6 = inlined_call_operand.hbm [shape: f32[32,32], index: 6, kind: input, shape index: {}]
  %s7 = inlined_call_operand.vmem [shape: f32[1,32], index: 7, kind: input, shape index: {}]
  %s8 = inlined_call_operand.hbm [shape: f32[32,32], index: 8, kind: input, shape index: {}]
  %s9 = inlined_call_operand.vmem [shape: f32[1,32], index: 9, kind: input, shape index: {}]
  %s10 = inlined_call_operand.hbm [shape: f32[2,8,32], index: 10, kind: output, shape index: {}]
  %s11 = sld [smem:[#allocation0]]
  $region101: #{tpu_custom_call.1} parent=0
    _
  %s13 = ssub.s32 1, %s11
  %s14 = scalar_select 0, %s13, %s11
  $region1: #{tpu_custom_call.1} parent=0
    #allocation4 [shape = 'u8[8192]{0}', space=vmem, size = 0x2000, scoped, tag = 'input window, operand 0']
    #allocation5 [shape = 's32[2]{0}', space=sflag, size = 0x8, scoped, tag = 'scoped memory for tpu_custom_call.1']
    #allocation6 [shape = 's32[2]{0}', space=sflag, size = 0x8, scoped, tag = 'scoped memory for tpu_custom_call.1']
    #allocation7 [shape = 'u8[4096]{0}', space=vmem, size = 0x1000, scoped, tag = 'input window, operand 1, single buffered']
    #allocation8 [shape = 's32[1]{0}', space=sflag, size = 0x4, scoped, tag = 'scoped memory for tpu_custom_call.1']
    #allocation9 [shape = 'u8[16384]{0}', space=vmem, size = 0x4000, scoped, tag = 'input window, operand 2, single buffered']
    #allocation10 [shape = 'u8[16384]{0}', space=vmem, size = 0x4000, scoped, tag = 'input window, operand 4, single buffered']
    #allocation11 [shape = 's32[1]{0}', space=sflag, size = 0x4, scoped, tag = 'scoped memory for tpu_custom_call.1']
    #allocation12 [shape = 'u8[16384]{0}', space=vmem, size = 0x4000, scoped, tag = 'input window, operand 6, single buffered']
    #allocation13 [shape = 'u8[16384]{0}', space=vmem, size = 0x4000, scoped, tag = 'input window, operand 8, single buffered']
    #allocation14 [shape = 's32[1]{0}', space=sflag, size = 0x4, scoped, tag = 'scoped memory for tpu_custom_call.1']
    #allocation15 [shape = 'u8[8192]{0}', space=vmem, size = 0x2000, scoped, tag = 'output window, operand 0']
    %15 = vsyncpa [#allocation5], 0
    %s16 = scalar_lea.sflag [#allocation5], 1
    %17 = vsyncpa %s16, 0
    %18 = vsyncpa [#allocation8], 0
    %19 = vsyncpa [#allocation11], 0
    %20 = vsyncpa [#allocation14], 0
    %21 = vsyncpa [#allocation6], 0
    %s22 = scalar_lea.sflag [#allocation6], 1
    %23 = vsyncpa %s22, 0
    loop: start=0, step=1, limit=4
    $region2: #{tpu_custom_call.1} parent=1 // loop_pre_header
      _
    $region3: #{tpu_custom_call.1} parent=1 // loop_header
      %s25 = sphi 0, %s29
      %p26 = scmp.ge.s32.totalorder %s25, 4
      %s32 = sphi 0, %s51
      %s33 = sphi 0, %s47
      %s34 = sphi 0, %s43
      %s35 = sphi 0, %s32
      %s36 = sphi 0, %s33
      %s37 = sphi 0, %s34
      %s38 = sphi 0, %s35
      %s39 = sphi 0, %s36
      %s40 = sphi 0, %s37
      %s58 = sphi 0, %s60
      %s61 = sphi 0, %s58
      %s62 = sphi 0, %s61
      %s78 = sphi 0, %s62
      %s84 = sphi 0, %s86
      %s87 = sphi 0, %s84
      %s88 = sphi 0, %s87
      %s104 = sphi 0, %s88
      %s108 = sphi 0, %s108
      %s110 = sphi 0, %s108
      %s111 = sphi 0, %s110
      %s125 = sphi 0, %s111
      %s129 = sphi 0, %s129
      %s131 = sphi 0, %s129
      %s132 = sphi 0, %s131
      %s146 = sphi 0, %s132
      %s150 = sphi 0, %s150
      %s152 = sphi 0, %s150
      %s153 = sphi 0, %s152
      %s167 = sphi 0, %s153
      %s171 = sphi 0, %s171
      %s173 = sphi 0, %s171
      %s174 = sphi 0, %s173
      %s188 = sphi 0, %s174
      %s192 = sphi 0, %s192
      %s194 = sphi 0, %s192
      %s195 = sphi 0, %s194
      %s209 = sphi 0, %s195
      %s213 = sphi 0, %s213
      %s215 = sphi 0, %s213
      %s216 = sphi 0, %s215
      %s230 = sphi 0, %s216
      %s234 = sphi 0, %s234
      %s236 = sphi 0, %s234
      %s237 = sphi 0, %s236
      %s251 = sphi 0, %s237
      %s255 = sphi 0, %s255
      %s257 = sphi 0, %s255
      %s258 = sphi 0, %s257
      %s272 = sphi 0, %s258
      %s282 = sphi 0, %s284
      %s285 = sphi 0, %s282
      %s286 = sphi 0, %s285
      %s302 = sphi 0, %s286
    $region4: #{tpu_custom_call.1} parent=1 // loop_header_branch
      %28 = sbr.rel (%p26) target = $region8
    $region5: #{tpu_custom_call.1} parent=1 // loop_body
      %s30 = ssub.s32 %s25, 1
      %s31 = ssub.s32 %s25, 2
      %s41 = sadd.s32 1, %s34
      %p42 = scmp.ge.s32.totalorder %s41, 1
      %s43 = scalar_select %p42, 0, %s41
      %s44 = sadd.s32 1, %s33
      %s45 = scalar_select %p42, %s44, %s33
      %p46 = scmp.ge.s32.totalorder %s45, 1
      %s47 = scalar_select %p46, 0, %s45
      %s48 = sadd.s32 1, %s32
      %s49 = scalar_select %p46, %s48, %s32
      %p50 = scmp.ge.s32.totalorder %s49, 2
      %s51 = scalar_select %p50, 0, %s49
      %s52 = sadd.s32 %s33, %s34
      %s53 = sadd.s32 %s47, %s43
      %s54 = ssub.s32 %s32, %s51
      %s55 = ssub.s32 %s52, %s53
      %s56 = sor.u32 %s54, %s55
      %p57 = scmp.eq.s32.totalorder %s56, 0
      %s59 = sadd.s32 %s58, 1
      %s60 = scalar_select %p57, %s58, %s59
      %p63 = pneg %p57
      %p64 = scmp.eq.s32.totalorder %s25, 1
      %p65 = por %p63, %p64
      %p66 = scmp.ne.s32.totalorder %s58, %s61
      %p67 = scmp.eq.s32.totalorder %s25, 0
      %p68 = por %p66, %p67
      %p69 = scmp.ne.s32.totalorder %s58, %s61
      %p70 = scmp.eq.s32.totalorder %s30, 1
      %p71 = por %p69, %p70
      %p72 = scmp.ne.s32.totalorder %s61, %s62
      %p73 = scmp.eq.s32.totalorder %s30, 0
      %p74 = por %p72, %p73
      %p75 = scmp.ne.s32.totalorder %s61, %s62
      %p76 = scmp.eq.s32.totalorder %s31, 1
      %p77 = por %p75, %p76
      %p79 = scmp.ne.s32.totalorder %s62, %s78
      %p80 = scmp.eq.s32.totalorder %s31, 0
      %p81 = por %p79, %p80
      %s82 = ssub.s32 %s32, %s51
      %p83 = scmp.eq.s32.totalorder %s82, 0
      %s85 = sadd.s32 %s84, 1
      %s86 = scalar_select %p83, %s84, %s85
      %p89 = pneg %p83
      %p90 = scmp.eq.s32.totalorder %s25, 1
      %p91 = por %p89, %p90
      %p92 = scmp.ne.s32.totalorder %s84, %s87
      %p93 = scmp.eq.s32.totalorder %s25, 0
      %p94 = por %p92, %p93
      %p95 = scmp.ne.s32.totalorder %s84, %s87
      %p96 = scmp.eq.s32.totalorder %s30, 1
      %p97 = por %p95, %p96
      %p98 = scmp.ne.s32.totalorder %s87, %s88
      %p99 = scmp.eq.s32.totalorder %s30, 0
      %p100 = por %p98, %p99
      %p101 = scmp.ne.s32.totalorder %s87, %s88
      %p102 = scmp.eq.s32.totalorder %s31, 1
      %p103 = por %p101, %p102
      %p105 = scmp.ne.s32.totalorder %s88, %s104
      %p106 = scmp.eq.s32.totalorder %s31, 0
      %p107 = por %p105, %p106
      %s109 = sadd.s32 %s108, 1
      %p112 = scmp.eq.s32.totalorder %s25, 1
      %p113 = scmp.ne.s32.totalorder %s108, %s110
      %p114 = scmp.eq.s32.totalorder %s25, 0
      %p115 = por %p113, %p114
      %p116 = scmp.ne.s32.totalorder %s108, %s110
      %p117 = scmp.eq.s32.totalorder %s30, 1
      %p118 = por %p116, %p117
      %p119 = scmp.ne.s32.totalorder %s110, %s111
      %p120 = scmp.eq.s32.totalorder %s30, 0
      %p121 = por %p119, %p120
      %p122 = scmp.ne.s32.totalorder %s110, %s111
      %p123 = scmp.eq.s32.totalorder %s31, 1
      %p124 = por %p122, %p123
      %p126 = scmp.ne.s32.totalorder %s111, %s125
      %p127 = scmp.eq.s32.totalorder %s31, 0
      %p128 = por %p126, %p127
      %s130 = sadd.s32 %s129, 1
      %p133 = scmp.eq.s32.totalorder %s25, 1
      %p134 = scmp.ne.s32.totalorder %s129, %s131
      %p135 = scmp.eq.s32.totalorder %s25, 0
      %p136 = por %p134, %p135
      %p137 = scmp.ne.s32.totalorder %s129, %s131
      %p138 = scmp.eq.s32.totalorder %s30, 1
      %p139 = por %p137, %p138
      %p140 = scmp.ne.s32.totalorder %s131, %s132
      %p141 = scmp.eq.s32.totalorder %s30, 0
      %p142 = por %p140, %p141
      %p143 = scmp.ne.s32.totalorder %s131, %s132
      %p144 = scmp.eq.s32.totalorder %s31, 1
      %p145 = por %p143, %p144
      %p147 = scmp.ne.s32.totalorder %s132, %s146
      %p148 = scmp.eq.s32.totalorder %s31, 0
      %p149 = por %p147, %p148
      %s151 = sadd.s32 %s150, 1
      %p154 = scmp.eq.s32.totalorder %s25, 1
      %p155 = scmp.ne.s32.totalorder %s150, %s152
      %p156 = scmp.eq.s32.totalorder %s25, 0
      %p157 = por %p155, %p156
      %p158 = scmp.ne.s32.totalorder %s150, %s152
      %p159 = scmp.eq.s32.totalorder %s30, 1
      %p160 = por %p158, %p159
      %p161 = scmp.ne.s32.totalorder %s152, %s153
      %p162 = scmp.eq.s32.totalorder %s30, 0
      %p163 = por %p161, %p162
      %p164 = scmp.ne.s32.totalorder %s152, %s153
      %p165 = scmp.eq.s32.totalorder %s31, 1
      %p166 = por %p164, %p165
      %p168 = scmp.ne.s32.totalorder %s153, %s167
      %p169 = scmp.eq.s32.totalorder %s31, 0
      %p170 = por %p168, %p169
      %s172 = sadd.s32 %s171, 1
      %p175 = scmp.eq.s32.totalorder %s25, 1
      %p176 = scmp.ne.s32.totalorder %s171, %s173
      %p177 = scmp.eq.s32.totalorder %s25, 0
      %p178 = por %p176, %p177
      %p179 = scmp.ne.s32.totalorder %s171, %s173
      %p180 = scmp.eq.s32.totalorder %s30, 1
      %p181 = por %p179, %p180
      %p182 = scmp.ne.s32.totalorder %s173, %s174
      %p183 = scmp.eq.s32.totalorder %s30, 0
      %p184 = por %p182, %p183
      %p185 = scmp.ne.s32.totalorder %s173, %s174
      %p186 = scmp.eq.s32.totalorder %s31, 1
      %p187 = por %p185, %p186
      %p189 = scmp.ne.s32.totalorder %s174, %s188
      %p190 = scmp.eq.s32.totalorder %s31, 0
      %p191 = por %p189, %p190
      %s193 = sadd.s32 %s192, 1
      %p196 = scmp.eq.s32.totalorder %s25, 1
      %p197 = scmp.ne.s32.totalorder %s192, %s194
      %p198 = scmp.eq.s32.totalorder %s25, 0
      %p199 = por %p197, %p198
      %p200 = scmp.ne.s32.totalorder %s192, %s194
      %p201 = scmp.eq.s32.totalorder %s30, 1
      %p202 = por %p200, %p201
      %p203 = scmp.ne.s32.totalorder %s194, %s195
      %p204 = scmp.eq.s32.totalorder %s30, 0
      %p205 = por %p203, %p204
      %p206 = scmp.ne.s32.totalorder %s194, %s195
      %p207 = scmp.eq.s32.totalorder %s31, 1
      %p208 = por %p206, %p207
      %p210 = scmp.ne.s32.totalorder %s195, %s209
      %p211 = scmp.eq.s32.totalorder %s31, 0
      %p212 = por %p210, %p211
      %s214 = sadd.s32 %s213, 1
      %p217 = scmp.eq.s32.totalorder %s25, 1
      %p218 = scmp.ne.s32.totalorder %s213, %s215
      %p219 = scmp.eq.s32.totalorder %s25, 0
      %p220 = por %p218, %p219
      %p221 = scmp.ne.s32.totalorder %s213, %s215
      %p222 = scmp.eq.s32.totalorder %s30, 1
      %p223 = por %p221, %p222
      %p224 = scmp.ne.s32.totalorder %s215, %s216
      %p225 = scmp.eq.s32.totalorder %s30, 0
      %p226 = por %p224, %p225
      %p227 = scmp.ne.s32.totalorder %s215, %s216
      %p228 = scmp.eq.s32.totalorder %s31, 1
      %p229 = por %p227, %p228
      %p231 = scmp.ne.s32.totalorder %s216, %s230
      %p232 = scmp.eq.s32.totalorder %s31, 0
      %p233 = por %p231, %p232
      %s235 = sadd.s32 %s234, 1
      %p238 = scmp.eq.s32.totalorder %s25, 1
      %p239 = scmp.ne.s32.totalorder %s234, %s236
      %p240 = scmp.eq.s32.totalorder %s25, 0
      %p241 = por %p239, %p240
      %p242 = scmp.ne.s32.totalorder %s234, %s236
      %p243 = scmp.eq.s32.totalorder %s30, 1
      %p244 = por %p242, %p243
      %p245 = scmp.ne.s32.totalorder %s236, %s237
      %p246 = scmp.eq.s32.totalorder %s30, 0
      %p247 = por %p245, %p246
      %p248 = scmp.ne.s32.totalorder %s236, %s237
      %p249 = scmp.eq.s32.totalorder %s31, 1
      %p250 = por %p248, %p249
      %p252 = scmp.ne.s32.totalorder %s237, %s251
      %p253 = scmp.eq.s32.totalorder %s31, 0
      %p254 = por %p252, %p253
      %s256 = sadd.s32 %s255, 1
      %p259 = scmp.eq.s32.totalorder %s25, 1
      %p260 = scmp.ne.s32.totalorder %s255, %s257
      %p261 = scmp.eq.s32.totalorder %s25, 0
      %p262 = por %p260, %p261
      %p263 = scmp.ne.s32.totalorder %s255, %s257
      %p264 = scmp.eq.s32.totalorder %s30, 1
      %p265 = por %p263, %p264
      %p266 = scmp.ne.s32.totalorder %s257, %s258
      %p267 = scmp.eq.s32.totalorder %s30, 0
      %p268 = por %p266, %p267
      %p269 = scmp.ne.s32.totalorder %s257, %s258
      %p270 = scmp.eq.s32.totalorder %s31, 1
      %p271 = por %p269, %p270
      %p273 = scmp.ne.s32.totalorder %s258, %s272
      %p274 = scmp.eq.s32.totalorder %s31, 0
      %p275 = por %p273, %p274
      %s276 = sadd.s32 %s33, %s34
      %s277 = sadd.s32 %s47, %s43
      %s278 = ssub.s32 %s32, %s51
      %s279 = ssub.s32 %s276, %s277
      %s280 = sor.u32 %s278, %s279
      %p281 = scmp.eq.s32.totalorder %s280, 0
      %s283 = sadd.s32 %s282, 1
      %s284 = scalar_select %p281, %s282, %s283
      %p287 = pneg %p281
      %p288 = scmp.eq.s32.totalorder %s25, 1
      %p289 = por %p287, %p288
      %p290 = scmp.ne.s32.totalorder %s282, %s285
      %p291 = scmp.eq.s32.totalorder %s25, 0
      %p292 = por %p290, %p291
      %p293 = scmp.ne.s32.totalorder %s282, %s285
      %p294 = scmp.eq.s32.totalorder %s30, 1
      %p295 = por %p293, %p294
      %p296 = scmp.ne.s32.totalorder %s285, %s286
      %p297 = scmp.eq.s32.totalorder %s30, 0
      %p298 = por %p296, %p297
      %p299 = scmp.ne.s32.totalorder %s285, %s286
      %p300 = scmp.eq.s32.totalorder %s31, 1
      %p301 = por %p299, %p300
      %p303 = scmp.ne.s32.totalorder %s286, %s302
      %p304 = scmp.eq.s32.totalorder %s31, 0
      %p305 = por %p303, %p304
      %p306 = scmp.le.s32.totalorder 1, %s25
      %p307 = scmp.lt.s32.totalorder %s25, 3
      %p308 = pnand %p306, %p307
      %p309 = pneg %p308
      // Predicated region
      $region9: #{tpu_custom_call.1} parent=5 // pred_check
        _
      $region10: #{tpu_custom_call.1} parent=5 // pred_check_branch
        %311 = sbr.rel (%p308) target = $region12
      $region11: #{tpu_custom_call.1} parent=5 // pred_region
        %s312 = ssub.s32 %s25, 1
        // Predicated region
        $region13: #{tpu_custom_call.1} parent=11 // pred_check
          %p313 = pneg %p100
        $region14: #{tpu_custom_call.1} parent=11 // pred_check_branch
          %315 = sbr.rel (%p313) target = $region16
        $region15: #{tpu_custom_call.1} parent=11 // pred_region
          %s317 = ssub.s32 128, 128
          %318 = vsyncadd [#allocation8], %s317
          %s319 = smul.addr %s35, 128
          %s320 = scalar_lea.hbm %s1, %s319
          %s322 = sshll.u32 [#allocation7], 4
          %s323 = int_to_ptr.vmem [resolvable:$true] %s322
          %325 = dma.hbm_to_vmem [thread:$0]  %s320, 128, %s323, [#allocation8]
        $region16: #{tpu_custom_call.1} parent=11 // pred_fallthru
          _
        // Predicated region
        $region17: #{tpu_custom_call.1} parent=11 // pred_check
          %p326 = pneg %p121
        $region18: #{tpu_custom_call.1} parent=11 // pred_check_branch
          %328 = sbr.rel (%p326) target = $region20
        $region19: #{tpu_custom_call.1} parent=11 // pred_region
          %s330 = ssub.s32 512, 512
          %331 = vsyncadd [#allocation8], %s330
          %s332 = sshll.u32 [#allocation9], 4
          %s333 = int_to_ptr.vmem [resolvable:$true] %s332
          %338 = dma.hbm_to_vmem [thread:$0]  %s2, 512, %s333, [#allocation8], 128, 128, 8
        $region20: #{tpu_custom_call.1} parent=11 // pred_fallthru
          _
        // Predicated region
        $region21: #{tpu_custom_call.1} parent=11 // pred_check
          %p339 = pneg %p142
        $region22: #{tpu_custom_call.1} parent=11 // pred_check_branch
          %341 = sbr.rel (%p339) target = $region24
        $region23: #{tpu_custom_call.1} parent=11 // pred_region
          _
        $region24: #{tpu_custom_call.1} parent=11 // pred_fallthru
          _
        // Predicated region
        $region25: #{tpu_custom_call.1} parent=11 // pred_check
          %p342 = pneg %p163
        $region26: #{tpu_custom_call.1} parent=11 // pred_check_branch
          %344 = sbr.rel (%p342) target = $region28
        $region27: #{tpu_custom_call.1} parent=11 // pred_region
          %s346 = ssub.s32 512, 512
          %347 = vsyncadd [#allocation11], %s346
          %s348 = sshll.u32 [#allocation10], 4
          %s349 = int_to_ptr.vmem [resolvable:$true] %s348
          %354 = dma.hbm_to_vmem [thread:$0]  %s4, 512, %s349, [#allocation11], 128, 128, 8
        $region28: #{tpu_custom_call.1} parent=11 // pred_fallthru
          _
        // Predicated region
        $region29: #{tpu_custom_call.1} parent=11 // pred_check
          %p355 = pneg %p184
        $region30: #{tpu_custom_call.1} parent=11 // pred_check_branch
          %357 = sbr.rel (%p355) target = $region32
        $region31: #{tpu_custom_call.1} parent=11 // pred_region
          _
        $region32: #{tpu_custom_call.1} parent=11 // pred_fallthru
          _
        // Predicated region
        $region33: #{tpu_custom_call.1} parent=11 // pred_check
          %p358 = pneg %p205
        $region34: #{tpu_custom_call.1} parent=11 // pred_check_branch
          %360 = sbr.rel (%p358) target = $region36
        $region35: #{tpu_custom_call.1} parent=11 // pred_region
          %s362 = ssub.s32 512, 512
          %363 = vsyncadd [#allocation11], %s362
          %s364 = sshll.u32 [#allocation12], 4
          %s365 = int_to_ptr.vmem [resolvable:$true] %s364
          %370 = dma.hbm_to_vmem [thread:$0]  %s6, 512, %s365, [#allocation11], 128, 128, 8
        $region36: #{tpu_custom_call.1} parent=11 // pred_fallthru
          _
        // Predicated region
        $region37: #{tpu_custom_call.1} parent=11 // pred_check
          %p371 = pneg %p226
        $region38: #{tpu_custom_call.1} parent=11 // pred_check_branch
          %373 = sbr.rel (%p371) target = $region40
        $region39: #{tpu_custom_call.1} parent=11 // pred_region
          _
        $region40: #{tpu_custom_call.1} parent=11 // pred_fallthru
          _
        // Predicated region
        $region41: #{tpu_custom_call.1} parent=11 // pred_check
          %p374 = pneg %p247
        $region42: #{tpu_custom_call.1} parent=11 // pred_check_branch
          %376 = sbr.rel (%p374) target = $region44
        $region43: #{tpu_custom_call.1} parent=11 // pred_region
          %s378 = ssub.s32 512, 512
          %379 = vsyncadd [#allocation14], %s378
          %s380 = sshll.u32 [#allocation13], 4
          %s381 = int_to_ptr.vmem [resolvable:$true] %s380
          %386 = dma.hbm_to_vmem [thread:$0]  %s8, 512, %s381, [#allocation14], 128, 128, 8
        $region44: #{tpu_custom_call.1} parent=11 // pred_fallthru
          _
        // Predicated region
        $region45: #{tpu_custom_call.1} parent=11 // pred_check
          %p387 = pneg %p268
        $region46: #{tpu_custom_call.1} parent=11 // pred_check_branch
          %389 = sbr.rel (%p387) target = $region48
        $region47: #{tpu_custom_call.1} parent=11 // pred_region
          _
        $region48: #{tpu_custom_call.1} parent=11 // pred_fallthru
          _
      $region12: #{tpu_custom_call.1} parent=5 // pred_fallthru
        _
      %p390 = scmp.lt.s32.totalorder %s25, 2
      // Predicated region
      $region49: #{tpu_custom_call.1} parent=5 // pred_check
        %p391 = pneg %p390
      $region50: #{tpu_custom_call.1} parent=5 // pred_check_branch
        %393 = sbr.rel (%p391) target = $region52
      $region51: #{tpu_custom_call.1} parent=5 // pred_region
        // Predicated region
        $region53: #{tpu_custom_call.1} parent=51 // pred_check
          %p394 = pneg %p68
        $region54: #{tpu_custom_call.1} parent=51 // pred_check_branch
          %396 = sbr.rel (%p394) target = $region56
        $region55: #{tpu_custom_call.1} parent=51 // pred_region
          %s397 = sand.u32 %s58, 1
          %s398 = scalar_lea.sflag [#allocation5], %s397
          %s399 = sand.u32 %s58, 1
          %s400 = smul.addr %s399, 8
          %s401 = scalar_lea.vmem [#allocation4], %s400
          %s402 = sadd.s32 %s33, %s34
          %s404 = ssub.s32 128, 128
          %405 = vsyncadd %s398, %s404
          %s406 = sadd.s32 %s402, %s32
          %s407 = smul.addr %s406, 128
          %s408 = scalar_lea.hbm %s0, %s407
          %s410 = sshll.u32 %s401, 4
          %s411 = int_to_ptr.vmem [resolvable:$true] %s410
          %413 = dma.hbm_to_vmem [thread:$0]  %s408, 128, %s411, %s398
        $region56: #{tpu_custom_call.1} parent=51 // pred_fallthru
          _
      $region52: #{tpu_custom_call.1} parent=5 // pred_fallthru
        _
      %p414 = scmp.le.s32.totalorder 1, %s25
      %p415 = scmp.lt.s32.totalorder %s25, 3
      %p416 = pnand %p414, %p415
      %p417 = pneg %p416
      // Predicated region
      $region57: #{tpu_custom_call.1} parent=5 // pred_check
        _
      $region58: #{tpu_custom_call.1} parent=5 // pred_check_branch
        %419 = sbr.rel (%p416) target = $region60
      $region59: #{tpu_custom_call.1} parent=5 // pred_region
        %s420 = ssub.s32 %s25, 1
        %s421 = sand.u32 %s61, 1
        %s422 = scalar_lea.sflag [#allocation5], %s421
        %s423 = sand.u32 %s61, 1
        %s424 = smul.addr %s423, 8
        %s425 = scalar_lea.vmem [#allocation4], %s424
        // Predicated region
        $region61: #{tpu_custom_call.1} parent=59 // pred_check
          %p426 = pneg %p74
        $region62: #{tpu_custom_call.1} parent=59 // pred_check_branch
          %428 = sbr.rel (%p426) target = $region64
        $region63: #{tpu_custom_call.1} parent=59 // pred_region
          %429 = dma.done %s422, 128
        $region64: #{tpu_custom_call.1} parent=59 // pred_fallthru
          _
        // Predicated region
        $region65: #{tpu_custom_call.1} parent=59 // pred_check
          %p430 = pneg %p100
        $region66: #{tpu_custom_call.1} parent=59 // pred_check_branch
          %432 = sbr.rel (%p430) target = $region68
        $region67: #{tpu_custom_call.1} parent=59 // pred_region
          %433 = dma.done [#allocation8], 128
        $region68: #{tpu_custom_call.1} parent=59 // pred_fallthru
          _
        // Predicated region
        $region69: #{tpu_custom_call.1} parent=59 // pred_check
          %p434 = pneg %p121
        $region70: #{tpu_custom_call.1} parent=59 // pred_check_branch
          %436 = sbr.rel (%p434) target = $region72
        $region71: #{tpu_custom_call.1} parent=59 // pred_region
          %437 = dma.done [#allocation8], 512
        $region72: #{tpu_custom_call.1} parent=59 // pred_fallthru
          _
        // Predicated region
        $region73: #{tpu_custom_call.1} parent=59 // pred_check
          %p438 = pneg %p163
        $region74: #{tpu_custom_call.1} parent=59 // pred_check_branch
          %440 = sbr.rel (%p438) target = $region76
        $region75: #{tpu_custom_call.1} parent=59 // pred_region
          %441 = dma.done [#allocation11], 512
        $region76: #{tpu_custom_call.1} parent=59 // pred_fallthru
          _
        // Predicated region
        $region77: #{tpu_custom_call.1} parent=59 // pred_check
          %p442 = pneg %p205
        $region78: #{tpu_custom_call.1} parent=59 // pred_check_branch
          %444 = sbr.rel (%p442) target = $region80
        $region79: #{tpu_custom_call.1} parent=59 // pred_region
          %445 = dma.done [#allocation11], 512
        $region80: #{tpu_custom_call.1} parent=59 // pred_fallthru
          _
        // Predicated region
        $region81: #{tpu_custom_call.1} parent=59 // pred_check
          %p446 = pneg %p247
        $region82: #{tpu_custom_call.1} parent=59 // pred_check_branch
          %448 = sbr.rel (%p446) target = $region84
        $region83: #{tpu_custom_call.1} parent=59 // pred_region
          %449 = dma.done [#allocation14], 512
        $region84: #{tpu_custom_call.1} parent=59 // pred_fallthru
          _
        %s450 = sand.u32 %s61, 1
        %s451 = scalar_lea.sflag [#allocation5], %s450
        %s452 = sand.u32 %s61, 1
        %s453 = smul.addr %s452, 8
        %s454 = scalar_lea.vmem [#allocation4], %s453
        %p455 = pneg %p74
        %p456 = pneg %p71
        %p457 = pneg %p100
        %p458 = pneg %p97
        %p459 = pneg %p121
        %p460 = pneg %p118
        %p461 = pneg %p142
        %p462 = pneg %p139
        %p463 = pneg %p163
        %p464 = pneg %p160
        %p465 = pneg %p184
        %p466 = pneg %p181
        %p467 = pneg %p205
        %p468 = pneg %p202
        %p469 = pneg %p226
        %p470 = pneg %p223
        %p471 = pneg %p247
        %p472 = pneg %p244
        %p473 = pneg %p268
        %p474 = pneg %p265
        %p475 = pneg %p298
        %p476 = pneg %p295
        %s477 = sand.u32 %s285, 1
        %s478 = scalar_lea.sflag [#allocation6], %s477
        %s479 = sand.u32 %s285, 1
        %s480 = smul.addr %s479, 8
        %s481 = scalar_lea.vmem [#allocation15], %s480
        %s482 = sadd.s32 %s36, %s37
        %s483 = sadd.s32 %s36, %s37
        %p484 = scmp.eq.s32.totalorder %s37, 0
        // Predicated region
        $region85: #{tpu_custom_call.1} parent=59 // pred_check
          %p485 = pneg %p484
        $region86: #{tpu_custom_call.1} parent=59 // pred_check_branch
          %487 = sbr.rel (%p485) target = $region88
        $region87: #{tpu_custom_call.1} parent=59 // pred_region
          %v488 = vld [vmem:[#allocation7] sm:$0xff]
          %v489 = vld [vmem:[#allocation10] sm:$0xff]
          %v490 = vld [vmem:[#allocation10 + $0x8] sm:$0xff]
          %v491 = vld [vmem:[#allocation10 + $0x10] sm:$0xff]
          %v492 = vld [vmem:[#allocation10 + $0x18] sm:$0xff]
          %v493 = vld [vmem:[%s5] sm:$0x1]
          %v495 = vlaneseq
          %v496 = vshrl.u32 %v495, 7
          %v497 = vsub.s32 0, %v496
          %v498 = vrot.slane %v493, %v497
          %vm500 = vcmask 261120
          %v502 = vsel %vm500, %v488, 0
          %504 = vmatprep.subr.mxu0 0.0
          %505 = vmatpush1.msra.mxu0 0.0
          %506 = vmatprep.subr.mxu0 0.0
          %507 = vmatpush1.msra.mxu0 0.0
          %508 = vmatprep.subr.mxu0 0.0
          %509 = vmatpush1.msra.mxu0 0.0
          %510 = vmatprep.subr.mxu0 0.0
          %511 = vmatpush1.msra.mxu0 0.0
          %512 = vmatprep.subr.mxu0 0.0
          %513 = vmatpush1.msra.mxu0 0.0
          %514 = vmatprep.subr.mxu0 0.0
          %515 = vmatpush1.msra.mxu0 0.0
          %516 = vmatprep.subr.mxu0 0.0
          %517 = vmatpush1.msra.mxu0 0.0
          %518 = vmatprep.subr.mxu0 0.0
          %519 = vmatpush1.msra.mxu0 0.0
          %520 = vmatprep.subr.mxu0 0.0
          %521 = vmatpush1.msra.mxu0 0.0
          %522 = vmatprep.subr.mxu0 0.0
          %523 = vmatpush1.msra.mxu0 0.0
          %524 = vmatprep.subr.mxu0 0.0
          %525 = vmatpush1.msra.mxu0 0.0
          %526 = vmatprep.subr.mxu0 0.0
          %527 = vmatpush1.msra.mxu0 0.0
          %528 = vmatprep.subr.mxu0 0.0
          %529 = vmatpush1.msra.mxu0 %v492
          %530 = vmatprep.subr.mxu0 0.0
          %531 = vmatpush1.msra.mxu0 %v491
          %532 = vmatprep.subr.mxu0 0.0
          %533 = vmatpush1.msra.mxu0 %v490
          %534 = vmatprep.subr.mxu0 0.0
          %535 = vmatpush1.msra.mxu0 %v489
          %536 = vmatprep.subr.mxu0 0.0
          %537 = vmatpush2.msra.mxu0 0.0
          %538 = vmatprep.subr.mxu0 0.0
          %539 = vmatpush2.msra.mxu0 0.0
          %540 = vmatprep.subr.mxu0 0.0
          %541 = vmatpush2.msra.mxu0 0.0
          %542 = vmatprep.subr.mxu0 0.0
          %543 = vmatpush2.msra.mxu0 0.0
          %544 = vmatprep.subr.mxu0 0.0
          %545 = vmatpush2.msra.mxu0 0.0
          %546 = vmatprep.subr.mxu0 0.0
          %547 = vmatpush2.msra.mxu0 0.0
          %548 = vmatprep.subr.mxu0 0.0
          %549 = vmatpush2.msra.mxu0 0.0
          %550 = vmatprep.subr.mxu0 0.0
          %551 = vmatpush2.msra.mxu0 0.0
          %552 = vmatprep.subr.mxu0 0.0
          %553 = vmatpush2.msra.mxu0 0.0
          %554 = vmatprep.subr.mxu0 0.0
          %555 = vmatpush2.msra.mxu0 0.0
          %556 = vmatprep.subr.mxu0 0.0
          %557 = vmatpush2.msra.mxu0 0.0
          %558 = vmatprep.subr.mxu0 0.0
          %559 = vmatpush2.msra.mxu0 0.0
          %560 = vmatprep.subr.mxu0 0.0
          %561 = vmatpush2.msra.mxu0 0.0
          %562 = vmatprep.subr.mxu0 0.0
          %563 = vmatpush2.msra.mxu0 0.0
          %564 = vmatprep.subr.mxu0 0.0
          %565 = vmatpush2.msra.mxu0 0.0
          %566 = vmatprep.subr.mxu0 0.0
          %567 = vmatpush2.msra.mxu0 0.0
          %568 = vmatprep.mubr.f32.mxu0 0.0
          %569 = vmatmul.mubr.f32.gmra.mxu0 %v502
          %v570 = vpop.f32.mrf.mxu0
          %v571 = vadd.f32 %v498, %v570
          %v572 = vpop.f32.mrf.mxu0
          %573 = vdwg.mxu0
          %574 = vst.msk [vmem:[#allocation2] sm:$0xff] %vm500, %v571
          %v575 = vld [vmem:[#allocation12] sm:$0xff]
          %v576 = vld [vmem:[#allocation12 + $0x8] sm:$0xff]
          %v577 = vld [vmem:[#allocation12 + $0x10] sm:$0xff]
          %v578 = vld [vmem:[#allocation12 + $0x18] sm:$0xff]
          %v579 = vld [vmem:[%s7] sm:$0x1]
          %v581 = vlaneseq
          %v582 = vshrl.u32 %v581, 7
          %v583 = vsub.s32 0, %v582
          %v584 = vrot.slane %v579, %v583
          %586 = vmatprep.subr.mxu0 0.0
          %587 = vmatpush1.msra.mxu0 0.0
          %588 = vmatprep.subr.mxu0 0.0
          %589 = vmatpush1.msra.mxu0 0.0
          %590 = vmatprep.subr.mxu0 0.0
          %591 = vmatpush1.msra.mxu0 0.0
          %592 = vmatprep.subr.mxu0 0.0
          %593 = vmatpush1.msra.mxu0 0.0
          %594 = vmatprep.subr.mxu0 0.0
          %595 = vmatpush1.msra.mxu0 0.0
          %596 = vmatprep.subr.mxu0 0.0
          %597 = vmatpush1.msra.mxu0 0.0
          %598 = vmatprep.subr.mxu0 0.0
          %599 = vmatpush1.msra.mxu0 0.0
          %600 = vmatprep.subr.mxu0 0.0
          %601 = vmatpush1.msra.mxu0 0.0
          %602 = vmatprep.subr.mxu0 0.0
          %603 = vmatpush1.msra.mxu0 0.0
          %604 = vmatprep.subr.mxu0 0.0
          %605 = vmatpush1.msra.mxu0 0.0
          %606 = vmatprep.subr.mxu0 0.0
          %607 = vmatpush1.msra.mxu0 0.0
          %608 = vmatprep.subr.mxu0 0.0
          %609 = vmatpush1.msra.mxu0 0.0
          %610 = vmatprep.subr.mxu0 0.0
          %611 = vmatpush1.msra.mxu0 %v578
          %612 = vmatprep.subr.mxu0 0.0
          %613 = vmatpush1.msra.mxu0 %v577
          %614 = vmatprep.subr.mxu0 0.0
          %615 = vmatpush1.msra.mxu0 %v576
          %616 = vmatprep.subr.mxu0 0.0
          %617 = vmatpush1.msra.mxu0 %v575
          %618 = vmatprep.subr.mxu0 0.0
          %619 = vmatpush2.msra.mxu0 0.0
          %620 = vmatprep.subr.mxu0 0.0
          %621 = vmatpush2.msra.mxu0 0.0
          %622 = vmatprep.subr.mxu0 0.0
          %623 = vmatpush2.msra.mxu0 0.0
          %624 = vmatprep.subr.mxu0 0.0
          %625 = vmatpush2.msra.mxu0 0.0
          %626 = vmatprep.subr.mxu0 0.0
          %627 = vmatpush2.msra.mxu0 0.0
          %628 = vmatprep.subr.mxu0 0.0
          %629 = vmatpush2.msra.mxu0 0.0
          %630 = vmatprep.subr.mxu0 0.0
          %631 = vmatpush2.msra.mxu0 0.0
          %632 = vmatprep.subr.mxu0 0.0
          %633 = vmatpush2.msra.mxu0 0.0
          %634 = vmatprep.subr.mxu0 0.0
          %635 = vmatpush2.msra.mxu0 0.0
          %636 = vmatprep.subr.mxu0 0.0
          %637 = vmatpush2.msra.mxu0 0.0
          %638 = vmatprep.subr.mxu0 0.0
          %639 = vmatpush2.msra.mxu0 0.0
          %640 = vmatprep.subr.mxu0 0.0
          %641 = vmatpush2.msra.mxu0 0.0
          %642 = vmatprep.subr.mxu0 0.0
          %643 = vmatpush2.msra.mxu0 0.0
          %644 = vmatprep.subr.mxu0 0.0
          %645 = vmatpush2.msra.mxu0 0.0
          %646 = vmatprep.subr.mxu0 0.0
          %647 = vmatpush2.msra.mxu0 0.0
          %648 = vmatprep.subr.mxu0 0.0
          %649 = vmatpush2.msra.mxu0 0.0
          %650 = vmatprep.mubr.f32.mxu0 0.0
          %651 = vmatmul.mubr.f32.gmra.mxu0 %v502
          %v652 = vpop.f32.mrf.mxu0
          %v653 = vadd.f32 %v584, %v652
          %v654 = vpop.f32.mrf.mxu0
          %655 = vdwg.mxu0
          %656 = vst.msk [vmem:[#allocation3] sm:$0xff] %vm500, %v653
        $region88: #{tpu_custom_call.1} parent=59 // pred_fallthru
          _
        %v657 = vld [vmem:[%s425] sm:$0xff]
        %v658 = vld [vmem:[#allocation9] sm:$0xff]
        %v659 = vld [vmem:[#allocation9 + $0x8] sm:$0xff]
        %v660 = vld [vmem:[#allocation9 + $0x10] sm:$0xff]
        %v661 = vld [vmem:[#allocation9 + $0x18] sm:$0xff]
        %v662 = vld [vmem:[%s3] sm:$0x1]
        %v664 = vlaneseq
        %v665 = vshrl.u32 %v664, 7
        %v666 = vsub.s32 0, %v665
        %v667 = vrot.slane %v662, %v666
        %vm669 = vcmask 261120
        %v671 = vsel %vm669, %v657, 0
        %673 = vmatprep.subr.mxu0 0.0
        %674 = vmatpush1.msra.mxu0 0.0
        %675 = vmatprep.subr.mxu0 0.0
        %676 = vmatpush1.msra.mxu0 0.0
        %677 = vmatprep.subr.mxu0 0.0
        %678 = vmatpush1.msra.mxu0 0.0
        %679 = vmatprep.subr.mxu0 0.0
        %680 = vmatpush1.msra.mxu0 0.0
        %681 = vmatprep.subr.mxu0 0.0
        %682 = vmatpush1.msra.mxu0 0.0
        %683 = vmatprep.subr.mxu0 0.0
        %684 = vmatpush1.msra.mxu0 0.0
        %685 = vmatprep.subr.mxu0 0.0
        %686 = vmatpush1.msra.mxu0 0.0
        %687 = vmatprep.subr.mxu0 0.0
        %688 = vmatpush1.msra.mxu0 0.0
        %689 = vmatprep.subr.mxu0 0.0
        %690 = vmatpush1.msra.mxu0 0.0
        %691 = vmatprep.subr.mxu0 0.0
        %692 = vmatpush1.msra.mxu0 0.0
        %693 = vmatprep.subr.mxu0 0.0
        %694 = vmatpush1.msra.mxu0 0.0
        %695 = vmatprep.subr.mxu0 0.0
        %696 = vmatpush1.msra.mxu0 0.0
        %697 = vmatprep.subr.mxu0 0.0
        %698 = vmatpush1.msra.mxu0 %v661
        %699 = vmatprep.subr.mxu0 0.0
        %700 = vmatpush1.msra.mxu0 %v660
        %701 = vmatprep.subr.mxu0 0.0
        %702 = vmatpush1.msra.mxu0 %v659
        %703 = vmatprep.subr.mxu0 0.0
        %704 = vmatpush1.msra.mxu0 %v658
        %705 = vmatprep.subr.mxu0 0.0
        %706 = vmatpush2.msra.mxu0 0.0
        %707 = vmatprep.subr.mxu0 0.0
        %708 = vmatpush2.msra.mxu0 0.0
        %709 = vmatprep.subr.mxu0 0.0
        %710 = vmatpush2.msra.mxu0 0.0
        %711 = vmatprep.subr.mxu0 0.0
        %712 = vmatpush2.msra.mxu0 0.0
        %713 = vmatprep.subr.mxu0 0.0
        %714 = vmatpush2.msra.mxu0 0.0
        %715 = vmatprep.subr.mxu0 0.0
        %716 = vmatpush2.msra.mxu0 0.0
        %717 = vmatprep.subr.mxu0 0.0
        %718 = vmatpush2.msra.mxu0 0.0
        %719 = vmatprep.subr.mxu0 0.0
        %720 = vmatpush2.msra.mxu0 0.0
        %721 = vmatprep.subr.mxu0 0.0
        %722 = vmatpush2.msra.mxu0 0.0
        %723 = vmatprep.subr.mxu0 0.0
        %724 = vmatpush2.msra.mxu0 0.0
        %725 = vmatprep.subr.mxu0 0.0
        %726 = vmatpush2.msra.mxu0 0.0
        %727 = vmatprep.subr.mxu0 0.0
        %728 = vmatpush2.msra.mxu0 0.0
        %729 = vmatprep.subr.mxu0 0.0
        %730 = vmatpush2.msra.mxu0 0.0
        %731 = vmatprep.subr.mxu0 0.0
        %732 = vmatpush2.msra.mxu0 0.0
        %733 = vmatprep.subr.mxu0 0.0
        %734 = vmatpush2.msra.mxu0 0.0
        %735 = vmatprep.subr.mxu0 0.0
        %736 = vmatpush2.msra.mxu0 0.0
        %737 = vmatprep.mubr.f32.mxu0 0.0
        %738 = vmatmul.mubr.f32.gmra.mxu0 %v671
        %v739 = vpop.f32.mrf.mxu0
        %v740 = vadd.f32 %v667, %v739
        %v741 = vpop.f32.mrf.mxu0
        %742 = vdwg.mxu0
        %v743 = vmul.f32 %v740, 0.35355338
        %745 = vrot.lane.b32.xlu0 %v743, 120
        %v746 = vpop.permute.xlu0 %745
        %748 = vrot.lane.b32.xlu0 %v743, 112
        %v749 = vpop.permute.xlu0 %748
        %751 = vrot.lane.b32.xlu0 %v743, 104
        %v752 = vpop.permute.xlu0 %751
        %v754 = vcombine.low %v743, %v749
        %v755 = vcombine.high %v743, %v749
        %v757 = vunpack.c.l.s4 1983009808
        %v758 = vunpack.c.0.s8 %v757
        %v759 = vlaneseq
        %v760 = vshrl.u32 %v759, 7
        %v761 = vsub.s32 %v758, %v760
        %v762 = vrot.slane %v754, %v761
        %v764 = vunpack.c.l.s4 1983009808
        %v765 = vunpack.c.0.s8 %v764
        %v766 = vlaneseq
        %v767 = vshrl.u32 %v766, 7
        %v768 = vsub.s32 %v765, %v767
        %v769 = vrot.slane %v755, %v768
        %v770 = vcombine.low %v746, %v752
        %v771 = vcombine.high %v746, %v752
        %v773 = vunpack.c.l.s4 1983009808
        %v774 = vunpack.c.0.s8 %v773
        %v775 = vlaneseq
        %v776 = vshrl.u32 %v775, 7
        %v777 = vsub.s32 %v774, %v776
        %v778 = vrot.slane %v770, %v777
        %v780 = vunpack.c.l.s4 1983009808
        %v781 = vunpack.c.0.s8 %v780
        %v782 = vlaneseq
        %v783 = vshrl.u32 %v782, 7
        %v784 = vsub.s32 %v781, %v783
        %v785 = vrot.slane %v771, %v784
        %v786 = vcombine.low %v762, %v778
        %v787 = vcombine.high %v762, %v778
        %v789 = vunpack.c.l.s4 1934713408
        %v790 = vunpack.c.0.s8 %v789
        %v791 = vlaneseq
        %v792 = vshrl.u32 %v791, 7
        %v793 = vsub.s32 %v790, %v792
        %v794 = vrot.slane %v786, %v793
        %v796 = vunpack.c.l.s4 1934713408
        %v797 = vunpack.c.0.s8 %v796
        %v798 = vlaneseq
        %v799 = vshrl.u32 %v798, 7
        %v800 = vsub.s32 %v797, %v799
        %v801 = vrot.slane %v787, %v800
        %v802 = vcombine.low %v769, %v785
        %v803 = vcombine.high %v769, %v785
        %v805 = vunpack.c.l.s4 1934713408
        %v806 = vunpack.c.0.s8 %v805
        %v807 = vlaneseq
        %v808 = vshrl.u32 %v807, 7
        %v809 = vsub.s32 %v806, %v808
        %v810 = vrot.slane %v802, %v809
        %v812 = vunpack.c.l.s4 1934713408
        %v813 = vunpack.c.0.s8 %v812
        %v814 = vlaneseq
        %v815 = vshrl.u32 %v814, 7
        %v816 = vsub.s32 %v813, %v815
        %v817 = vrot.slane %v803, %v816
        %v818 = vcombine.high %v794, 0.0
        %v819 = vcombine.high %v801, 0.0
        %v820 = vcombine.high %v810, 0.0
        %v821 = vcombine.high %v817, 0.0
        %v822 = vcombine.low %v794, %v801
        %v824 = vunpack.c.l.s4 1983009808
        %v825 = vunpack.c.0.s8 %v824
        %v826 = vlaneseq
        %v827 = vshrl.u32 %v826, 7
        %v828 = vsub.s32 %v825, %v827
        %v829 = vrot.slane %v822, %v828
        %v830 = vcombine.low %v818, %v819
        %v832 = vunpack.c.l.s4 1983009808
        %v833 = vunpack.c.0.s8 %v832
        %v834 = vlaneseq
        %v835 = vshrl.u32 %v834, 7
        %v836 = vsub.s32 %v833, %v835
        %v837 = vrot.slane %v830, %v836
        %v838 = vcombine.low %v810, %v817
        %v840 = vunpack.c.l.s4 1983009808
        %v841 = vunpack.c.0.s8 %v840
        %v842 = vlaneseq
        %v843 = vshrl.u32 %v842, 7
        %v844 = vsub.s32 %v841, %v843
        %v845 = vrot.slane %v838, %v844
        %v846 = vcombine.low %v820, %v821
        %v848 = vunpack.c.l.s4 1983009808
        %v849 = vunpack.c.0.s8 %v848
        %v850 = vlaneseq
        %v851 = vshrl.u32 %v850, 7
        %v852 = vsub.s32 %v849, %v851
        %v853 = vrot.slane %v846, %v852
        %v854 = vcombine.low %v829, %v837
        %v855 = vcombine.high %v829, %v837
        %v857 = vunpack.c.l.s4 1934713408
        %v858 = vunpack.c.0.s8 %v857
        %v859 = vlaneseq
        %v860 = vshrl.u32 %v859, 7
        %v861 = vsub.s32 %v858, %v860
        %v862 = vrot.slane %v854, %v861
        %v864 = vunpack.c.l.s4 1934713408
        %v865 = vunpack.c.0.s8 %v864
        %v866 = vlaneseq
        %v867 = vshrl.u32 %v866, 7
        %v868 = vsub.s32 %v865, %v867
        %v869 = vrot.slane %v855, %v868
        %v870 = vcombine.low %v845, %v853
        %v871 = vcombine.high %v845, %v853
        %v873 = vunpack.c.l.s4 1934713408
        %v874 = vunpack.c.0.s8 %v873
        %v875 = vlaneseq
        %v876 = vshrl.u32 %v875, 7
        %v877 = vsub.s32 %v874, %v876
        %v878 = vrot.slane %v870, %v877
        %v880 = vunpack.c.l.s4 1934713408
        %v881 = vunpack.c.0.s8 %v880
        %v882 = vlaneseq
        %v883 = vshrl.u32 %v882, 7
        %v884 = vsub.s32 %v881, %v883
        %v885 = vrot.slane %v871, %v884
        %v886 = vcombine.low %v862, %v878
        %v887 = vcombine.high %v862, %v878
        %v888 = vcombine.low %v869, %v885
        %v889 = vcombine.high %v869, %v885
        %v890 = vld [vmem:[#allocation2] sm:$0xff]
        %892 = vrot.lane.b32.xlu0 %v890, 120
        %v893 = vpop.permute.xlu0 %892
        %895 = vrot.lane.b32.xlu0 %v890, 112
        %v896 = vpop.permute.xlu0 %895
        %898 = vrot.lane.b32.xlu0 %v890, 104
        %v899 = vpop.permute.xlu0 %898
        %v901 = vcombine.low %v890, %v896
        %v902 = vcombine.high %v890, %v896
        %v904 = vunpack.c.l.s4 1983009808
        %v905 = vunpack.c.0.s8 %v904
        %v906 = vlaneseq
        %v907 = vshrl.u32 %v906, 7
        %v908 = vsub.s32 %v905, %v907
        %v909 = vrot.slane %v901, %v908
        %v911 = vunpack.c.l.s4 1983009808
        %v912 = vunpack.c.0.s8 %v911
        %v913 = vlaneseq
        %v914 = vshrl.u32 %v913, 7
        %v915 = vsub.s32 %v912, %v914
        %v916 = vrot.slane %v902, %v915
        %v917 = vcombine.low %v893, %v899
        %v918 = vcombine.high %v893, %v899
        %v920 = vunpack.c.l.s4 1983009808
        %v921 = vunpack.c.0.s8 %v920
        %v922 = vlaneseq
        %v923 = vshrl.u32 %v922, 7
        %v924 = vsub.s32 %v921, %v923
        %v925 = vrot.slane %v917, %v924
        %v927 = vunpack.c.l.s4 1983009808
        %v928 = vunpack.c.0.s8 %v927
        %v929 = vlaneseq
        %v930 = vshrl.u32 %v929, 7
        %v931 = vsub.s32 %v928, %v930
        %v932 = vrot.slane %v918, %v931
        %v933 = vcombine.low %v909, %v925
        %v934 = vcombine.high %v909, %v925
        %v936 = vunpack.c.l.s4 1934713408
        %v937 = vunpack.c.0.s8 %v936
        %v938 = vlaneseq
        %v939 = vshrl.u32 %v938, 7
        %v940 = vsub.s32 %v937, %v939
        %v941 = vrot.slane %v933, %v940
        %v943 = vunpack.c.l.s4 1934713408
        %v944 = vunpack.c.0.s8 %v943
        %v945 = vlaneseq
        %v946 = vshrl.u32 %v945, 7
        %v947 = vsub.s32 %v944, %v946
        %v948 = vrot.slane %v934, %v947
        %v949 = vcombine.low %v916, %v932
        %v950 = vcombine.high %v916, %v932
        %v952 = vunpack.c.l.s4 1934713408
        %v953 = vunpack.c.0.s8 %v952
        %v954 = vlaneseq
        %v955 = vshrl.u32 %v954, 7
        %v956 = vsub.s32 %v953, %v955
        %v957 = vrot.slane %v949, %v956
        %v959 = vunpack.c.l.s4 1934713408
        %v960 = vunpack.c.0.s8 %v959
        %v961 = vlaneseq
        %v962 = vshrl.u32 %v961, 7
        %v963 = vsub.s32 %v960, %v962
        %v964 = vrot.slane %v950, %v963
        %v965 = vcombine.high %v941, 0.0
        %v966 = vcombine.high %v948, 0.0
        %v967 = vcombine.high %v957, 0.0
        %v968 = vcombine.high %v964, 0.0
        %v969 = vcombine.low %v941, %v948
        %v971 = vunpack.c.l.s4 1983009808
        %v972 = vunpack.c.0.s8 %v971
        %v973 = vlaneseq
        %v974 = vshrl.u32 %v973, 7
        %v975 = vsub.s32 %v972, %v974
        %v976 = vrot.slane %v969, %v975
        %v977 = vcombine.low %v965, %v966
        %v979 = vunpack.c.l.s4 1983009808
        %v980 = vunpack.c.0.s8 %v979
        %v981 = vlaneseq
        %v982 = vshrl.u32 %v981, 7
        %v983 = vsub.s32 %v980, %v982
        %v984 = vrot.slane %v977, %v983
        %v985 = vcombine.low %v957, %v964
        %v987 = vunpack.c.l.s4 1983009808
        %v988 = vunpack.c.0.s8 %v987
        %v989 = vlaneseq
        %v990 = vshrl.u32 %v989, 7
        %v991 = vsub.s32 %v988, %v990
        %v992 = vrot.slane %v985, %v991
        %v993 = vcombine.low %v967, %v968
        %v995 = vunpack.c.l.s4 1983009808
        %v996 = vunpack.c.0.s8 %v995
        %v997 = vlaneseq
        %v998 = vshrl.u32 %v997, 7
        %v999 = vsub.s32 %v996, %v998
        %v1000 = vrot.slane %v993, %v999
        %v1001 = vcombine.low %v976, %v984
        %v1002 = vcombine.high %v976, %v984
        %v1004 = vunpack.c.l.s4 1934713408
        %v1005 = vunpack.c.0.s8 %v1004
        %v1006 = vlaneseq
        %v1007 = vshrl.u32 %v1006, 7
        %v1008 = vsub.s32 %v1005, %v1007
        %v1009 = vrot.slane %v1001, %v1008
        %v1011 = vunpack.c.l.s4 1934713408
        %v1012 = vunpack.c.0.s8 %v1011
        %v1013 = vlaneseq
        %v1014 = vshrl.u32 %v1013, 7
        %v1015 = vsub.s32 %v1012, %v1014
        %v1016 = vrot.slane %v1002, %v1015
        %v1017 = vcombine.low %v992, %v1000
        %v1018 = vcombine.high %v992, %v1000
        %v1020 = vunpack.c.l.s4 1934713408
        %v1021 = vunpack.c.0.s8 %v1020
        %v1022 = vlaneseq
        %v1023 = vshrl.u32 %v1022, 7
        %v1024 = vsub.s32 %v1021, %v1023
        %v1025 = vrot.slane %v1017, %v1024
        %v1027 = vunpack.c.l.s4 1934713408
        %v1028 = vunpack.c.0.s8 %v1027
        %v1029 = vlaneseq
        %v1030 = vshrl.u32 %v1029, 7
        %v1031 = vsub.s32 %v1028, %v1030
        %v1032 = vrot.slane %v1018, %v1031
        %v1033 = vcombine.low %v1009, %v1025
        %v1034 = vcombine.high %v1009, %v1025
        %v1035 = vcombine.low %v1016, %v1032
        %v1036 = vcombine.high %v1016, %v1032
        %v1037 = vld [vmem:[#allocation3] sm:$0xff]
        %1039 = vrot.lane.b32.xlu0 %v1037, 120
        %v1040 = vpop.permute.xlu0 %1039
        %1042 = vrot.lane.b32.xlu0 %v1037, 112
        %v1043 = vpop.permute.xlu0 %1042
        %1045 = vrot.lane.b32.xlu0 %v1037, 104
        %v1046 = vpop.permute.xlu0 %1045
        %v1048 = vcombine.low %v1037, %v1043
        %v1049 = vcombine.high %v1037, %v1043
        %v1051 = vunpack.c.l.s4 1983009808
        %v1052 = vunpack.c.0.s8 %v1051
        %v1053 = vlaneseq
        %v1054 = vshrl.u32 %v1053, 7
        %v1055 = vsub.s32 %v1052, %v1054
        %v1056 = vrot.slane %v1048, %v1055
        %v1058 = vunpack.c.l.s4 1983009808
        %v1059 = vunpack.c.0.s8 %v1058
        %v1060 = vlaneseq
        %v1061 = vshrl.u32 %v1060, 7
        %v1062 = vsub.s32 %v1059, %v1061
        %v1063 = vrot.slane %v1049, %v1062
        %v1064 = vcombine.low %v1040, %v1046
        %v1065 = vcombine.high %v1040, %v1046
        %v1067 = vunpack.c.l.s4 1983009808
        %v1068 = vunpack.c.0.s8 %v1067
        %v1069 = vlaneseq
        %v1070 = vshrl.u32 %v1069, 7
        %v1071 = vsub.s32 %v1068, %v1070
        %v1072 = vrot.slane %v1064, %v1071
        %v1074 = vunpack.c.l.s4 1983009808
        %v1075 = vunpack.c.0.s8 %v1074
        %v1076 = vlaneseq
        %v1077 = vshrl.u32 %v1076, 7
        %v1078 = vsub.s32 %v1075, %v1077
        %v1079 = vrot.slane %v1065, %v1078
        %v1080 = vcombine.low %v1056, %v1072
        %v1081 = vcombine.high %v1056, %v1072
        %v1083 = vunpack.c.l.s4 1934713408
        %v1084 = vunpack.c.0.s8 %v1083
        %v1085 = vlaneseq
        %v1086 = vshrl.u32 %v1085, 7
        %v1087 = vsub.s32 %v1084, %v1086
        %v1088 = vrot.slane %v1080, %v1087
        %v1090 = vunpack.c.l.s4 1934713408
        %v1091 = vunpack.c.0.s8 %v1090
        %v1092 = vlaneseq
        %v1093 = vshrl.u32 %v1092, 7
        %v1094 = vsub.s32 %v1091, %v1093
        %v1095 = vrot.slane %v1081, %v1094
        %v1096 = vcombine.low %v1063, %v1079
        %v1097 = vcombine.high %v1063, %v1079
        %v1099 = vunpack.c.l.s4 1934713408
        %v1100 = vunpack.c.0.s8 %v1099
        %v1101 = vlaneseq
        %v1102 = vshrl.u32 %v1101, 7
        %v1103 = vsub.s32 %v1100, %v1102
        %v1104 = vrot.slane %v1096, %v1103
        %v1106 = vunpack.c.l.s4 1934713408
        %v1107 = vunpack.c.0.s8 %v1106
        %v1108 = vlaneseq
        %v1109 = vshrl.u32 %v1108, 7
        %v1110 = vsub.s32 %v1107, %v1109
        %v1111 = vrot.slane %v1097, %v1110
        %v1112 = vcombine.high %v1088, 0.0
        %v1113 = vcombine.high %v1095, 0.0
        %v1114 = vcombine.high %v1104, 0.0
        %v1115 = vcombine.high %v1111, 0.0
        %v1116 = vcombine.low %v1088, %v1095
        %v1118 = vunpack.c.l.s4 1983009808
        %v1119 = vunpack.c.0.s8 %v1118
        %v1120 = vlaneseq
        %v1121 = vshrl.u32 %v1120, 7
        %v1122 = vsub.s32 %v1119, %v1121
        %v1123 = vrot.slane %v1116, %v1122
        %v1124 = vcombine.low %v1112, %v1113
        %v1126 = vunpack.c.l.s4 1983009808
        %v1127 = vunpack.c.0.s8 %v1126
        %v1128 = vlaneseq
        %v1129 = vshrl.u32 %v1128, 7
        %v1130 = vsub.s32 %v1127, %v1129
        %v1131 = vrot.slane %v1124, %v1130
        %v1132 = vcombine.low %v1104, %v1111
        %v1134 = vunpack.c.l.s4 1983009808
        %v1135 = vunpack.c.0.s8 %v1134
        %v1136 = vlaneseq
        %v1137 = vshrl.u32 %v1136, 7
        %v1138 = vsub.s32 %v1135, %v1137
        %v1139 = vrot.slane %v1132, %v1138
        %v1140 = vcombine.low %v1114, %v1115
        %v1142 = vunpack.c.l.s4 1983009808
        %v1143 = vunpack.c.0.s8 %v1142
        %v1144 = vlaneseq
        %v1145 = vshrl.u32 %v1144, 7
        %v1146 = vsub.s32 %v1143, %v1145
        %v1147 = vrot.slane %v1140, %v1146
        %v1148 = vcombine.low %v1123, %v1131
        %v1149 = vcombine.high %v1123, %v1131
        %v1151 = vunpack.c.l.s4 1934713408
        %v1152 = vunpack.c.0.s8 %v1151
        %v1153 = vlaneseq
        %v1154 = vshrl.u32 %v1153, 7
        %v1155 = vsub.s32 %v1152, %v1154
        %v1156 = vrot.slane %v1148, %v1155
        %v1158 = vunpack.c.l.s4 1934713408
        %v1159 = vunpack.c.0.s8 %v1158
        %v1160 = vlaneseq
        %v1161 = vshrl.u32 %v1160, 7
        %v1162 = vsub.s32 %v1159, %v1161
        %v1163 = vrot.slane %v1149, %v1162
        %v1164 = vcombine.low %v1139, %v1147
        %v1165 = vcombine.high %v1139, %v1147
        %v1167 = vunpack.c.l.s4 1934713408
        %v1168 = vunpack.c.0.s8 %v1167
        %v1169 = vlaneseq
        %v1170 = vshrl.u32 %v1169, 7
        %v1171 = vsub.s32 %v1168, %v1170
        %v1172 = vrot.slane %v1164, %v1171
        %v1174 = vunpack.c.l.s4 1934713408
        %v1175 = vunpack.c.0.s8 %v1174
        %v1176 = vlaneseq
        %v1177 = vshrl.u32 %v1176, 7
        %v1178 = vsub.s32 %v1175, %v1177
        %v1179 = vrot.slane %v1165, %v1178
        %v1180 = vcombine.low %v1156, %v1172
        %v1181 = vcombine.high %v1156, %v1172
        %v1182 = vcombine.low %v1163, %v1179
        %v1183 = vcombine.high %v1163, %v1179
        %vm1184 = vcmask 64512
        %v1186 = vsel %vm1184, %v886, 0
        %v1189 = vsel %vm1184, %v1033, 0
        %1191 = vmatprep.subr.mxu0 0.0
        %1192 = vmatpush1.xpose.msra.mxu0 0.0
        %1193 = vmatprep.subr.mxu0 0.0
        %1194 = vmatpush1.xpose.msra.mxu0 0.0
        %1195 = vmatprep.subr.mxu0 0.0
        %1196 = vmatpush1.xpose.msra.mxu0 0.0
        %1197 = vmatprep.subr.mxu0 0.0
        %1198 = vmatpush1.xpose.msra.mxu0 0.0
        %1199 = vmatprep.subr.mxu0 0.0
        %1200 = vmatpush1.xpose.msra.mxu0 0.0
        %1201 = vmatprep.subr.mxu0 0.0
        %1202 = vmatpush1.xpose.msra.mxu0 0.0
        %1203 = vmatprep.subr.mxu0 0.0
        %1204 = vmatpush1.xpose.msra.mxu0 0.0
        %1205 = vmatprep.subr.mxu0 0.0
        %1206 = vmatpush1.xpose.msra.mxu0 0.0
        %1207 = vmatprep.subr.mxu0 0.0
        %1208 = vmatpush1.xpose.msra.mxu0 0.0
        %1209 = vmatprep.subr.mxu0 0.0
        %1210 = vmatpush1.xpose.msra.mxu0 0.0
        %1211 = vmatprep.subr.mxu0 0.0
        %1212 = vmatpush1.xpose.msra.mxu0 0.0
        %1213 = vmatprep.subr.mxu0 0.0
        %1214 = vmatpush1.xpose.msra.mxu0 0.0
        %1215 = vmatprep.subr.mxu0 0.0
        %1216 = vmatpush1.xpose.msra.mxu0 0.0
        %1217 = vmatprep.subr.mxu0 0.0
        %1218 = vmatpush1.xpose.msra.mxu0 0.0
        %1219 = vmatprep.subr.mxu0 0.0
        %1220 = vmatpush1.xpose.msra.mxu0 0.0
        %1221 = vmatprep.subr.mxu0 0.0
        %1222 = vmatpush1.xpose.msra.mxu0 %v1189
        %1223 = vmatprep.subr.mxu0 0.0
        %1224 = vmatpush2.xpose.msra.mxu0 0.0
        %1225 = vmatprep.subr.mxu0 0.0
        %1226 = vmatpush2.xpose.msra.mxu0 0.0
        %1227 = vmatprep.subr.mxu0 0.0
        %1228 = vmatpush2.xpose.msra.mxu0 0.0
        %1229 = vmatprep.subr.mxu0 0.0
        %1230 = vmatpush2.xpose.msra.mxu0 0.0
        %1231 = vmatprep.subr.mxu0 0.0
        %1232 = vmatpush2.xpose.msra.mxu0 0.0
        %1233 = vmatprep.subr.mxu0 0.0
        %1234 = vmatpush2.xpose.msra.mxu0 0.0
        %1235 = vmatprep.subr.mxu0 0.0
        %1236 = vmatpush2.xpose.msra.mxu0 0.0
        %1237 = vmatprep.subr.mxu0 0.0
        %1238 = vmatpush2.xpose.msra.mxu0 0.0
        %1239 = vmatprep.subr.mxu0 0.0
        %1240 = vmatpush2.xpose.msra.mxu0 0.0
        %1241 = vmatprep.subr.mxu0 0.0
        %1242 = vmatpush2.xpose.msra.mxu0 0.0
        %1243 = vmatprep.subr.mxu0 0.0
        %1244 = vmatpush2.xpose.msra.mxu0 0.0
        %1245 = vmatprep.subr.mxu0 0.0
        %1246 = vmatpush2.xpose.msra.mxu0 0.0
        %1247 = vmatprep.subr.mxu0 0.0
        %1248 = vmatpush2.xpose.msra.mxu0 0.0
        %1249 = vmatprep.subr.mxu0 0.0
        %1250 = vmatpush2.xpose.msra.mxu0 0.0
        %1251 = vmatprep.subr.mxu0 0.0
        %1252 = vmatpush2.xpose.msra.mxu0 0.0
        %1253 = vmatprep.subr.mxu0 0.0
        %1254 = vmatpush2.xpose.msra.mxu0 0.0
        %1255 = vmatprep.mubr.f32.mxu0 0.0
        %1256 = vmatmul.mubr.f32.gmra.mxu0 %v1186
        %v1257 = vpop.f32.mrf.mxu0
        %v1258 = vadd.f32 0.0, %v1257
        %v1259 = vpop.f32.mrf.mxu0
        %1260 = vdwg.mxu0
        %v1262 = vsel %vm1184, %v887, 0
        %v1265 = vsel %vm1184, %v1034, 0
        %1267 = vmatprep.subr.mxu0 0.0
        %1268 = vmatpush1.xpose.msra.mxu0 0.0
        %1269 = vmatprep.subr.mxu0 0.0
        %1270 = vmatpush1.xpose.msra.mxu0 0.0
        %1271 = vmatprep.subr.mxu0 0.0
        %1272 = vmatpush1.xpose.msra.mxu0 0.0
        %1273 = vmatprep.subr.mxu0 0.0
        %1274 = vmatpush1.xpose.msra.mxu0 0.0
        %1275 = vmatprep.subr.mxu0 0.0
        %1276 = vmatpush1.xpose.msra.mxu0 0.0
        %1277 = vmatprep.subr.mxu0 0.0
        %1278 = vmatpush1.xpose.msra.mxu0 0.0
        %1279 = vmatprep.subr.mxu0 0.0
        %1280 = vmatpush1.xpose.msra.mxu0 0.0
        %1281 = vmatprep.subr.mxu0 0.0
        %1282 = vmatpush1.xpose.msra.mxu0 0.0
        %1283 = vmatprep.subr.mxu0 0.0
        %1284 = vmatpush1.xpose.msra.mxu0 0.0
        %1285 = vmatprep.subr.mxu0 0.0
        %1286 = vmatpush1.xpose.msra.mxu0 0.0
        %1287 = vmatprep.subr.mxu0 0.0
        %1288 = vmatpush1.xpose.msra.mxu0 0.0
        %1289 = vmatprep.subr.mxu0 0.0
        %1290 = vmatpush1.xpose.msra.mxu0 0.0
        %1291 = vmatprep.subr.mxu0 0.0
        %1292 = vmatpush1.xpose.msra.mxu0 0.0
        %1293 = vmatprep.subr.mxu0 0.0
        %1294 = vmatpush1.xpose.msra.mxu0 0.0
        %1295 = vmatprep.subr.mxu0 0.0
        %1296 = vmatpush1.xpose.msra.mxu0 0.0
        %1297 = vmatprep.subr.mxu0 0.0
        %1298 = vmatpush1.xpose.msra.mxu0 %v1265
        %1299 = vmatprep.subr.mxu0 0.0
        %1300 = vmatpush2.xpose.msra.mxu0 0.0
        %1301 = vmatprep.subr.mxu0 0.0
        %1302 = vmatpush2.xpose.msra.mxu0 0.0
        %1303 = vmatprep.subr.mxu0 0.0
        %1304 = vmatpush2.xpose.msra.mxu0 0.0
        %1305 = vmatprep.subr.mxu0 0.0
        %1306 = vmatpush2.xpose.msra.mxu0 0.0
        %1307 = vmatprep.subr.mxu0 0.0
        %1308 = vmatpush2.xpose.msra.mxu0 0.0
        %1309 = vmatprep.subr.mxu0 0.0
        %1310 = vmatpush2.xpose.msra.mxu0 0.0
        %1311 = vmatprep.subr.mxu0 0.0
        %1312 = vmatpush2.xpose.msra.mxu0 0.0
        %1313 = vmatprep.subr.mxu0 0.0
        %1314 = vmatpush2.xpose.msra.mxu0 0.0
        %1315 = vmatprep.subr.mxu0 0.0
        %1316 = vmatpush2.xpose.msra.mxu0 0.0
        %1317 = vmatprep.subr.mxu0 0.0
        %1318 = vmatpush2.xpose.msra.mxu0 0.0
        %1319 = vmatprep.subr.mxu0 0.0
        %1320 = vmatpush2.xpose.msra.mxu0 0.0
        %1321 = vmatprep.subr.mxu0 0.0
        %1322 = vmatpush2.xpose.msra.mxu0 0.0
        %1323 = vmatprep.subr.mxu0 0.0
        %1324 = vmatpush2.xpose.msra.mxu0 0.0
        %1325 = vmatprep.subr.mxu0 0.0
        %1326 = vmatpush2.xpose.msra.mxu0 0.0
        %1327 = vmatprep.subr.mxu0 0.0
        %1328 = vmatpush2.xpose.msra.mxu0 0.0
        %1329 = vmatprep.subr.mxu0 0.0
        %1330 = vmatpush2.xpose.msra.mxu0 0.0
        %1331 = vmatprep.mubr.f32.mxu0 0.0
        %1332 = vmatmul.mubr.f32.gmra.mxu0 %v1262
        %v1333 = vpop.f32.mrf.mxu0
        %v1334 = vadd.f32 0.0, %v1333
        %v1335 = vpop.f32.mrf.mxu0
        %1336 = vdwg.mxu0
        %v1338 = vsel %vm1184, %v888, 0
        %v1341 = vsel %vm1184, %v1035, 0
        %1343 = vmatprep.subr.mxu0 0.0
        %1344 = vmatpush1.xpose.msra.mxu0 0.0
        %1345 = vmatprep.subr.mxu0 0.0
        %1346 = vmatpush1.xpose.msra.mxu0 0.0
        %1347 = vmatprep.subr.mxu0 0.0
        %1348 = vmatpush1.xpose.msra.mxu0 0.0
        %1349 = vmatprep.subr.mxu0 0.0
        %1350 = vmatpush1.xpose.msra.mxu0 0.0
        %1351 = vmatprep.subr.mxu0 0.0
        %1352 = vmatpush1.xpose.msra.mxu0 0.0
        %1353 = vmatprep.subr.mxu0 0.0
        %1354 = vmatpush1.xpose.msra.mxu0 0.0
        %1355 = vmatprep.subr.mxu0 0.0
        %1356 = vmatpush1.xpose.msra.mxu0 0.0
        %1357 = vmatprep.subr.mxu0 0.0
        %1358 = vmatpush1.xpose.msra.mxu0 0.0
        %1359 = vmatprep.subr.mxu0 0.0
        %1360 = vmatpush1.xpose.msra.mxu0 0.0
        %1361 = vmatprep.subr.mxu0 0.0
        %1362 = vmatpush1.xpose.msra.mxu0 0.0
        %1363 = vmatprep.subr.mxu0 0.0
        %1364 = vmatpush1.xpose.msra.mxu0 0.0
        %1365 = vmatprep.subr.mxu0 0.0
        %1366 = vmatpush1.xpose.msra.mxu0 0.0
        %1367 = vmatprep.subr.mxu0 0.0
        %1368 = vmatpush1.xpose.msra.mxu0 0.0
        %1369 = vmatprep.subr.mxu0 0.0
        %1370 = vmatpush1.xpose.msra.mxu0 0.0
        %1371 = vmatprep.subr.mxu0 0.0
        %1372 = vmatpush1.xpose.msra.mxu0 0.0
        %1373 = vmatprep.subr.mxu0 0.0
        %1374 = vmatpush1.xpose.msra.mxu0 %v1341
        %1375 = vmatprep.subr.mxu0 0.0
        %1376 = vmatpush2.xpose.msra.mxu0 0.0
        %1377 = vmatprep.subr.mxu0 0.0
        %1378 = vmatpush2.xpose.msra.mxu0 0.0
        %1379 = vmatprep.subr.mxu0 0.0
        %1380 = vmatpush2.xpose.msra.mxu0 0.0
        %1381 = vmatprep.subr.mxu0 0.0
        %1382 = vmatpush2.xpose.msra.mxu0 0.0
        %1383 = vmatprep.subr.mxu0 0.0
        %1384 = vmatpush2.xpose.msra.mxu0 0.0
        %1385 = vmatprep.subr.mxu0 0.0
        %1386 = vmatpush2.xpose.msra.mxu0 0.0
        %1387 = vmatprep.subr.mxu0 0.0
        %1388 = vmatpush2.xpose.msra.mxu0 0.0
        %1389 = vmatprep.subr.mxu0 0.0
        %1390 = vmatpush2.xpose.msra.mxu0 0.0
        %1391 = vmatprep.subr.mxu0 0.0
        %1392 = vmatpush2.xpose.msra.mxu0 0.0
        %1393 = vmatprep.subr.mxu0 0.0
        %1394 = vmatpush2.xpose.msra.mxu0 0.0
        %1395 = vmatprep.subr.mxu0 0.0
        %1396 = vmatpush2.xpose.msra.mxu0 0.0
        %1397 = vmatprep.subr.mxu0 0.0
        %1398 = vmatpush2.xpose.msra.mxu0 0.0
        %1399 = vmatprep.subr.mxu0 0.0
        %1400 = vmatpush2.xpose.msra.mxu0 0.0
        %1401 = vmatprep.subr.mxu0 0.0
        %1402 = vmatpush2.xpose.msra.mxu0 0.0
        %1403 = vmatprep.subr.mxu0 0.0
        %1404 = vmatpush2.xpose.msra.mxu0 0.0
        %1405 = vmatprep.subr.mxu0 0.0
        %1406 = vmatpush2.xpose.msra.mxu0 0.0
        %1407 = vmatprep.mubr.f32.mxu0 0.0
        %1408 = vmatmul.mubr.f32.gmra.mxu0 %v1338
        %v1409 = vpop.f32.mrf.mxu0
        %v1410 = vadd.f32 0.0, %v1409
        %v1411 = vpop.f32.mrf.mxu0
        %1412 = vdwg.mxu0
        %v1414 = vsel %vm1184, %v889, 0
        %v1417 = vsel %vm1184, %v1036, 0
        %1419 = vmatprep.subr.mxu0 0.0
        %1420 = vmatpush1.xpose.msra.mxu0 0.0
        %1421 = vmatprep.subr.mxu0 0.0
        %1422 = vmatpush1.xpose.msra.mxu0 0.0
        %1423 = vmatprep.subr.mxu0 0.0
        %1424 = vmatpush1.xpose.msra.mxu0 0.0
        %1425 = vmatprep.subr.mxu0 0.0
        %1426 = vmatpush1.xpose.msra.mxu0 0.0
        %1427 = vmatprep.subr.mxu0 0.0
        %1428 = vmatpush1.xpose.msra.mxu0 0.0
        %1429 = vmatprep.subr.mxu0 0.0
        %1430 = vmatpush1.xpose.msra.mxu0 0.0
        %1431 = vmatprep.subr.mxu0 0.0
        %1432 = vmatpush1.xpose.msra.mxu0 0.0
        %1433 = vmatprep.subr.mxu0 0.0
        %1434 = vmatpush1.xpose.msra.mxu0 0.0
        %1435 = vmatprep.subr.mxu0 0.0
        %1436 = vmatpush1.xpose.msra.mxu0 0.0
        %1437 = vmatprep.subr.mxu0 0.0
        %1438 = vmatpush1.xpose.msra.mxu0 0.0
        %1439 = vmatprep.subr.mxu0 0.0
        %1440 = vmatpush1.xpose.msra.mxu0 0.0
        %1441 = vmatprep.subr.mxu0 0.0
        %1442 = vmatpush1.xpose.msra.mxu0 0.0
        %1443 = vmatprep.subr.mxu0 0.0
        %1444 = vmatpush1.xpose.msra.mxu0 0.0
        %1445 = vmatprep.subr.mxu0 0.0
        %1446 = vmatpush1.xpose.msra.mxu0 0.0
        %1447 = vmatprep.subr.mxu0 0.0
        %1448 = vmatpush1.xpose.msra.mxu0 0.0
        %1449 = vmatprep.subr.mxu0 0.0
        %1450 = vmatpush1.xpose.msra.mxu0 %v1417
        %1451 = vmatprep.subr.mxu0 0.0
        %1452 = vmatpush2.xpose.msra.mxu0 0.0
        %1453 = vmatprep.subr.mxu0 0.0
        %1454 = vmatpush2.xpose.msra.mxu0 0.0
        %1455 = vmatprep.subr.mxu0 0.0
        %1456 = vmatpush2.xpose.msra.mxu0 0.0
        %1457 = vmatprep.subr.mxu0 0.0
        %1458 = vmatpush2.xpose.msra.mxu0 0.0
        %1459 = vmatprep.subr.mxu0 0.0
        %1460 = vmatpush2.xpose.msra.mxu0 0.0
        %1461 = vmatprep.subr.mxu0 0.0
        %1462 = vmatpush2.xpose.msra.mxu0 0.0
        %1463 = vmatprep.subr.mxu0 0.0
        %1464 = vmatpush2.xpose.msra.mxu0 0.0
        %1465 = vmatprep.subr.mxu0 0.0
        %1466 = vmatpush2.xpose.msra.mxu0 0.0
        %1467 = vmatprep.subr.mxu0 0.0
        %1468 = vmatpush2.xpose.msra.mxu0 0.0
        %1469 = vmatprep.subr.mxu0 0.0
        %1470 = vmatpush2.xpose.msra.mxu0 0.0
        %1471 = vmatprep.subr.mxu0 0.0
        %1472 = vmatpush2.xpose.msra.mxu0 0.0
        %1473 = vmatprep.subr.mxu0 0.0
        %1474 = vmatpush2.xpose.msra.mxu0 0.0
        %1475 = vmatprep.subr.mxu0 0.0
        %1476 = vmatpush2.xpose.msra.mxu0 0.0
        %1477 = vmatprep.subr.mxu0 0.0
        %1478 = vmatpush2.xpose.msra.mxu0 0.0
        %1479 = vmatprep.subr.mxu0 0.0
        %1480 = vmatpush2.xpose.msra.mxu0 0.0
        %1481 = vmatprep.subr.mxu0 0.0
        %1482 = vmatpush2.xpose.msra.mxu0 0.0
        %1483 = vmatprep.mubr.f32.mxu0 0.0
        %1484 = vmatmul.mubr.f32.gmra.mxu0 %v1414
        %v1485 = vpop.f32.mrf.mxu0
        %v1486 = vadd.f32 0.0, %v1485
        %v1487 = vpop.f32.mrf.mxu0
        %1488 = vdwg.mxu0
        %v1489 = vsel %vm1184, %v1258, -inf
        %1490 = vmax.xlane.f32.xlu0 %v1489
        %v1491 = vpop.xlane.xlu0 %1490
        %v1492 = vsel %vm1184, %v1334, -inf
        %1493 = vmax.xlane.f32.xlu0 %v1492
        %v1494 = vpop.xlane.xlu0 %1493
        %v1495 = vsel %vm1184, %v1410, -inf
        %1496 = vmax.xlane.f32.xlu0 %v1495
        %v1497 = vpop.xlane.xlu0 %1496
        %v1498 = vsel %vm1184, %v1486, -inf
        %1499 = vmax.xlane.f32.xlu0 %v1498
        %v1500 = vpop.xlane.xlu0 %1499
        %v1501 = vsub.f32 %v1258, %v1491
        %v1502 = vsub.f32 %v1334, %v1494
        %v1503 = vsub.f32 %v1410, %v1497
        %v1504 = vsub.f32 %v1486, %v1500
        %v1505 = vmul.f32 %v1501, 1.442695
        %v1506 = vpow.pop %v1505
        %v1507 = vmul.f32 %v1502, 1.442695
        %v1508 = vpow.pop %v1507
        %v1509 = vmul.f32 %v1503, 1.442695
        %v1510 = vpow.pop %v1509
        %v1511 = vmul.f32 %v1504, 1.442695
        %v1512 = vpow.pop %v1511
        %v1513 = vsel %vm1184, %v1506, 0.0
        %1514 = vadd.xlane.f32.xlu0 %v1513
        %v1515 = vpop.xlane.xlu0 %1514
        %v1516 = vsel %vm1184, %v1508, 0.0
        %1517 = vadd.xlane.f32.xlu0 %v1516
        %v1518 = vpop.xlane.xlu0 %1517
        %v1519 = vsel %vm1184, %v1510, 0.0
        %1520 = vadd.xlane.f32.xlu0 %v1519
        %v1521 = vpop.xlane.xlu0 %1520
        %v1522 = vsel %vm1184, %v1512, 0.0
        %1523 = vadd.xlane.f32.xlu0 %v1522
        %v1524 = vpop.xlane.xlu0 %1523
        %v1526 = vsel %vm1184, %v1506, 0
        %1528 = vmatprep.subr.mxu0 0.0
        %1529 = vmatpush1.msra.mxu0 0.0
        %1530 = vmatprep.subr.mxu0 0.0
        %1531 = vmatpush1.msra.mxu0 0.0
        %1532 = vmatprep.subr.mxu0 0.0
        %1533 = vmatpush1.msra.mxu0 0.0
        %1534 = vmatprep.subr.mxu0 0.0
        %1535 = vmatpush1.msra.mxu0 0.0
        %1536 = vmatprep.subr.mxu0 0.0
        %1537 = vmatpush1.msra.mxu0 0.0
        %1538 = vmatprep.subr.mxu0 0.0
        %1539 = vmatpush1.msra.mxu0 0.0
        %1540 = vmatprep.subr.mxu0 0.0
        %1541 = vmatpush1.msra.mxu0 0.0
        %1542 = vmatprep.subr.mxu0 0.0
        %1543 = vmatpush1.msra.mxu0 0.0
        %1544 = vmatprep.subr.mxu0 0.0
        %1545 = vmatpush1.msra.mxu0 0.0
        %1546 = vmatprep.subr.mxu0 0.0
        %1547 = vmatpush1.msra.mxu0 0.0
        %1548 = vmatprep.subr.mxu0 0.0
        %1549 = vmatpush1.msra.mxu0 0.0
        %1550 = vmatprep.subr.mxu0 0.0
        %1551 = vmatpush1.msra.mxu0 0.0
        %1552 = vmatprep.subr.mxu0 0.0
        %1553 = vmatpush1.msra.mxu0 0.0
        %1554 = vmatprep.subr.mxu0 0.0
        %1555 = vmatpush1.msra.mxu0 0.0
        %1556 = vmatprep.subr.mxu0 0.0
        %1557 = vmatpush1.msra.mxu0 0.0
        %1558 = vmatprep.subr.mxu0 0.0
        %1559 = vmatpush1.msra.mxu0 %v1180
        %1560 = vmatprep.subr.mxu0 0.0
        %1561 = vmatpush2.msra.mxu0 0.0
        %1562 = vmatprep.subr.mxu0 0.0
        %1563 = vmatpush2.msra.mxu0 0.0
        %1564 = vmatprep.subr.mxu0 0.0
        %1565 = vmatpush2.msra.mxu0 0.0
        %1566 = vmatprep.subr.mxu0 0.0
        %1567 = vmatpush2.msra.mxu0 0.0
        %1568 = vmatprep.subr.mxu0 0.0
        %1569 = vmatpush2.msra.mxu0 0.0
        %1570 = vmatprep.subr.mxu0 0.0
        %1571 = vmatpush2.msra.mxu0 0.0
        %1572 = vmatprep.subr.mxu0 0.0
        %1573 = vmatpush2.msra.mxu0 0.0
        %1574 = vmatprep.subr.mxu0 0.0
        %1575 = vmatpush2.msra.mxu0 0.0
        %1576 = vmatprep.subr.mxu0 0.0
        %1577 = vmatpush2.msra.mxu0 0.0
        %1578 = vmatprep.subr.mxu0 0.0
        %1579 = vmatpush2.msra.mxu0 0.0
        %1580 = vmatprep.subr.mxu0 0.0
        %1581 = vmatpush2.msra.mxu0 0.0
        %1582 = vmatprep.subr.mxu0 0.0
        %1583 = vmatpush2.msra.mxu0 0.0
        %1584 = vmatprep.subr.mxu0 0.0
        %1585 = vmatpush2.msra.mxu0 0.0
        %1586 = vmatprep.subr.mxu0 0.0
        %1587 = vmatpush2.msra.mxu0 0.0
        %1588 = vmatprep.subr.mxu0 0.0
        %1589 = vmatpush2.msra.mxu0 0.0
        %1590 = vmatprep.subr.mxu0 0.0
        %1591 = vmatpush2.msra.mxu0 0.0
        %1592 = vmatprep.mubr.f32.mxu0 0.0
        %1593 = vmatmul.mubr.f32.gmra.mxu0 %v1526
        %v1594 = vpop.f32.mrf.mxu0
        %v1595 = vadd.f32 0.0, %v1594
        %v1596 = vpop.f32.mrf.mxu0
        %1597 = vdwg.mxu0
        %v1599 = vsel %vm1184, %v1508, 0
        %1601 = vmatprep.subr.mxu0 0.0
        %1602 = vmatpush1.msra.mxu0 0.0
        %1603 = vmatprep.subr.mxu0 0.0
        %1604 = vmatpush1.msra.mxu0 0.0
        %1605 = vmatprep.subr.mxu0 0.0
        %1606 = vmatpush1.msra.mxu0 0.0
        %1607 = vmatprep.subr.mxu0 0.0
        %1608 = vmatpush1.msra.mxu0 0.0
        %1609 = vmatprep.subr.mxu0 0.0
        %1610 = vmatpush1.msra.mxu0 0.0
        %1611 = vmatprep.subr.mxu0 0.0
        %1612 = vmatpush1.msra.mxu0 0.0
        %1613 = vmatprep.subr.mxu0 0.0
        %1614 = vmatpush1.msra.mxu0 0.0
        %1615 = vmatprep.subr.mxu0 0.0
        %1616 = vmatpush1.msra.mxu0 0.0
        %1617 = vmatprep.subr.mxu0 0.0
        %1618 = vmatpush1.msra.mxu0 0.0
        %1619 = vmatprep.subr.mxu0 0.0
        %1620 = vmatpush1.msra.mxu0 0.0
        %1621 = vmatprep.subr.mxu0 0.0
        %1622 = vmatpush1.msra.mxu0 0.0
        %1623 = vmatprep.subr.mxu0 0.0
        %1624 = vmatpush1.msra.mxu0 0.0
        %1625 = vmatprep.subr.mxu0 0.0
        %1626 = vmatpush1.msra.mxu0 0.0
        %1627 = vmatprep.subr.mxu0 0.0
        %1628 = vmatpush1.msra.mxu0 0.0
        %1629 = vmatprep.subr.mxu0 0.0
        %1630 = vmatpush1.msra.mxu0 0.0
        %1631 = vmatprep.subr.mxu0 0.0
        %1632 = vmatpush1.msra.mxu0 %v1181
        %1633 = vmatprep.subr.mxu0 0.0
        %1634 = vmatpush2.msra.mxu0 0.0
        %1635 = vmatprep.subr.mxu0 0.0
        %1636 = vmatpush2.msra.mxu0 0.0
        %1637 = vmatprep.subr.mxu0 0.0
        %1638 = vmatpush2.msra.mxu0 0.0
        %1639 = vmatprep.subr.mxu0 0.0
        %1640 = vmatpush2.msra.mxu0 0.0
        %1641 = vmatprep.subr.mxu0 0.0
        %1642 = vmatpush2.msra.mxu0 0.0
        %1643 = vmatprep.subr.mxu0 0.0
        %1644 = vmatpush2.msra.mxu0 0.0
        %1645 = vmatprep.subr.mxu0 0.0
        %1646 = vmatpush2.msra.mxu0 0.0
        %1647 = vmatprep.subr.mxu0 0.0
        %1648 = vmatpush2.msra.mxu0 0.0
        %1649 = vmatprep.subr.mxu0 0.0
        %1650 = vmatpush2.msra.mxu0 0.0
        %1651 = vmatprep.subr.mxu0 0.0
        %1652 = vmatpush2.msra.mxu0 0.0
        %1653 = vmatprep.subr.mxu0 0.0
        %1654 = vmatpush2.msra.mxu0 0.0
        %1655 = vmatprep.subr.mxu0 0.0
        %1656 = vmatpush2.msra.mxu0 0.0
        %1657 = vmatprep.subr.mxu0 0.0
        %1658 = vmatpush2.msra.mxu0 0.0
        %1659 = vmatprep.subr.mxu0 0.0
        %1660 = vmatpush2.msra.mxu0 0.0
        %1661 = vmatprep.subr.mxu0 0.0
        %1662 = vmatpush2.msra.mxu0 0.0
        %1663 = vmatprep.subr.mxu0 0.0
        %1664 = vmatpush2.msra.mxu0 0.0
        %1665 = vmatprep.mubr.f32.mxu0 0.0
        %1666 = vmatmul.mubr.f32.gmra.mxu0 %v1599
        %v1667 = vpop.f32.mrf.mxu0
        %v1668 = vadd.f32 0.0, %v1667
        %v1669 = vpop.f32.mrf.mxu0
        %1670 = vdwg.mxu0
        %v1672 = vsel %vm1184, %v1510, 0
        %1674 = vmatprep.subr.mxu0 0.0
        %1675 = vmatpush1.msra.mxu0 0.0
        %1676 = vmatprep.subr.mxu0 0.0
        %1677 = vmatpush1.msra.mxu0 0.0
        %1678 = vmatprep.subr.mxu0 0.0
        %1679 = vmatpush1.msra.mxu0 0.0
        %1680 = vmatprep.subr.mxu0 0.0
        %1681 = vmatpush1.msra.mxu0 0.0
        %1682 = vmatprep.subr.mxu0 0.0
        %1683 = vmatpush1.msra.mxu0 0.0
        %1684 = vmatprep.subr.mxu0 0.0
        %1685 = vmatpush1.msra.mxu0 0.0
        %1686 = vmatprep.subr.mxu0 0.0
        %1687 = vmatpush1.msra.mxu0 0.0
        %1688 = vmatprep.subr.mxu0 0.0
        %1689 = vmatpush1.msra.mxu0 0.0
        %1690 = vmatprep.subr.mxu0 0.0
        %1691 = vmatpush1.msra.mxu0 0.0
        %1692 = vmatprep.subr.mxu0 0.0
        %1693 = vmatpush1.msra.mxu0 0.0
        %1694 = vmatprep.subr.mxu0 0.0
        %1695 = vmatpush1.msra.mxu0 0.0
        %1696 = vmatprep.subr.mxu0 0.0
        %1697 = vmatpush1.msra.mxu0 0.0
        %1698 = vmatprep.subr.mxu0 0.0
        %1699 = vmatpush1.msra.mxu0 0.0
        %1700 = vmatprep.subr.mxu0 0.0
        %1701 = vmatpush1.msra.mxu0 0.0
        %1702 = vmatprep.subr.mxu0 0.0
        %1703 = vmatpush1.msra.mxu0 0.0
        %1704 = vmatprep.subr.mxu0 0.0
        %1705 = vmatpush1.msra.mxu0 %v1182
        %1706 = vmatprep.subr.mxu0 0.0
        %1707 = vmatpush2.msra.mxu0 0.0
        %1708 = vmatprep.subr.mxu0 0.0
        %1709 = vmatpush2.msra.mxu0 0.0
        %1710 = vmatprep.subr.mxu0 0.0
        %1711 = vmatpush2.msra.mxu0 0.0
        %1712 = vmatprep.subr.mxu0 0.0
        %1713 = vmatpush2.msra.mxu0 0.0
        %1714 = vmatprep.subr.mxu0 0.0
        %1715 = vmatpush2.msra.mxu0 0.0
        %1716 = vmatprep.subr.mxu0 0.0
        %1717 = vmatpush2.msra.mxu0 0.0
        %1718 = vmatprep.subr.mxu0 0.0
        %1719 = vmatpush2.msra.mxu0 0.0
        %1720 = vmatprep.subr.mxu0 0.0
        %1721 = vmatpush2.msra.mxu0 0.0
        %1722 = vmatprep.subr.mxu0 0.0
        %1723 = vmatpush2.msra.mxu0 0.0
        %1724 = vmatprep.subr.mxu0 0.0
        %1725 = vmatpush2.msra.mxu0 0.0
        %1726 = vmatprep.subr.mxu0 0.0
        %1727 = vmatpush2.msra.mxu0 0.0
        %1728 = vmatprep.subr.mxu0 0.0
        %1729 = vmatpush2.msra.mxu0 0.0
        %1730 = vmatprep.subr.mxu0 0.0
        %1731 = vmatpush2.msra.mxu0 0.0
        %1732 = vmatprep.subr.mxu0 0.0
        %1733 = vmatpush2.msra.mxu0 0.0
        %1734 = vmatprep.subr.mxu0 0.0
        %1735 = vmatpush2.msra.mxu0 0.0
        %1736 = vmatprep.subr.mxu0 0.0
        %1737 = vmatpush2.msra.mxu0 0.0
        %1738 = vmatprep.mubr.f32.mxu0 0.0
        %1739 = vmatmul.mubr.f32.gmra.mxu0 %v1672
        %v1740 = vpop.f32.mrf.mxu0
        %v1741 = vadd.f32 0.0, %v1740
        %v1742 = vpop.f32.mrf.mxu0
        %1743 = vdwg.mxu0
        %v1745 = vsel %vm1184, %v1512, 0
        %1747 = vmatprep.subr.mxu0 0.0
        %1748 = vmatpush1.msra.mxu0 0.0
        %1749 = vmatprep.subr.mxu0 0.0
        %1750 = vmatpush1.msra.mxu0 0.0
        %1751 = vmatprep.subr.mxu0 0.0
        %1752 = vmatpush1.msra.mxu0 0.0
        %1753 = vmatprep.subr.mxu0 0.0
        %1754 = vmatpush1.msra.mxu0 0.0
        %1755 = vmatprep.subr.mxu0 0.0
        %1756 = vmatpush1.msra.mxu0 0.0
        %1757 = vmatprep.subr.mxu0 0.0
        %1758 = vmatpush1.msra.mxu0 0.0
        %1759 = vmatprep.subr.mxu0 0.0
        %1760 = vmatpush1.msra.mxu0 0.0
        %1761 = vmatprep.subr.mxu0 0.0
        %1762 = vmatpush1.msra.mxu0 0.0
        %1763 = vmatprep.subr.mxu0 0.0
        %1764 = vmatpush1.msra.mxu0 0.0
        %1765 = vmatprep.subr.mxu0 0.0
        %1766 = vmatpush1.msra.mxu0 0.0
        %1767 = vmatprep.subr.mxu0 0.0
        %1768 = vmatpush1.msra.mxu0 0.0
        %1769 = vmatprep.subr.mxu0 0.0
        %1770 = vmatpush1.msra.mxu0 0.0
        %1771 = vmatprep.subr.mxu0 0.0
        %1772 = vmatpush1.msra.mxu0 0.0
        %1773 = vmatprep.subr.mxu0 0.0
        %1774 = vmatpush1.msra.mxu0 0.0
        %1775 = vmatprep.subr.mxu0 0.0
        %1776 = vmatpush1.msra.mxu0 0.0
        %1777 = vmatprep.subr.mxu0 0.0
        %1778 = vmatpush1.msra.mxu0 %v1183
        %1779 = vmatprep.subr.mxu0 0.0
        %1780 = vmatpush2.msra.mxu0 0.0
        %1781 = vmatprep.subr.mxu0 0.0
        %1782 = vmatpush2.msra.mxu0 0.0
        %1783 = vmatprep.subr.mxu0 0.0
        %1784 = vmatpush2.msra.mxu0 0.0
        %1785 = vmatprep.subr.mxu0 0.0
        %1786 = vmatpush2.msra.mxu0 0.0
        %1787 = vmatprep.subr.mxu0 0.0
        %1788 = vmatpush2.msra.mxu0 0.0
        %1789 = vmatprep.subr.mxu0 0.0
        %1790 = vmatpush2.msra.mxu0 0.0
        %1791 = vmatprep.subr.mxu0 0.0
        %1792 = vmatpush2.msra.mxu0 0.0
        %1793 = vmatprep.subr.mxu0 0.0
        %1794 = vmatpush2.msra.mxu0 0.0
        %1795 = vmatprep.subr.mxu0 0.0
        %1796 = vmatpush2.msra.mxu0 0.0
        %1797 = vmatprep.subr.mxu0 0.0
        %1798 = vmatpush2.msra.mxu0 0.0
        %1799 = vmatprep.subr.mxu0 0.0
        %1800 = vmatpush2.msra.mxu0 0.0
        %1801 = vmatprep.subr.mxu0 0.0
        %1802 = vmatpush2.msra.mxu0 0.0
        %1803 = vmatprep.subr.mxu0 0.0
        %1804 = vmatpush2.msra.mxu0 0.0
        %1805 = vmatprep.subr.mxu0 0.0
        %1806 = vmatpush2.msra.mxu0 0.0
        %1807 = vmatprep.subr.mxu0 0.0
        %1808 = vmatpush2.msra.mxu0 0.0
        %1809 = vmatprep.subr.mxu0 0.0
        %1810 = vmatpush2.msra.mxu0 0.0
        %1811 = vmatprep.mubr.f32.mxu0 0.0
        %1812 = vmatmul.mubr.f32.gmra.mxu0 %v1745
        %v1813 = vpop.f32.mrf.mxu0
        %v1814 = vadd.f32 0.0, %v1813
        %v1815 = vpop.f32.mrf.mxu0
        %1816 = vdwg.mxu0
        %v1817 = vrcp.pop %v1515
        %v1818 = vrcp.pop %v1518
        %v1819 = vrcp.pop %v1521
        %v1820 = vrcp.pop %v1524
        %v1821 = vmul.f32 %v1595, %v1817
        %v1822 = vmul.f32 %v1668, %v1818
        %v1823 = vmul.f32 %v1741, %v1819
        %v1824 = vmul.f32 %v1814, %v1820
        %v1825 = vld [vmem:[#allocation13] sm:$0xff]
        %v1826 = vld [vmem:[#allocation13 + $0x8] sm:$0xff]
        %v1828 = vsel %vm1184, %v1822, 0
        %1830 = vmatprep.subr.mxu0 0.0
        %1831 = vmatpush1.msra.mxu0 0.0
        %1832 = vmatprep.subr.mxu0 0.0
        %1833 = vmatpush1.msra.mxu0 0.0
        %1834 = vmatprep.subr.mxu0 0.0
        %1835 = vmatpush1.msra.mxu0 0.0
        %1836 = vmatprep.subr.mxu0 0.0
        %1837 = vmatpush1.msra.mxu0 0.0
        %1838 = vmatprep.subr.mxu0 0.0
        %1839 = vmatpush1.msra.mxu0 0.0
        %1840 = vmatprep.subr.mxu0 0.0
        %1841 = vmatpush1.msra.mxu0 0.0
        %1842 = vmatprep.subr.mxu0 0.0
        %1843 = vmatpush1.msra.mxu0 0.0
        %1844 = vmatprep.subr.mxu0 0.0
        %1845 = vmatpush1.msra.mxu0 0.0
        %1846 = vmatprep.subr.mxu0 0.0
        %1847 = vmatpush1.msra.mxu0 0.0
        %1848 = vmatprep.subr.mxu0 0.0
        %1849 = vmatpush1.msra.mxu0 0.0
        %1850 = vmatprep.subr.mxu0 0.0
        %1851 = vmatpush1.msra.mxu0 0.0
        %1852 = vmatprep.subr.mxu0 0.0
        %1853 = vmatpush1.msra.mxu0 0.0
        %1854 = vmatprep.subr.mxu0 0.0
        %1855 = vmatpush1.msra.mxu0 0.0
        %1856 = vmatprep.subr.mxu0 0.0
        %1857 = vmatpush1.msra.mxu0 0.0
        %1858 = vmatprep.subr.mxu0 0.0
        %1859 = vmatpush1.msra.mxu0 0.0
        %1860 = vmatprep.subr.mxu0 0.0
        %1861 = vmatpush1.msra.mxu0 %v1826
        %1862 = vmatprep.subr.mxu0 0.0
        %1863 = vmatpush2.msra.mxu0 0.0
        %1864 = vmatprep.subr.mxu0 0.0
        %1865 = vmatpush2.msra.mxu0 0.0
        %1866 = vmatprep.subr.mxu0 0.0
        %1867 = vmatpush2.msra.mxu0 0.0
        %1868 = vmatprep.subr.mxu0 0.0
        %1869 = vmatpush2.msra.mxu0 0.0
        %1870 = vmatprep.subr.mxu0 0.0
        %1871 = vmatpush2.msra.mxu0 0.0
        %1872 = vmatprep.subr.mxu0 0.0
        %1873 = vmatpush2.msra.mxu0 0.0
        %1874 = vmatprep.subr.mxu0 0.0
        %1875 = vmatpush2.msra.mxu0 0.0
        %1876 = vmatprep.subr.mxu0 0.0
        %1877 = vmatpush2.msra.mxu0 0.0
        %1878 = vmatprep.subr.mxu0 0.0
        %1879 = vmatpush2.msra.mxu0 0.0
        %1880 = vmatprep.subr.mxu0 0.0
        %1881 = vmatpush2.msra.mxu0 0.0
        %1882 = vmatprep.subr.mxu0 0.0
        %1883 = vmatpush2.msra.mxu0 0.0
        %1884 = vmatprep.subr.mxu0 0.0
        %1885 = vmatpush2.msra.mxu0 0.0
        %1886 = vmatprep.subr.mxu0 0.0
        %1887 = vmatpush2.msra.mxu0 0.0
        %1888 = vmatprep.subr.mxu0 0.0
        %1889 = vmatpush2.msra.mxu0 0.0
        %1890 = vmatprep.subr.mxu0 0.0
        %1891 = vmatpush2.msra.mxu0 0.0
        %1892 = vmatprep.subr.mxu0 0.0
        %1893 = vmatpush2.msra.mxu0 0.0
        %1894 = vmatprep.mubr.f32.mxu0 0.0
        %1895 = vmatmul.mubr.f32.gmra.mxu0 %v1828
        %v1896 = vpop.f32.mrf.mxu0
        %v1897 = vadd.f32 0.0, %v1896
        %v1898 = vpop.f32.mrf.mxu0
        %1899 = vdwg.mxu0
        %v1901 = vsel %vm1184, %v1821, 0
        %1903 = vmatprep.subr.mxu0 0.0
        %1904 = vmatpush1.msra.mxu0 0.0
        %1905 = vmatprep.subr.mxu0 0.0
        %1906 = vmatpush1.msra.mxu0 0.0
        %1907 = vmatprep.subr.mxu0 0.0
        %1908 = vmatpush1.msra.mxu0 0.0
        %1909 = vmatprep.subr.mxu0 0.0
        %1910 = vmatpush1.msra.mxu0 0.0
        %1911 = vmatprep.subr.mxu0 0.0
        %1912 = vmatpush1.msra.mxu0 0.0
        %1913 = vmatprep.subr.mxu0 0.0
        %1914 = vmatpush1.msra.mxu0 0.0
        %1915 = vmatprep.subr.mxu0 0.0
        %1916 = vmatpush1.msra.mxu0 0.0
        %1917 = vmatprep.subr.mxu0 0.0
        %1918 = vmatpush1.msra.mxu0 0.0
        %1919 = vmatprep.subr.mxu0 0.0
        %1920 = vmatpush1.msra.mxu0 0.0
        %1921 = vmatprep.subr.mxu0 0.0
        %1922 = vmatpush1.msra.mxu0 0.0
        %1923 = vmatprep.subr.mxu0 0.0
        %1924 = vmatpush1.msra.mxu0 0.0
        %1925 = vmatprep.subr.mxu0 0.0
        %1926 = vmatpush1.msra.mxu0 0.0
        %1927 = vmatprep.subr.mxu0 0.0
        %1928 = vmatpush1.msra.mxu0 0.0
        %1929 = vmatprep.subr.mxu0 0.0
        %1930 = vmatpush1.msra.mxu0 0.0
        %1931 = vmatprep.subr.mxu0 0.0
        %1932 = vmatpush1.msra.mxu0 0.0
        %1933 = vmatprep.subr.mxu0 0.0
        %1934 = vmatpush1.msra.mxu0 %v1825
        %1935 = vmatprep.subr.mxu0 0.0
        %1936 = vmatpush2.msra.mxu0 0.0
        %1937 = vmatprep.subr.mxu0 0.0
        %1938 = vmatpush2.msra.mxu0 0.0
        %1939 = vmatprep.subr.mxu0 0.0
        %1940 = vmatpush2.msra.mxu0 0.0
        %1941 = vmatprep.subr.mxu0 0.0
        %1942 = vmatpush2.msra.mxu0 0.0
        %1943 = vmatprep.subr.mxu0 0.0
        %1944 = vmatpush2.msra.mxu0 0.0
        %1945 = vmatprep.subr.mxu0 0.0
        %1946 = vmatpush2.msra.mxu0 0.0
        %1947 = vmatprep.subr.mxu0 0.0
        %1948 = vmatpush2.msra.mxu0 0.0
        %1949 = vmatprep.subr.mxu0 0.0
        %1950 = vmatpush2.msra.mxu0 0.0
        %1951 = vmatprep.subr.mxu0 0.0
        %1952 = vmatpush2.msra.mxu0 0.0
        %1953 = vmatprep.subr.mxu0 0.0
        %1954 = vmatpush2.msra.mxu0 0.0
        %1955 = vmatprep.subr.mxu0 0.0
        %1956 = vmatpush2.msra.mxu0 0.0
        %1957 = vmatprep.subr.mxu0 0.0
        %1958 = vmatpush2.msra.mxu0 0.0
        %1959 = vmatprep.subr.mxu0 0.0
        %1960 = vmatpush2.msra.mxu0 0.0
        %1961 = vmatprep.subr.mxu0 0.0
        %1962 = vmatpush2.msra.mxu0 0.0
        %1963 = vmatprep.subr.mxu0 0.0
        %1964 = vmatpush2.msra.mxu0 0.0
        %1965 = vmatprep.subr.mxu0 0.0
        %1966 = vmatpush2.msra.mxu0 0.0
        %1967 = vmatprep.mubr.f32.mxu0 0.0
        %1968 = vmatmul.mubr.f32.gmra.mxu0 %v1901
        %v1969 = vpop.f32.mrf.mxu0
        %v1970 = vadd.f32 %v1897, %v1969
        %v1971 = vpop.f32.mrf.mxu0
        %1972 = vdwg.mxu0
        %v1973 = vld [vmem:[#allocation13 + $0x10] sm:$0xff]
        %v1975 = vsel %vm1184, %v1823, 0
        %1977 = vmatprep.subr.mxu0 0.0
        %1978 = vmatpush1.msra.mxu0 0.0
        %1979 = vmatprep.subr.mxu0 0.0
        %1980 = vmatpush1.msra.mxu0 0.0
        %1981 = vmatprep.subr.mxu0 0.0
        %1982 = vmatpush1.msra.mxu0 0.0
        %1983 = vmatprep.subr.mxu0 0.0
        %1984 = vmatpush1.msra.mxu0 0.0
        %1985 = vmatprep.subr.mxu0 0.0
        %1986 = vmatpush1.msra.mxu0 0.0
        %1987 = vmatprep.subr.mxu0 0.0
        %1988 = vmatpush1.msra.mxu0 0.0
        %1989 = vmatprep.subr.mxu0 0.0
        %1990 = vmatpush1.msra.mxu0 0.0
        %1991 = vmatprep.subr.mxu0 0.0
        %1992 = vmatpush1.msra.mxu0 0.0
        %1993 = vmatprep.subr.mxu0 0.0
        %1994 = vmatpush1.msra.mxu0 0.0
        %1995 = vmatprep.subr.mxu0 0.0
        %1996 = vmatpush1.msra.mxu0 0.0
        %1997 = vmatprep.subr.mxu0 0.0
        %1998 = vmatpush1.msra.mxu0 0.0
        %1999 = vmatprep.subr.mxu0 0.0
        %2000 = vmatpush1.msra.mxu0 0.0
        %2001 = vmatprep.subr.mxu0 0.0
        %2002 = vmatpush1.msra.mxu0 0.0
        %2003 = vmatprep.subr.mxu0 0.0
        %2004 = vmatpush1.msra.mxu0 0.0
        %2005 = vmatprep.subr.mxu0 0.0
        %2006 = vmatpush1.msra.mxu0 0.0
        %2007 = vmatprep.subr.mxu0 0.0
        %2008 = vmatpush1.msra.mxu0 %v1973
        %2009 = vmatprep.subr.mxu0 0.0
        %2010 = vmatpush2.msra.mxu0 0.0
        %2011 = vmatprep.subr.mxu0 0.0
        %2012 = vmatpush2.msra.mxu0 0.0
        %2013 = vmatprep.subr.mxu0 0.0
        %2014 = vmatpush2.msra.mxu0 0.0
        %2015 = vmatprep.subr.mxu0 0.0
        %2016 = vmatpush2.msra.mxu0 0.0
        %2017 = vmatprep.subr.mxu0 0.0
        %2018 = vmatpush2.msra.mxu0 0.0
        %2019 = vmatprep.subr.mxu0 0.0
        %2020 = vmatpush2.msra.mxu0 0.0
        %2021 = vmatprep.subr.mxu0 0.0
        %2022 = vmatpush2.msra.mxu0 0.0
        %2023 = vmatprep.subr.mxu0 0.0
        %2024 = vmatpush2.msra.mxu0 0.0
        %2025 = vmatprep.subr.mxu0 0.0
        %2026 = vmatpush2.msra.mxu0 0.0
        %2027 = vmatprep.subr.mxu0 0.0
        %2028 = vmatpush2.msra.mxu0 0.0
        %2029 = vmatprep.subr.mxu0 0.0
        %2030 = vmatpush2.msra.mxu0 0.0
        %2031 = vmatprep.subr.mxu0 0.0
        %2032 = vmatpush2.msra.mxu0 0.0
        %2033 = vmatprep.subr.mxu0 0.0
        %2034 = vmatpush2.msra.mxu0 0.0
        %2035 = vmatprep.subr.mxu0 0.0
        %2036 = vmatpush2.msra.mxu0 0.0
        %2037 = vmatprep.subr.mxu0 0.0
        %2038 = vmatpush2.msra.mxu0 0.0
        %2039 = vmatprep.subr.mxu0 0.0
        %2040 = vmatpush2.msra.mxu0 0.0
        %2041 = vmatprep.mubr.f32.mxu0 0.0
        %2042 = vmatmul.mubr.f32.gmra.mxu0 %v1975
        %v2043 = vpop.f32.mrf.mxu0
        %v2044 = vadd.f32 0.0, %v2043
        %v2045 = vpop.f32.mrf.mxu0
        %2046 = vdwg.mxu0
        %v2047 = vadd.f32 %v1970, %v2044
        %v2048 = vld [vmem:[#allocation13 + $0x18] sm:$0xff]
        %v2050 = vsel %vm1184, %v1824, 0
        %2052 = vmatprep.subr.mxu0 0.0
        %2053 = vmatpush1.msra.mxu0 0.0
        %2054 = vmatprep.subr.mxu0 0.0
        %2055 = vmatpush1.msra.mxu0 0.0
        %2056 = vmatprep.subr.mxu0 0.0
        %2057 = vmatpush1.msra.mxu0 0.0
        %2058 = vmatprep.subr.mxu0 0.0
        %2059 = vmatpush1.msra.mxu0 0.0
        %2060 = vmatprep.subr.mxu0 0.0
        %2061 = vmatpush1.msra.mxu0 0.0
        %2062 = vmatprep.subr.mxu0 0.0
        %2063 = vmatpush1.msra.mxu0 0.0
        %2064 = vmatprep.subr.mxu0 0.0
        %2065 = vmatpush1.msra.mxu0 0.0
        %2066 = vmatprep.subr.mxu0 0.0
        %2067 = vmatpush1.msra.mxu0 0.0
        %2068 = vmatprep.subr.mxu0 0.0
        %2069 = vmatpush1.msra.mxu0 0.0
        %2070 = vmatprep.subr.mxu0 0.0
        %2071 = vmatpush1.msra.mxu0 0.0
        %2072 = vmatprep.subr.mxu0 0.0
        %2073 = vmatpush1.msra.mxu0 0.0
        %2074 = vmatprep.subr.mxu0 0.0
        %2075 = vmatpush1.msra.mxu0 0.0
        %2076 = vmatprep.subr.mxu0 0.0
        %2077 = vmatpush1.msra.mxu0 0.0
        %2078 = vmatprep.subr.mxu0 0.0
        %2079 = vmatpush1.msra.mxu0 0.0
        %2080 = vmatprep.subr.mxu0 0.0
        %2081 = vmatpush1.msra.mxu0 0.0
        %2082 = vmatprep.subr.mxu0 0.0
        %2083 = vmatpush1.msra.mxu0 %v2048
        %2084 = vmatprep.subr.mxu0 0.0
        %2085 = vmatpush2.msra.mxu0 0.0
        %2086 = vmatprep.subr.mxu0 0.0
        %2087 = vmatpush2.msra.mxu0 0.0
        %2088 = vmatprep.subr.mxu0 0.0
        %2089 = vmatpush2.msra.mxu0 0.0
        %2090 = vmatprep.subr.mxu0 0.0
        %2091 = vmatpush2.msra.mxu0 0.0
        %2092 = vmatprep.subr.mxu0 0.0
        %2093 = vmatpush2.msra.mxu0 0.0
        %2094 = vmatprep.subr.mxu0 0.0
        %2095 = vmatpush2.msra.mxu0 0.0
        %2096 = vmatprep.subr.mxu0 0.0
        %2097 = vmatpush2.msra.mxu0 0.0
        %2098 = vmatprep.subr.mxu0 0.0
        %2099 = vmatpush2.msra.mxu0 0.0
        %2100 = vmatprep.subr.mxu0 0.0
        %2101 = vmatpush2.msra.mxu0 0.0
        %2102 = vmatprep.subr.mxu0 0.0
        %2103 = vmatpush2.msra.mxu0 0.0
        %2104 = vmatprep.subr.mxu0 0.0
        %2105 = vmatpush2.msra.mxu0 0.0
        %2106 = vmatprep.subr.mxu0 0.0
        %2107 = vmatpush2.msra.mxu0 0.0
        %2108 = vmatprep.subr.mxu0 0.0
        %2109 = vmatpush2.msra.mxu0 0.0
        %2110 = vmatprep.subr.mxu0 0.0
        %2111 = vmatpush2.msra.mxu0 0.0
        %2112 = vmatprep.subr.mxu0 0.0
        %2113 = vmatpush2.msra.mxu0 0.0
        %2114 = vmatprep.subr.mxu0 0.0
        %2115 = vmatpush2.msra.mxu0 0.0
        %2116 = vmatprep.mubr.f32.mxu0 0.0
        %2117 = vmatmul.mubr.f32.gmra.mxu0 %v2050
        %v2118 = vpop.f32.mrf.mxu0
        %v2119 = vadd.f32 0.0, %v2118
        %v2120 = vpop.f32.mrf.mxu0
        %2121 = vdwg.mxu0
        %v2122 = vadd.f32 %v2047, %v2119
        %v2123 = vld [vmem:[%s9] sm:$0x1]
        %v2125 = vlaneseq
        %v2126 = vshrl.u32 %v2125, 7
        %v2127 = vsub.s32 0, %v2126
        %v2128 = vrot.slane %v2123, %v2127
        %v2130 = vadd.f32 %v2122, %v2128
        %2131 = vst.msk [vmem:[%s481] sm:$0xff] %vm669, %v2130
        %s2132 = sand.u32 %s285, 1
        %s2133 = scalar_lea.sflag [#allocation6], %s2132
        %s2134 = sand.u32 %s285, 1
        %s2135 = smul.addr %s2134, 8
        %s2136 = scalar_lea.vmem [#allocation15], %s2135
        // Predicated region
        $region89: #{tpu_custom_call.1} parent=59 // pred_check
          %p2137 = pneg %p295
        $region90: #{tpu_custom_call.1} parent=59 // pred_check_branch
          %2139 = sbr.rel (%p2137) target = $region92
        $region91: #{tpu_custom_call.1} parent=59 // pred_region
          %s2140 = sadd.s32 %s36, %s37
          %s2142 = ssub.s32 128, 128
          %2143 = vsyncadd %s2133, %s2142
          %s2144 = sadd.s32 %s2140, %s35
          %s2145 = smul.addr %s2144, 128
          %s2146 = scalar_lea.hbm %s10, %s2145
          %s2148 = sshll.u32 %s2136, 4
          %s2149 = int_to_ptr.vmem [resolvable:$true] %s2148
          %2151 = dma.vmem_to_hbm [thread:$0]  %s2149, 128, %s2146, %s2133
        $region92: #{tpu_custom_call.1} parent=59 // pred_fallthru
          _
      $region60: #{tpu_custom_call.1} parent=5 // pred_fallthru
        _
      %p2152 = scmp.le.s32.totalorder 2, %s25
      // Predicated region
      $region93: #{tpu_custom_call.1} parent=5 // pred_check
        %p2153 = pneg %p2152
      $region94: #{tpu_custom_call.1} parent=5 // pred_check_branch
        %2155 = sbr.rel (%p2153) target = $region96
      $region95: #{tpu_custom_call.1} parent=5 // pred_region
        %s2156 = ssub.s32 %s25, 2
        // Predicated region
        $region97: #{tpu_custom_call.1} parent=95 // pred_check
          %p2157 = pneg %p301
        $region98: #{tpu_custom_call.1} parent=95 // pred_check_branch
          %2159 = sbr.rel (%p2157) target = $region100
        $region99: #{tpu_custom_call.1} parent=95 // pred_region
          %s2160 = sand.u32 %s286, 1
          %s2161 = scalar_lea.sflag [#allocation6], %s2160
          %s2162 = sand.u32 %s286, 1
          %s2163 = smul.addr %s2162, 8
          %s2164 = scalar_lea.vmem [#allocation15], %s2163
          %2165 = dma.done %s2161, 128
        $region100: #{tpu_custom_call.1} parent=95 // pred_fallthru
          _
      $region96: #{tpu_custom_call.1} parent=5 // pred_fallthru
        _
    $region6: #{tpu_custom_call.1} parent=1 // loop_footer
      %s29 = sadd.s32 1, %s25
    $region7: #{tpu_custom_call.1} parent=1 // loop_footer_branch
      %24 = sbr.rel target = $region3
    $region8: #{tpu_custom_call.1} parent=1 // loop_exit
      _
    %2166 = vsyncpa [#allocation5], 1
    %s2167 = scalar_lea.sflag [#allocation5], 1
    %2168 = vsyncpa %s2167, 1
    %2169 = vsyncpa [#allocation8], 1
    %2170 = vsyncpa [#allocation11], 1
    %2171 = vsyncpa [#allocation14], 1
    %2172 = vsyncpa [#allocation6], 1
    %s2173 = scalar_lea.sflag [#allocation6], 1
    %2174 = vsyncpa %s2173, 1

// kernel: tpu_custom_call.1
$region0: #{tpu_custom_call.1}
  #allocation0 [shape = 'u32[]', space=smem, size = 0x4, offset = 0x4, fixed_abs, tag = 'smem constant byte address 0x4 - core index']
  #allocation1 [shape = 'u32[144,128]{1,0:T(1,128)}', space=vmem, size = 0x12000, scoped, tag = 'internal scratch']
  #allocation2 [shape = 'f32[8,32]{1,0:T(8,128)}', space=vmem, size = 0x1000, scoped, tag = 'scratch operand']
  #allocation3 [shape = 'f32[8,32]{1,0:T(8,128)}', space=vmem, size = 0x1000, scoped, tag = 'scratch operand']
  %s0 = inlined_call_operand.hbm [shape: f32[2,8,32], index: 0, kind: input, shape index: {}]
  %s1 = inlined_call_operand.hbm [shape: f32[2,8,32], index: 1, kind: input, shape index: {}]
  %s2 = inlined_call_operand.hbm [shape: f32[32,32], index: 2, kind: input, shape index: {}]
  %s3 = inlined_call_operand.vmem [shape: f32[1,32], index: 3, kind: input, shape index: {}]
  %s4 = inlined_call_operand.hbm [shape: f32[32,32], index: 4, kind: input, shape index: {}]
  %s5 = inlined_call_operand.vmem [shape: f32[1,32], index: 5, kind: input, shape index: {}]
  %s6 = inlined_call_operand.hbm [shape: f32[32,32], index: 6, kind: input, shape index: {}]
  %s7 = inlined_call_operand.vmem [shape: f32[1,32], index: 7, kind: input, shape index: {}]
  %s8 = inlined_call_operand.hbm [shape: f32[32,32], index: 8, kind: input, shape index: {}]
  %s9 = inlined_call_operand.vmem [shape: f32[1,32], index: 9, kind: input, shape index: {}]
  %s10 = inlined_call_operand.hbm [shape: f32[2,8,32], index: 10, kind: output, shape index: {}]
  %s11 = sld [smem:[#allocation0]]
  $region101: #{tpu_custom_call.1} parent=0
    _
  %s13 = ssub.s32 1, %s11
  %s14 = scalar_select 0, %s13, %s11
  $region1: #{tpu_custom_call.1} parent=0
    #allocation4 [shape = 'u8[8192]{0}', space=vmem, size = 0x2000, scoped, tag = 'input window, operand 0']
    #allocation5 [shape = 's32[2]{0}', space=sflag, size = 0x8, scoped, tag = 'scoped memory for tpu_custom_call.1']
    #allocation6 [shape = 's32[2]{0}', space=sflag, size = 0x8, scoped, tag = 'scoped memory for tpu_custom_call.1']
    #allocation7 [shape = 'u8[8192]{0}', space=vmem, size = 0x2000, scoped, tag = 'input window, operand 1']
    #allocation8 [shape = 's32[2]{0}', space=sflag, size = 0x8, scoped, tag = 'scoped memory for tpu_custom_call.1']
    #allocation9 [shape = 'u8[16384]{0}', space=vmem, size = 0x4000, scoped, tag = 'input window, operand 2, single buffered']
    #allocation10 [shape = 'u8[16384]{0}', space=vmem, size = 0x4000, scoped, tag = 'input window, operand 4, single buffered']
    #allocation11 [shape = 's32[1]{0}', space=sflag, size = 0x4, scoped, tag = 'scoped memory for tpu_custom_call.1']
    #allocation12 [shape = 'u8[16384]{0}', space=vmem, size = 0x4000, scoped, tag = 'input window, operand 6, single buffered']
    #allocation13 [shape = 'u8[16384]{0}', space=vmem, size = 0x4000, scoped, tag = 'input window, operand 8, single buffered']
    #allocation14 [shape = 's32[1]{0}', space=sflag, size = 0x4, scoped, tag = 'scoped memory for tpu_custom_call.1']
    #allocation15 [shape = 'u8[8192]{0}', space=vmem, size = 0x2000, scoped, tag = 'output window, operand 0']
    %15 = vsyncpa [#allocation5], 0
    %s16 = scalar_lea.sflag [#allocation5], 1
    %17 = vsyncpa %s16, 0
    %18 = vsyncpa [#allocation8], 0
    %s19 = scalar_lea.sflag [#allocation8], 1
    %20 = vsyncpa %s19, 0
    %21 = vsyncpa [#allocation11], 0
    %22 = vsyncpa [#allocation14], 0
    %23 = vsyncpa [#allocation6], 0
    %s24 = scalar_lea.sflag [#allocation6], 1
    %25 = vsyncpa %s24, 0
    loop: start=0, step=1, limit=4
    $region2: #{tpu_custom_call.1} parent=1 // loop_pre_header
      _
    $region3: #{tpu_custom_call.1} parent=1 // loop_header
      %s27 = sphi 0, %s31
      %p28 = scmp.ge.s32.totalorder %s27, 4
      %s34 = sphi 0, %s53
      %s35 = sphi 0, %s49
      %s36 = sphi 0, %s45
      %s37 = sphi 0, %s34
      %s38 = sphi 0, %s35
      %s39 = sphi 0, %s36
      %s40 = sphi 0, %s37
      %s41 = sphi 0, %s38
      %s42 = sphi 0, %s39
      %s60 = sphi 0, %s62
      %s63 = sphi 0, %s60
      %s64 = sphi 0, %s63
      %s80 = sphi 0, %s64
      %s86 = sphi 0, %s88
      %s89 = sphi 0, %s86
      %s90 = sphi 0, %s89
      %s106 = sphi 0, %s90
      %s110 = sphi 0, %s110
      %s112 = sphi 0, %s110
      %s113 = sphi 0, %s112
      %s127 = sphi 0, %s113
      %s131 = sphi 0, %s131
      %s133 = sphi 0, %s131
      %s134 = sphi 0, %s133
      %s148 = sphi 0, %s134
      %s152 = sphi 0, %s152
      %s154 = sphi 0, %s152
      %s155 = sphi 0, %s154
      %s169 = sphi 0, %s155
      %s173 = sphi 0, %s173
      %s175 = sphi 0, %s173
      %s176 = sphi 0, %s175
      %s190 = sphi 0, %s176
      %s194 = sphi 0, %s194
      %s196 = sphi 0, %s194
      %s197 = sphi 0, %s196
      %s211 = sphi 0, %s197
      %s215 = sphi 0, %s215
      %s217 = sphi 0, %s215
      %s218 = sphi 0, %s217
      %s232 = sphi 0, %s218
      %s236 = sphi 0, %s236
      %s238 = sphi 0, %s236
      %s239 = sphi 0, %s238
      %s253 = sphi 0, %s239
      %s257 = sphi 0, %s257
      %s259 = sphi 0, %s257
      %s260 = sphi 0, %s259
      %s274 = sphi 0, %s260
      %s284 = sphi 0, %s286
      %s287 = sphi 0, %s284
      %s288 = sphi 0, %s287
      %s304 = sphi 0, %s288
    $region4: #{tpu_custom_call.1} parent=1 // loop_header_branch
      %30 = sbr.rel (%p28) target = $region8
    $region5: #{tpu_custom_call.1} parent=1 // loop_body
      %s32 = ssub.s32 %s27, 1
      %s33 = ssub.s32 %s27, 2
      %s43 = sadd.s32 1, %s36
      %p44 = scmp.ge.s32.totalorder %s43, 1
      %s45 = scalar_select %p44, 0, %s43
      %s46 = sadd.s32 1, %s35
      %s47 = scalar_select %p44, %s46, %s35
      %p48 = scmp.ge.s32.totalorder %s47, 1
      %s49 = scalar_select %p48, 0, %s47
      %s50 = sadd.s32 1, %s34
      %s51 = scalar_select %p48, %s50, %s34
      %p52 = scmp.ge.s32.totalorder %s51, 2
      %s53 = scalar_select %p52, 0, %s51
      %s54 = sadd.s32 %s35, %s36
      %s55 = sadd.s32 %s49, %s45
      %s56 = ssub.s32 %s34, %s53
      %s57 = ssub.s32 %s54, %s55
      %s58 = sor.u32 %s56, %s57
      %p59 = scmp.eq.s32.totalorder %s58, 0
      %s61 = sadd.s32 %s60, 1
      %s62 = scalar_select %p59, %s60, %s61
      %p65 = pneg %p59
      %p66 = scmp.eq.s32.totalorder %s27, 1
      %p67 = por %p65, %p66
      %p68 = scmp.ne.s32.totalorder %s60, %s63
      %p69 = scmp.eq.s32.totalorder %s27, 0
      %p70 = por %p68, %p69
      %p71 = scmp.ne.s32.totalorder %s60, %s63
      %p72 = scmp.eq.s32.totalorder %s32, 1
      %p73 = por %p71, %p72
      %p74 = scmp.ne.s32.totalorder %s63, %s64
      %p75 = scmp.eq.s32.totalorder %s32, 0
      %p76 = por %p74, %p75
      %p77 = scmp.ne.s32.totalorder %s63, %s64
      %p78 = scmp.eq.s32.totalorder %s33, 1
      %p79 = por %p77, %p78
      %p81 = scmp.ne.s32.totalorder %s64, %s80
      %p82 = scmp.eq.s32.totalorder %s33, 0
      %p83 = por %p81, %p82
      %s84 = ssub.s32 %s34, %s53
      %p85 = scmp.eq.s32.totalorder %s84, 0
      %s87 = sadd.s32 %s86, 1
      %s88 = scalar_select %p85, %s86, %s87
      %p91 = pneg %p85
      %p92 = scmp.eq.s32.totalorder %s27, 1
      %p93 = por %p91, %p92
      %p94 = scmp.ne.s32.totalorder %s86, %s89
      %p95 = scmp.eq.s32.totalorder %s27, 0
      %p96 = por %p94, %p95
      %p97 = scmp.ne.s32.totalorder %s86, %s89
      %p98 = scmp.eq.s32.totalorder %s32, 1
      %p99 = por %p97, %p98
      %p100 = scmp.ne.s32.totalorder %s89, %s90
      %p101 = scmp.eq.s32.totalorder %s32, 0
      %p102 = por %p100, %p101
      %p103 = scmp.ne.s32.totalorder %s89, %s90
      %p104 = scmp.eq.s32.totalorder %s33, 1
      %p105 = por %p103, %p104
      %p107 = scmp.ne.s32.totalorder %s90, %s106
      %p108 = scmp.eq.s32.totalorder %s33, 0
      %p109 = por %p107, %p108
      %s111 = sadd.s32 %s110, 1
      %p114 = scmp.eq.s32.totalorder %s27, 1
      %p115 = scmp.ne.s32.totalorder %s110, %s112
      %p116 = scmp.eq.s32.totalorder %s27, 0
      %p117 = por %p115, %p116
      %p118 = scmp.ne.s32.totalorder %s110, %s112
      %p119 = scmp.eq.s32.totalorder %s32, 1
      %p120 = por %p118, %p119
      %p121 = scmp.ne.s32.totalorder %s112, %s113
      %p122 = scmp.eq.s32.totalorder %s32, 0
      %p123 = por %p121, %p122
      %p124 = scmp.ne.s32.totalorder %s112, %s113
      %p125 = scmp.eq.s32.totalorder %s33, 1
      %p126 = por %p124, %p125
      %p128 = scmp.ne.s32.totalorder %s113, %s127
      %p129 = scmp.eq.s32.totalorder %s33, 0
      %p130 = por %p128, %p129
      %s132 = sadd.s32 %s131, 1
      %p135 = scmp.eq.s32.totalorder %s27, 1
      %p136 = scmp.ne.s32.totalorder %s131, %s133
      %p137 = scmp.eq.s32.totalorder %s27, 0
      %p138 = por %p136, %p137
      %p139 = scmp.ne.s32.totalorder %s131, %s133
      %p140 = scmp.eq.s32.totalorder %s32, 1
      %p141 = por %p139, %p140
      %p142 = scmp.ne.s32.totalorder %s133, %s134
      %p143 = scmp.eq.s32.totalorder %s32, 0
      %p144 = por %p142, %p143
      %p145 = scmp.ne.s32.totalorder %s133, %s134
      %p146 = scmp.eq.s32.totalorder %s33, 1
      %p147 = por %p145, %p146
      %p149 = scmp.ne.s32.totalorder %s134, %s148
      %p150 = scmp.eq.s32.totalorder %s33, 0
      %p151 = por %p149, %p150
      %s153 = sadd.s32 %s152, 1
      %p156 = scmp.eq.s32.totalorder %s27, 1
      %p157 = scmp.ne.s32.totalorder %s152, %s154
      %p158 = scmp.eq.s32.totalorder %s27, 0
      %p159 = por %p157, %p158
      %p160 = scmp.ne.s32.totalorder %s152, %s154
      %p161 = scmp.eq.s32.totalorder %s32, 1
      %p162 = por %p160, %p161
      %p163 = scmp.ne.s32.totalorder %s154, %s155
      %p164 = scmp.eq.s32.totalorder %s32, 0
      %p165 = por %p163, %p164
      %p166 = scmp.ne.s32.totalorder %s154, %s155
      %p167 = scmp.eq.s32.totalorder %s33, 1
      %p168 = por %p166, %p167
      %p170 = scmp.ne.s32.totalorder %s155, %s169
      %p171 = scmp.eq.s32.totalorder %s33, 0
      %p172 = por %p170, %p171
      %s174 = sadd.s32 %s173, 1
      %p177 = scmp.eq.s32.totalorder %s27, 1
      %p178 = scmp.ne.s32.totalorder %s173, %s175
      %p179 = scmp.eq.s32.totalorder %s27, 0
      %p180 = por %p178, %p179
      %p181 = scmp.ne.s32.totalorder %s173, %s175
      %p182 = scmp.eq.s32.totalorder %s32, 1
      %p183 = por %p181, %p182
      %p184 = scmp.ne.s32.totalorder %s175, %s176
      %p185 = scmp.eq.s32.totalorder %s32, 0
      %p186 = por %p184, %p185
      %p187 = scmp.ne.s32.totalorder %s175, %s176
      %p188 = scmp.eq.s32.totalorder %s33, 1
      %p189 = por %p187, %p188
      %p191 = scmp.ne.s32.totalorder %s176, %s190
      %p192 = scmp.eq.s32.totalorder %s33, 0
      %p193 = por %p191, %p192
      %s195 = sadd.s32 %s194, 1
      %p198 = scmp.eq.s32.totalorder %s27, 1
      %p199 = scmp.ne.s32.totalorder %s194, %s196
      %p200 = scmp.eq.s32.totalorder %s27, 0
      %p201 = por %p199, %p200
      %p202 = scmp.ne.s32.totalorder %s194, %s196
      %p203 = scmp.eq.s32.totalorder %s32, 1
      %p204 = por %p202, %p203
      %p205 = scmp.ne.s32.totalorder %s196, %s197
      %p206 = scmp.eq.s32.totalorder %s32, 0
      %p207 = por %p205, %p206
      %p208 = scmp.ne.s32.totalorder %s196, %s197
      %p209 = scmp.eq.s32.totalorder %s33, 1
      %p210 = por %p208, %p209
      %p212 = scmp.ne.s32.totalorder %s197, %s211
      %p213 = scmp.eq.s32.totalorder %s33, 0
      %p214 = por %p212, %p213
      %s216 = sadd.s32 %s215, 1
      %p219 = scmp.eq.s32.totalorder %s27, 1
      %p220 = scmp.ne.s32.totalorder %s215, %s217
      %p221 = scmp.eq.s32.totalorder %s27, 0
      %p222 = por %p220, %p221
      %p223 = scmp.ne.s32.totalorder %s215, %s217
      %p224 = scmp.eq.s32.totalorder %s32, 1
      %p225 = por %p223, %p224
      %p226 = scmp.ne.s32.totalorder %s217, %s218
      %p227 = scmp.eq.s32.totalorder %s32, 0
      %p228 = por %p226, %p227
      %p229 = scmp.ne.s32.totalorder %s217, %s218
      %p230 = scmp.eq.s32.totalorder %s33, 1
      %p231 = por %p229, %p230
      %p233 = scmp.ne.s32.totalorder %s218, %s232
      %p234 = scmp.eq.s32.totalorder %s33, 0
      %p235 = por %p233, %p234
      %s237 = sadd.s32 %s236, 1
      %p240 = scmp.eq.s32.totalorder %s27, 1
      %p241 = scmp.ne.s32.totalorder %s236, %s238
      %p242 = scmp.eq.s32.totalorder %s27, 0
      %p243 = por %p241, %p242
      %p244 = scmp.ne.s32.totalorder %s236, %s238
      %p245 = scmp.eq.s32.totalorder %s32, 1
      %p246 = por %p244, %p245
      %p247 = scmp.ne.s32.totalorder %s238, %s239
      %p248 = scmp.eq.s32.totalorder %s32, 0
      %p249 = por %p247, %p248
      %p250 = scmp.ne.s32.totalorder %s238, %s239
      %p251 = scmp.eq.s32.totalorder %s33, 1
      %p252 = por %p250, %p251
      %p254 = scmp.ne.s32.totalorder %s239, %s253
      %p255 = scmp.eq.s32.totalorder %s33, 0
      %p256 = por %p254, %p255
      %s258 = sadd.s32 %s257, 1
      %p261 = scmp.eq.s32.totalorder %s27, 1
      %p262 = scmp.ne.s32.totalorder %s257, %s259
      %p263 = scmp.eq.s32.totalorder %s27, 0
      %p264 = por %p262, %p263
      %p265 = scmp.ne.s32.totalorder %s257, %s259
      %p266 = scmp.eq.s32.totalorder %s32, 1
      %p267 = por %p265, %p266
      %p268 = scmp.ne.s32.totalorder %s259, %s260
      %p269 = scmp.eq.s32.totalorder %s32, 0
      %p270 = por %p268, %p269
      %p271 = scmp.ne.s32.totalorder %s259, %s260
      %p272 = scmp.eq.s32.totalorder %s33, 1
      %p273 = por %p271, %p272
      %p275 = scmp.ne.s32.totalorder %s260, %s274
      %p276 = scmp.eq.s32.totalorder %s33, 0
      %p277 = por %p275, %p276
      %s278 = sadd.s32 %s35, %s36
      %s279 = sadd.s32 %s49, %s45
      %s280 = ssub.s32 %s34, %s53
      %s281 = ssub.s32 %s278, %s279
      %s282 = sor.u32 %s280, %s281
      %p283 = scmp.eq.s32.totalorder %s282, 0
      %s285 = sadd.s32 %s284, 1
      %s286 = scalar_select %p283, %s284, %s285
      %p289 = pneg %p283
      %p290 = scmp.eq.s32.totalorder %s27, 1
      %p291 = por %p289, %p290
      %p292 = scmp.ne.s32.totalorder %s284, %s287
      %p293 = scmp.eq.s32.totalorder %s27, 0
      %p294 = por %p292, %p293
      %p295 = scmp.ne.s32.totalorder %s284, %s287
      %p296 = scmp.eq.s32.totalorder %s32, 1
      %p297 = por %p295, %p296
      %p298 = scmp.ne.s32.totalorder %s287, %s288
      %p299 = scmp.eq.s32.totalorder %s32, 0
      %p300 = por %p298, %p299
      %p301 = scmp.ne.s32.totalorder %s287, %s288
      %p302 = scmp.eq.s32.totalorder %s33, 1
      %p303 = por %p301, %p302
      %p305 = scmp.ne.s32.totalorder %s288, %s304
      %p306 = scmp.eq.s32.totalorder %s33, 0
      %p307 = por %p305, %p306
      %p308 = scmp.le.s32.totalorder 1, %s27
      %p309 = scmp.lt.s32.totalorder %s27, 3
      %p310 = pnand %p308, %p309
      %p311 = pneg %p310
      // Predicated region
      $region9: #{tpu_custom_call.1} parent=5 // pred_check
        _
      $region10: #{tpu_custom_call.1} parent=5 // pred_check_branch
        %313 = sbr.rel (%p310) target = $region12
      $region11: #{tpu_custom_call.1} parent=5 // pred_region
        %s314 = ssub.s32 %s27, 1
        // Predicated region
        $region13: #{tpu_custom_call.1} parent=11 // pred_check
          %p315 = pneg %p123
        $region14: #{tpu_custom_call.1} parent=11 // pred_check_branch
          %317 = sbr.rel (%p315) target = $region16
        $region15: #{tpu_custom_call.1} parent=11 // pred_region
          %s319 = ssub.s32 512, 512
          %320 = vsyncadd [#allocation8], %s319
          %s321 = sshll.u32 [#allocation9], 4
          %s322 = int_to_ptr.vmem [resolvable:$true] %s321
          %327 = dma.hbm_to_vmem [thread:$0]  %s2, 512, %s322, [#allocation8], 128, 128, 8
        $region16: #{tpu_custom_call.1} parent=11 // pred_fallthru
          _
        // Predicated region
        $region17: #{tpu_custom_call.1} parent=11 // pred_check
          %p328 = pneg %p144
        $region18: #{tpu_custom_call.1} parent=11 // pred_check_branch
          %330 = sbr.rel (%p328) target = $region20
        $region19: #{tpu_custom_call.1} parent=11 // pred_region
          _
        $region20: #{tpu_custom_call.1} parent=11 // pred_fallthru
          _
        // Predicated region
        $region21: #{tpu_custom_call.1} parent=11 // pred_check
          %p331 = pneg %p165
        $region22: #{tpu_custom_call.1} parent=11 // pred_check_branch
          %333 = sbr.rel (%p331) target = $region24
        $region23: #{tpu_custom_call.1} parent=11 // pred_region
          %s335 = ssub.s32 512, 512
          %336 = vsyncadd [#allocation11], %s335
          %s337 = sshll.u32 [#allocation10], 4
          %s338 = int_to_ptr.vmem [resolvable:$true] %s337
          %343 = dma.hbm_to_vmem [thread:$0]  %s4, 512, %s338, [#allocation11], 128, 128, 8
        $region24: #{tpu_custom_call.1} parent=11 // pred_fallthru
          _
        // Predicated region
        $region25: #{tpu_custom_call.1} parent=11 // pred_check
          %p344 = pneg %p186
        $region26: #{tpu_custom_call.1} parent=11 // pred_check_branch
          %346 = sbr.rel (%p344) target = $region28
        $region27: #{tpu_custom_call.1} parent=11 // pred_region
          _
        $region28: #{tpu_custom_call.1} parent=11 // pred_fallthru
          _
        // Predicated region
        $region29: #{tpu_custom_call.1} parent=11 // pred_check
          %p347 = pneg %p207
        $region30: #{tpu_custom_call.1} parent=11 // pred_check_branch
          %349 = sbr.rel (%p347) target = $region32
        $region31: #{tpu_custom_call.1} parent=11 // pred_region
          %s351 = ssub.s32 512, 512
          %352 = vsyncadd [#allocation11], %s351
          %s353 = sshll.u32 [#allocation12], 4
          %s354 = int_to_ptr.vmem [resolvable:$true] %s353
          %359 = dma.hbm_to_vmem [thread:$0]  %s6, 512, %s354, [#allocation11], 128, 128, 8
        $region32: #{tpu_custom_call.1} parent=11 // pred_fallthru
          _
        // Predicated region
        $region33: #{tpu_custom_call.1} parent=11 // pred_check
          %p360 = pneg %p228
        $region34: #{tpu_custom_call.1} parent=11 // pred_check_branch
          %362 = sbr.rel (%p360) target = $region36
        $region35: #{tpu_custom_call.1} parent=11 // pred_region
          _
        $region36: #{tpu_custom_call.1} parent=11 // pred_fallthru
          _
        // Predicated region
        $region37: #{tpu_custom_call.1} parent=11 // pred_check
          %p363 = pneg %p249
        $region38: #{tpu_custom_call.1} parent=11 // pred_check_branch
          %365 = sbr.rel (%p363) target = $region40
        $region39: #{tpu_custom_call.1} parent=11 // pred_region
          %s367 = ssub.s32 512, 512
          %368 = vsyncadd [#allocation14], %s367
          %s369 = sshll.u32 [#allocation13], 4
          %s370 = int_to_ptr.vmem [resolvable:$true] %s369
          %375 = dma.hbm_to_vmem [thread:$0]  %s8, 512, %s370, [#allocation14], 128, 128, 8
        $region40: #{tpu_custom_call.1} parent=11 // pred_fallthru
          _
        // Predicated region
        $region41: #{tpu_custom_call.1} parent=11 // pred_check
          %p376 = pneg %p270
        $region42: #{tpu_custom_call.1} parent=11 // pred_check_branch
          %378 = sbr.rel (%p376) target = $region44
        $region43: #{tpu_custom_call.1} parent=11 // pred_region
          _
        $region44: #{tpu_custom_call.1} parent=11 // pred_fallthru
          _
      $region12: #{tpu_custom_call.1} parent=5 // pred_fallthru
        _
      %p379 = scmp.lt.s32.totalorder %s27, 2
      // Predicated region
      $region45: #{tpu_custom_call.1} parent=5 // pred_check
        %p380 = pneg %p379
      $region46: #{tpu_custom_call.1} parent=5 // pred_check_branch
        %382 = sbr.rel (%p380) target = $region48
      $region47: #{tpu_custom_call.1} parent=5 // pred_region
        // Predicated region
        $region49: #{tpu_custom_call.1} parent=47 // pred_check
          %p383 = pneg %p70
        $region50: #{tpu_custom_call.1} parent=47 // pred_check_branch
          %385 = sbr.rel (%p383) target = $region52
        $region51: #{tpu_custom_call.1} parent=47 // pred_region
          %s386 = sand.u32 %s60, 1
          %s387 = scalar_lea.sflag [#allocation5], %s386
          %s388 = sand.u32 %s60, 1
          %s389 = smul.addr %s388, 8
          %s390 = scalar_lea.vmem [#allocation4], %s389
          %s391 = sadd.s32 %s35, %s36
          %s393 = ssub.s32 128, 128
          %394 = vsyncadd %s387, %s393
          %s395 = sadd.s32 %s391, %s34
          %s396 = smul.addr %s395, 128
          %s397 = scalar_lea.hbm %s0, %s396
          %s399 = sshll.u32 %s390, 4
          %s400 = int_to_ptr.vmem [resolvable:$true] %s399
          %402 = dma.hbm_to_vmem [thread:$0]  %s397, 128, %s400, %s387
        $region52: #{tpu_custom_call.1} parent=47 // pred_fallthru
          _
        // Predicated region
        $region53: #{tpu_custom_call.1} parent=47 // pred_check
          %p403 = pneg %p96
        $region54: #{tpu_custom_call.1} parent=47 // pred_check_branch
          %405 = sbr.rel (%p403) target = $region56
        $region55: #{tpu_custom_call.1} parent=47 // pred_region
          %s406 = sand.u32 %s27, 1
          %s407 = scalar_lea.sflag [#allocation8], %s406
          %s408 = sand.u32 %s86, 1
          %s409 = smul.addr %s408, 8
          %s410 = scalar_lea.vmem [#allocation7], %s409
          %s412 = ssub.s32 128, 128
          %413 = vsyncadd %s407, %s412
          %s414 = smul.addr %s34, 128
          %s415 = scalar_lea.hbm %s1, %s414
          %s417 = sshll.u32 %s410, 4
          %s418 = int_to_ptr.vmem [resolvable:$true] %s417
          %420 = dma.hbm_to_vmem [thread:$0]  %s415, 128, %s418, %s407
        $region56: #{tpu_custom_call.1} parent=47 // pred_fallthru
          _
      $region48: #{tpu_custom_call.1} parent=5 // pred_fallthru
        _
      %p421 = scmp.le.s32.totalorder 1, %s27
      %p422 = scmp.lt.s32.totalorder %s27, 3
      %p423 = pnand %p421, %p422
      %p424 = pneg %p423
      // Predicated region
      $region57: #{tpu_custom_call.1} parent=5 // pred_check
        _
      $region58: #{tpu_custom_call.1} parent=5 // pred_check_branch
        %426 = sbr.rel (%p423) target = $region60
      $region59: #{tpu_custom_call.1} parent=5 // pred_region
        %s427 = ssub.s32 %s27, 1
        %s428 = sand.u32 %s63, 1
        %s429 = scalar_lea.sflag [#allocation5], %s428
        %s430 = sand.u32 %s63, 1
        %s431 = smul.addr %s430, 8
        %s432 = scalar_lea.vmem [#allocation4], %s431
        // Predicated region
        $region61: #{tpu_custom_call.1} parent=59 // pred_check
          %p433 = pneg %p76
        $region62: #{tpu_custom_call.1} parent=59 // pred_check_branch
          %435 = sbr.rel (%p433) target = $region64
        $region63: #{tpu_custom_call.1} parent=59 // pred_region
          %436 = dma.done %s429, 128
        $region64: #{tpu_custom_call.1} parent=59 // pred_fallthru
          _
        %s437 = sand.u32 %s32, 1
        %s438 = scalar_lea.sflag [#allocation8], %s437
        %s439 = sand.u32 %s89, 1
        %s440 = smul.addr %s439, 8
        %s441 = scalar_lea.vmem [#allocation7], %s440
        // Predicated region
        $region65: #{tpu_custom_call.1} parent=59 // pred_check
          %p442 = pneg %p102
        $region66: #{tpu_custom_call.1} parent=59 // pred_check_branch
          %444 = sbr.rel (%p442) target = $region68
        $region67: #{tpu_custom_call.1} parent=59 // pred_region
          %445 = dma.done %s438, 128
        $region68: #{tpu_custom_call.1} parent=59 // pred_fallthru
          _
        // Predicated region
        $region69: #{tpu_custom_call.1} parent=59 // pred_check
          %p446 = pneg %p123
        $region70: #{tpu_custom_call.1} parent=59 // pred_check_branch
          %448 = sbr.rel (%p446) target = $region72
        $region71: #{tpu_custom_call.1} parent=59 // pred_region
          %449 = dma.done [#allocation8], 512
        $region72: #{tpu_custom_call.1} parent=59 // pred_fallthru
          _
        // Predicated region
        $region73: #{tpu_custom_call.1} parent=59 // pred_check
          %p450 = pneg %p165
        $region74: #{tpu_custom_call.1} parent=59 // pred_check_branch
          %452 = sbr.rel (%p450) target = $region76
        $region75: #{tpu_custom_call.1} parent=59 // pred_region
          %453 = dma.done [#allocation11], 512
        $region76: #{tpu_custom_call.1} parent=59 // pred_fallthru
          _
        // Predicated region
        $region77: #{tpu_custom_call.1} parent=59 // pred_check
          %p454 = pneg %p207
        $region78: #{tpu_custom_call.1} parent=59 // pred_check_branch
          %456 = sbr.rel (%p454) target = $region80
        $region79: #{tpu_custom_call.1} parent=59 // pred_region
          %457 = dma.done [#allocation11], 512
        $region80: #{tpu_custom_call.1} parent=59 // pred_fallthru
          _
        // Predicated region
        $region81: #{tpu_custom_call.1} parent=59 // pred_check
          %p458 = pneg %p249
        $region82: #{tpu_custom_call.1} parent=59 // pred_check_branch
          %460 = sbr.rel (%p458) target = $region84
        $region83: #{tpu_custom_call.1} parent=59 // pred_region
          %461 = dma.done [#allocation14], 512
        $region84: #{tpu_custom_call.1} parent=59 // pred_fallthru
          _
        %s462 = sand.u32 %s63, 1
        %s463 = scalar_lea.sflag [#allocation5], %s462
        %s464 = sand.u32 %s63, 1
        %s465 = smul.addr %s464, 8
        %s466 = scalar_lea.vmem [#allocation4], %s465
        %p467 = pneg %p76
        %p468 = pneg %p73
        %s469 = sand.u32 %s32, 1
        %s470 = scalar_lea.sflag [#allocation8], %s469
        %s471 = sand.u32 %s89, 1
        %s472 = smul.addr %s471, 8
        %s473 = scalar_lea.vmem [#allocation7], %s472
        %p474 = pneg %p102
        %p475 = pneg %p99
        %p476 = pneg %p123
        %p477 = pneg %p120
        %p478 = pneg %p144
        %p479 = pneg %p141
        %p480 = pneg %p165
        %p481 = pneg %p162
        %p482 = pneg %p186
        %p483 = pneg %p183
        %p484 = pneg %p207
        %p485 = pneg %p204
        %p486 = pneg %p228
        %p487 = pneg %p225
        %p488 = pneg %p249
        %p489 = pneg %p246
        %p490 = pneg %p270
        %p491 = pneg %p267
        %p492 = pneg %p300
        %p493 = pneg %p297
        %s494 = sand.u32 %s287, 1
        %s495 = scalar_lea.sflag [#allocation6], %s494
        %s496 = sand.u32 %s287, 1
        %s497 = smul.addr %s496, 8
        %s498 = scalar_lea.vmem [#allocation15], %s497
        %s499 = sadd.s32 %s38, %s39
        %s500 = sadd.s32 %s38, %s39
        %p501 = scmp.eq.s32.totalorder %s39, 0
        // Predicated region
        $region85: #{tpu_custom_call.1} parent=59 // pred_check
          %p502 = pneg %p501
        $region86: #{tpu_custom_call.1} parent=59 // pred_check_branch
          %504 = sbr.rel (%p502) target = $region88
        $region87: #{tpu_custom_call.1} parent=59 // pred_region
          %v505 = vld [vmem:[%s441] sm:$0xff]
          %v506 = vld [vmem:[#allocation10] sm:$0xff]
          %v507 = vld [vmem:[#allocation10 + $0x8] sm:$0xff]
          %v508 = vld [vmem:[#allocation10 + $0x10] sm:$0xff]
          %v509 = vld [vmem:[#allocation10 + $0x18] sm:$0xff]
          %v510 = vld [vmem:[%s5] sm:$0x1]
          %v512 = vlaneseq
          %v513 = vshrl.u32 %v512, 7
          %v514 = vsub.s32 0, %v513
          %v515 = vrot.slane %v510, %v514
          %vm517 = vcmask 261120
          %v519 = vsel %vm517, %v505, 0
          %521 = vmatprep.subr.mxu0 0.0
          %522 = vmatpush1.msra.mxu0 0.0
          %523 = vmatprep.subr.mxu0 0.0
          %524 = vmatpush1.msra.mxu0 0.0
          %525 = vmatprep.subr.mxu0 0.0
          %526 = vmatpush1.msra.mxu0 0.0
          %527 = vmatprep.subr.mxu0 0.0
          %528 = vmatpush1.msra.mxu0 0.0
          %529 = vmatprep.subr.mxu0 0.0
          %530 = vmatpush1.msra.mxu0 0.0
          %531 = vmatprep.subr.mxu0 0.0
          %532 = vmatpush1.msra.mxu0 0.0
          %533 = vmatprep.subr.mxu0 0.0
          %534 = vmatpush1.msra.mxu0 0.0
          %535 = vmatprep.subr.mxu0 0.0
          %536 = vmatpush1.msra.mxu0 0.0
          %537 = vmatprep.subr.mxu0 0.0
          %538 = vmatpush1.msra.mxu0 0.0
          %539 = vmatprep.subr.mxu0 0.0
          %540 = vmatpush1.msra.mxu0 0.0
          %541 = vmatprep.subr.mxu0 0.0
          %542 = vmatpush1.msra.mxu0 0.0
          %543 = vmatprep.subr.mxu0 0.0
          %544 = vmatpush1.msra.mxu0 0.0
          %545 = vmatprep.subr.mxu0 0.0
          %546 = vmatpush1.msra.mxu0 %v509
          %547 = vmatprep.subr.mxu0 0.0
          %548 = vmatpush1.msra.mxu0 %v508
          %549 = vmatprep.subr.mxu0 0.0
          %550 = vmatpush1.msra.mxu0 %v507
          %551 = vmatprep.subr.mxu0 0.0
          %552 = vmatpush1.msra.mxu0 %v506
          %553 = vmatprep.subr.mxu0 0.0
          %554 = vmatpush2.msra.mxu0 0.0
          %555 = vmatprep.subr.mxu0 0.0
          %556 = vmatpush2.msra.mxu0 0.0
          %557 = vmatprep.subr.mxu0 0.0
          %558 = vmatpush2.msra.mxu0 0.0
          %559 = vmatprep.subr.mxu0 0.0
          %560 = vmatpush2.msra.mxu0 0.0
          %561 = vmatprep.subr.mxu0 0.0
          %562 = vmatpush2.msra.mxu0 0.0
          %563 = vmatprep.subr.mxu0 0.0
          %564 = vmatpush2.msra.mxu0 0.0
          %565 = vmatprep.subr.mxu0 0.0
          %566 = vmatpush2.msra.mxu0 0.0
          %567 = vmatprep.subr.mxu0 0.0
          %568 = vmatpush2.msra.mxu0 0.0
          %569 = vmatprep.subr.mxu0 0.0
          %570 = vmatpush2.msra.mxu0 0.0
          %571 = vmatprep.subr.mxu0 0.0
          %572 = vmatpush2.msra.mxu0 0.0
          %573 = vmatprep.subr.mxu0 0.0
          %574 = vmatpush2.msra.mxu0 0.0
          %575 = vmatprep.subr.mxu0 0.0
          %576 = vmatpush2.msra.mxu0 0.0
          %577 = vmatprep.subr.mxu0 0.0
          %578 = vmatpush2.msra.mxu0 0.0
          %579 = vmatprep.subr.mxu0 0.0
          %580 = vmatpush2.msra.mxu0 0.0
          %581 = vmatprep.subr.mxu0 0.0
          %582 = vmatpush2.msra.mxu0 0.0
          %583 = vmatprep.subr.mxu0 0.0
          %584 = vmatpush2.msra.mxu0 0.0
          %585 = vmatprep.mubr.f32.mxu0 0.0
          %586 = vmatmul.mubr.f32.gmra.mxu0 %v519
          %v587 = vpop.f32.mrf.mxu0
          %v588 = vadd.f32 %v515, %v587
          %v589 = vpop.f32.mrf.mxu0
          %590 = vdwg.mxu0
          %591 = vst.msk [vmem:[#allocation2] sm:$0xff] %vm517, %v588
          %v592 = vld [vmem:[#allocation12] sm:$0xff]
          %v593 = vld [vmem:[#allocation12 + $0x8] sm:$0xff]
          %v594 = vld [vmem:[#allocation12 + $0x10] sm:$0xff]
          %v595 = vld [vmem:[#allocation12 + $0x18] sm:$0xff]
          %v596 = vld [vmem:[%s7] sm:$0x1]
          %v598 = vlaneseq
          %v599 = vshrl.u32 %v598, 7
          %v600 = vsub.s32 0, %v599
          %v601 = vrot.slane %v596, %v600
          %603 = vmatprep.subr.mxu0 0.0
          %604 = vmatpush1.msra.mxu0 0.0
          %605 = vmatprep.subr.mxu0 0.0
          %606 = vmatpush1.msra.mxu0 0.0
          %607 = vmatprep.subr.mxu0 0.0
          %608 = vmatpush1.msra.mxu0 0.0
          %609 = vmatprep.subr.mxu0 0.0
          %610 = vmatpush1.msra.mxu0 0.0
          %611 = vmatprep.subr.mxu0 0.0
          %612 = vmatpush1.msra.mxu0 0.0
          %613 = vmatprep.subr.mxu0 0.0
          %614 = vmatpush1.msra.mxu0 0.0
          %615 = vmatprep.subr.mxu0 0.0
          %616 = vmatpush1.msra.mxu0 0.0
          %617 = vmatprep.subr.mxu0 0.0
          %618 = vmatpush1.msra.mxu0 0.0
          %619 = vmatprep.subr.mxu0 0.0
          %620 = vmatpush1.msra.mxu0 0.0
          %621 = vmatprep.subr.mxu0 0.0
          %622 = vmatpush1.msra.mxu0 0.0
          %623 = vmatprep.subr.mxu0 0.0
          %624 = vmatpush1.msra.mxu0 0.0
          %625 = vmatprep.subr.mxu0 0.0
          %626 = vmatpush1.msra.mxu0 0.0
          %627 = vmatprep.subr.mxu0 0.0
          %628 = vmatpush1.msra.mxu0 %v595
          %629 = vmatprep.subr.mxu0 0.0
          %630 = vmatpush1.msra.mxu0 %v594
          %631 = vmatprep.subr.mxu0 0.0
          %632 = vmatpush1.msra.mxu0 %v593
          %633 = vmatprep.subr.mxu0 0.0
          %634 = vmatpush1.msra.mxu0 %v592
          %635 = vmatprep.subr.mxu0 0.0
          %636 = vmatpush2.msra.mxu0 0.0
          %637 = vmatprep.subr.mxu0 0.0
          %638 = vmatpush2.msra.mxu0 0.0
          %639 = vmatprep.subr.mxu0 0.0
          %640 = vmatpush2.msra.mxu0 0.0
          %641 = vmatprep.subr.mxu0 0.0
          %642 = vmatpush2.msra.mxu0 0.0
          %643 = vmatprep.subr.mxu0 0.0
          %644 = vmatpush2.msra.mxu0 0.0
          %645 = vmatprep.subr.mxu0 0.0
          %646 = vmatpush2.msra.mxu0 0.0
          %647 = vmatprep.subr.mxu0 0.0
          %648 = vmatpush2.msra.mxu0 0.0
          %649 = vmatprep.subr.mxu0 0.0
          %650 = vmatpush2.msra.mxu0 0.0
          %651 = vmatprep.subr.mxu0 0.0
          %652 = vmatpush2.msra.mxu0 0.0
          %653 = vmatprep.subr.mxu0 0.0
          %654 = vmatpush2.msra.mxu0 0.0
          %655 = vmatprep.subr.mxu0 0.0
          %656 = vmatpush2.msra.mxu0 0.0
          %657 = vmatprep.subr.mxu0 0.0
          %658 = vmatpush2.msra.mxu0 0.0
          %659 = vmatprep.subr.mxu0 0.0
          %660 = vmatpush2.msra.mxu0 0.0
          %661 = vmatprep.subr.mxu0 0.0
          %662 = vmatpush2.msra.mxu0 0.0
          %663 = vmatprep.subr.mxu0 0.0
          %664 = vmatpush2.msra.mxu0 0.0
          %665 = vmatprep.subr.mxu0 0.0
          %666 = vmatpush2.msra.mxu0 0.0
          %667 = vmatprep.mubr.f32.mxu0 0.0
          %668 = vmatmul.mubr.f32.gmra.mxu0 %v519
          %v669 = vpop.f32.mrf.mxu0
          %v670 = vadd.f32 %v601, %v669
          %v671 = vpop.f32.mrf.mxu0
          %672 = vdwg.mxu0
          %673 = vst.msk [vmem:[#allocation3] sm:$0xff] %vm517, %v670
        $region88: #{tpu_custom_call.1} parent=59 // pred_fallthru
          _
        %v674 = vld [vmem:[%s432] sm:$0xff]
        %v675 = vld [vmem:[#allocation9] sm:$0xff]
        %v676 = vld [vmem:[#allocation9 + $0x8] sm:$0xff]
        %v677 = vld [vmem:[#allocation9 + $0x10] sm:$0xff]
        %v678 = vld [vmem:[#allocation9 + $0x18] sm:$0xff]
        %v679 = vld [vmem:[%s3] sm:$0x1]
        %v681 = vlaneseq
        %v682 = vshrl.u32 %v681, 7
        %v683 = vsub.s32 0, %v682
        %v684 = vrot.slane %v679, %v683
        %vm686 = vcmask 261120
        %v688 = vsel %vm686, %v674, 0
        %690 = vmatprep.subr.mxu0 0.0
        %691 = vmatpush1.msra.mxu0 0.0
        %692 = vmatprep.subr.mxu0 0.0
        %693 = vmatpush1.msra.mxu0 0.0
        %694 = vmatprep.subr.mxu0 0.0
        %695 = vmatpush1.msra.mxu0 0.0
        %696 = vmatprep.subr.mxu0 0.0
        %697 = vmatpush1.msra.mxu0 0.0
        %698 = vmatprep.subr.mxu0 0.0
        %699 = vmatpush1.msra.mxu0 0.0
        %700 = vmatprep.subr.mxu0 0.0
        %701 = vmatpush1.msra.mxu0 0.0
        %702 = vmatprep.subr.mxu0 0.0
        %703 = vmatpush1.msra.mxu0 0.0
        %704 = vmatprep.subr.mxu0 0.0
        %705 = vmatpush1.msra.mxu0 0.0
        %706 = vmatprep.subr.mxu0 0.0
        %707 = vmatpush1.msra.mxu0 0.0
        %708 = vmatprep.subr.mxu0 0.0
        %709 = vmatpush1.msra.mxu0 0.0
        %710 = vmatprep.subr.mxu0 0.0
        %711 = vmatpush1.msra.mxu0 0.0
        %712 = vmatprep.subr.mxu0 0.0
        %713 = vmatpush1.msra.mxu0 0.0
        %714 = vmatprep.subr.mxu0 0.0
        %715 = vmatpush1.msra.mxu0 %v678
        %716 = vmatprep.subr.mxu0 0.0
        %717 = vmatpush1.msra.mxu0 %v677
        %718 = vmatprep.subr.mxu0 0.0
        %719 = vmatpush1.msra.mxu0 %v676
        %720 = vmatprep.subr.mxu0 0.0
        %721 = vmatpush1.msra.mxu0 %v675
        %722 = vmatprep.subr.mxu0 0.0
        %723 = vmatpush2.msra.mxu0 0.0
        %724 = vmatprep.subr.mxu0 0.0
        %725 = vmatpush2.msra.mxu0 0.0
        %726 = vmatprep.subr.mxu0 0.0
        %727 = vmatpush2.msra.mxu0 0.0
        %728 = vmatprep.subr.mxu0 0.0
        %729 = vmatpush2.msra.mxu0 0.0
        %730 = vmatprep.subr.mxu0 0.0
        %731 = vmatpush2.msra.mxu0 0.0
        %732 = vmatprep.subr.mxu0 0.0
        %733 = vmatpush2.msra.mxu0 0.0
        %734 = vmatprep.subr.mxu0 0.0
        %735 = vmatpush2.msra.mxu0 0.0
        %736 = vmatprep.subr.mxu0 0.0
        %737 = vmatpush2.msra.mxu0 0.0
        %738 = vmatprep.subr.mxu0 0.0
        %739 = vmatpush2.msra.mxu0 0.0
        %740 = vmatprep.subr.mxu0 0.0
        %741 = vmatpush2.msra.mxu0 0.0
        %742 = vmatprep.subr.mxu0 0.0
        %743 = vmatpush2.msra.mxu0 0.0
        %744 = vmatprep.subr.mxu0 0.0
        %745 = vmatpush2.msra.mxu0 0.0
        %746 = vmatprep.subr.mxu0 0.0
        %747 = vmatpush2.msra.mxu0 0.0
        %748 = vmatprep.subr.mxu0 0.0
        %749 = vmatpush2.msra.mxu0 0.0
        %750 = vmatprep.subr.mxu0 0.0
        %751 = vmatpush2.msra.mxu0 0.0
        %752 = vmatprep.subr.mxu0 0.0
        %753 = vmatpush2.msra.mxu0 0.0
        %754 = vmatprep.mubr.f32.mxu0 0.0
        %755 = vmatmul.mubr.f32.gmra.mxu0 %v688
        %v756 = vpop.f32.mrf.mxu0
        %v757 = vadd.f32 %v684, %v756
        %v758 = vpop.f32.mrf.mxu0
        %759 = vdwg.mxu0
        %v760 = vmul.f32 %v757, 0.35355338
        %762 = vrot.lane.b32.xlu0 %v760, 120
        %v763 = vpop.permute.xlu0 %762
        %765 = vrot.lane.b32.xlu0 %v760, 112
        %v766 = vpop.permute.xlu0 %765
        %768 = vrot.lane.b32.xlu0 %v760, 104
        %v769 = vpop.permute.xlu0 %768
        %v771 = vcombine.low %v760, %v766
        %v772 = vcombine.high %v760, %v766
        %v774 = vunpack.c.l.s4 1983009808
        %v775 = vunpack.c.0.s8 %v774
        %v776 = vlaneseq
        %v777 = vshrl.u32 %v776, 7
        %v778 = vsub.s32 %v775, %v777
        %v779 = vrot.slane %v771, %v778
        %v781 = vunpack.c.l.s4 1983009808
        %v782 = vunpack.c.0.s8 %v781
        %v783 = vlaneseq
        %v784 = vshrl.u32 %v783, 7
        %v785 = vsub.s32 %v782, %v784
        %v786 = vrot.slane %v772, %v785
        %v787 = vcombine.low %v763, %v769
        %v788 = vcombine.high %v763, %v769
        %v790 = vunpack.c.l.s4 1983009808
        %v791 = vunpack.c.0.s8 %v790
        %v792 = vlaneseq
        %v793 = vshrl.u32 %v792, 7
        %v794 = vsub.s32 %v791, %v793
        %v795 = vrot.slane %v787, %v794
        %v797 = vunpack.c.l.s4 1983009808
        %v798 = vunpack.c.0.s8 %v797
        %v799 = vlaneseq
        %v800 = vshrl.u32 %v799, 7
        %v801 = vsub.s32 %v798, %v800
        %v802 = vrot.slane %v788, %v801
        %v803 = vcombine.low %v779, %v795
        %v804 = vcombine.high %v779, %v795
        %v806 = vunpack.c.l.s4 1934713408
        %v807 = vunpack.c.0.s8 %v806
        %v808 = vlaneseq
        %v809 = vshrl.u32 %v808, 7
        %v810 = vsub.s32 %v807, %v809
        %v811 = vrot.slane %v803, %v810
        %v813 = vunpack.c.l.s4 1934713408
        %v814 = vunpack.c.0.s8 %v813
        %v815 = vlaneseq
        %v816 = vshrl.u32 %v815, 7
        %v817 = vsub.s32 %v814, %v816
        %v818 = vrot.slane %v804, %v817
        %v819 = vcombine.low %v786, %v802
        %v820 = vcombine.high %v786, %v802
        %v822 = vunpack.c.l.s4 1934713408
        %v823 = vunpack.c.0.s8 %v822
        %v824 = vlaneseq
        %v825 = vshrl.u32 %v824, 7
        %v826 = vsub.s32 %v823, %v825
        %v827 = vrot.slane %v819, %v826
        %v829 = vunpack.c.l.s4 1934713408
        %v830 = vunpack.c.0.s8 %v829
        %v831 = vlaneseq
        %v832 = vshrl.u32 %v831, 7
        %v833 = vsub.s32 %v830, %v832
        %v834 = vrot.slane %v820, %v833
        %v835 = vcombine.high %v811, 0.0
        %v836 = vcombine.high %v818, 0.0
        %v837 = vcombine.high %v827, 0.0
        %v838 = vcombine.high %v834, 0.0
        %v839 = vcombine.low %v811, %v818
        %v841 = vunpack.c.l.s4 1983009808
        %v842 = vunpack.c.0.s8 %v841
        %v843 = vlaneseq
        %v844 = vshrl.u32 %v843, 7
        %v845 = vsub.s32 %v842, %v844
        %v846 = vrot.slane %v839, %v845
        %v847 = vcombine.low %v835, %v836
        %v849 = vunpack.c.l.s4 1983009808
        %v850 = vunpack.c.0.s8 %v849
        %v851 = vlaneseq
        %v852 = vshrl.u32 %v851, 7
        %v853 = vsub.s32 %v850, %v852
        %v854 = vrot.slane %v847, %v853
        %v855 = vcombine.low %v827, %v834
        %v857 = vunpack.c.l.s4 1983009808
        %v858 = vunpack.c.0.s8 %v857
        %v859 = vlaneseq
        %v860 = vshrl.u32 %v859, 7
        %v861 = vsub.s32 %v858, %v860
        %v862 = vrot.slane %v855, %v861
        %v863 = vcombine.low %v837, %v838
        %v865 = vunpack.c.l.s4 1983009808
        %v866 = vunpack.c.0.s8 %v865
        %v867 = vlaneseq
        %v868 = vshrl.u32 %v867, 7
        %v869 = vsub.s32 %v866, %v868
        %v870 = vrot.slane %v863, %v869
        %v871 = vcombine.low %v846, %v854
        %v872 = vcombine.high %v846, %v854
        %v874 = vunpack.c.l.s4 1934713408
        %v875 = vunpack.c.0.s8 %v874
        %v876 = vlaneseq
        %v877 = vshrl.u32 %v876, 7
        %v878 = vsub.s32 %v875, %v877
        %v879 = vrot.slane %v871, %v878
        %v881 = vunpack.c.l.s4 1934713408
        %v882 = vunpack.c.0.s8 %v881
        %v883 = vlaneseq
        %v884 = vshrl.u32 %v883, 7
        %v885 = vsub.s32 %v882, %v884
        %v886 = vrot.slane %v872, %v885
        %v887 = vcombine.low %v862, %v870
        %v888 = vcombine.high %v862, %v870
        %v890 = vunpack.c.l.s4 1934713408
        %v891 = vunpack.c.0.s8 %v890
        %v892 = vlaneseq
        %v893 = vshrl.u32 %v892, 7
        %v894 = vsub.s32 %v891, %v893
        %v895 = vrot.slane %v887, %v894
        %v897 = vunpack.c.l.s4 1934713408
        %v898 = vunpack.c.0.s8 %v897
        %v899 = vlaneseq
        %v900 = vshrl.u32 %v899, 7
        %v901 = vsub.s32 %v898, %v900
        %v902 = vrot.slane %v888, %v901
        %v903 = vcombine.low %v879, %v895
        %v904 = vcombine.high %v879, %v895
        %v905 = vcombine.low %v886, %v902
        %v906 = vcombine.high %v886, %v902
        %v907 = vld [vmem:[#allocation2] sm:$0xff]
        %909 = vrot.lane.b32.xlu0 %v907, 120
        %v910 = vpop.permute.xlu0 %909
        %912 = vrot.lane.b32.xlu0 %v907, 112
        %v913 = vpop.permute.xlu0 %912
        %915 = vrot.lane.b32.xlu0 %v907, 104
        %v916 = vpop.permute.xlu0 %915
        %v918 = vcombine.low %v907, %v913
        %v919 = vcombine.high %v907, %v913
        %v921 = vunpack.c.l.s4 1983009808
        %v922 = vunpack.c.0.s8 %v921
        %v923 = vlaneseq
        %v924 = vshrl.u32 %v923, 7
        %v925 = vsub.s32 %v922, %v924
        %v926 = vrot.slane %v918, %v925
        %v928 = vunpack.c.l.s4 1983009808
        %v929 = vunpack.c.0.s8 %v928
        %v930 = vlaneseq
        %v931 = vshrl.u32 %v930, 7
        %v932 = vsub.s32 %v929, %v931
        %v933 = vrot.slane %v919, %v932
        %v934 = vcombine.low %v910, %v916
        %v935 = vcombine.high %v910, %v916
        %v937 = vunpack.c.l.s4 1983009808
        %v938 = vunpack.c.0.s8 %v937
        %v939 = vlaneseq
        %v940 = vshrl.u32 %v939, 7
        %v941 = vsub.s32 %v938, %v940
        %v942 = vrot.slane %v934, %v941
        %v944 = vunpack.c.l.s4 1983009808
        %v945 = vunpack.c.0.s8 %v944
        %v946 = vlaneseq
        %v947 = vshrl.u32 %v946, 7
        %v948 = vsub.s32 %v945, %v947
        %v949 = vrot.slane %v935, %v948
        %v950 = vcombine.low %v926, %v942
        %v951 = vcombine.high %v926, %v942
        %v953 = vunpack.c.l.s4 1934713408
        %v954 = vunpack.c.0.s8 %v953
        %v955 = vlaneseq
        %v956 = vshrl.u32 %v955, 7
        %v957 = vsub.s32 %v954, %v956
        %v958 = vrot.slane %v950, %v957
        %v960 = vunpack.c.l.s4 1934713408
        %v961 = vunpack.c.0.s8 %v960
        %v962 = vlaneseq
        %v963 = vshrl.u32 %v962, 7
        %v964 = vsub.s32 %v961, %v963
        %v965 = vrot.slane %v951, %v964
        %v966 = vcombine.low %v933, %v949
        %v967 = vcombine.high %v933, %v949
        %v969 = vunpack.c.l.s4 1934713408
        %v970 = vunpack.c.0.s8 %v969
        %v971 = vlaneseq
        %v972 = vshrl.u32 %v971, 7
        %v973 = vsub.s32 %v970, %v972
        %v974 = vrot.slane %v966, %v973
        %v976 = vunpack.c.l.s4 1934713408
        %v977 = vunpack.c.0.s8 %v976
        %v978 = vlaneseq
        %v979 = vshrl.u32 %v978, 7
        %v980 = vsub.s32 %v977, %v979
        %v981 = vrot.slane %v967, %v980
        %v982 = vcombine.high %v958, 0.0
        %v983 = vcombine.high %v965, 0.0
        %v984 = vcombine.high %v974, 0.0
        %v985 = vcombine.high %v981, 0.0
        %v986 = vcombine.low %v958, %v965
        %v988 = vunpack.c.l.s4 1983009808
        %v989 = vunpack.c.0.s8 %v988
        %v990 = vlaneseq
        %v991 = vshrl.u32 %v990, 7
        %v992 = vsub.s32 %v989, %v991
        %v993 = vrot.slane %v986, %v992
        %v994 = vcombine.low %v982, %v983
        %v996 = vunpack.c.l.s4 1983009808
        %v997 = vunpack.c.0.s8 %v996
        %v998 = vlaneseq
        %v999 = vshrl.u32 %v998, 7
        %v1000 = vsub.s32 %v997, %v999
        %v1001 = vrot.slane %v994, %v1000
        %v1002 = vcombine.low %v974, %v981
        %v1004 = vunpack.c.l.s4 1983009808
        %v1005 = vunpack.c.0.s8 %v1004
        %v1006 = vlaneseq
        %v1007 = vshrl.u32 %v1006, 7
        %v1008 = vsub.s32 %v1005, %v1007
        %v1009 = vrot.slane %v1002, %v1008
        %v1010 = vcombine.low %v984, %v985
        %v1012 = vunpack.c.l.s4 1983009808
        %v1013 = vunpack.c.0.s8 %v1012
        %v1014 = vlaneseq
        %v1015 = vshrl.u32 %v1014, 7
        %v1016 = vsub.s32 %v1013, %v1015
        %v1017 = vrot.slane %v1010, %v1016
        %v1018 = vcombine.low %v993, %v1001
        %v1019 = vcombine.high %v993, %v1001
        %v1021 = vunpack.c.l.s4 1934713408
        %v1022 = vunpack.c.0.s8 %v1021
        %v1023 = vlaneseq
        %v1024 = vshrl.u32 %v1023, 7
        %v1025 = vsub.s32 %v1022, %v1024
        %v1026 = vrot.slane %v1018, %v1025
        %v1028 = vunpack.c.l.s4 1934713408
        %v1029 = vunpack.c.0.s8 %v1028
        %v1030 = vlaneseq
        %v1031 = vshrl.u32 %v1030, 7
        %v1032 = vsub.s32 %v1029, %v1031
        %v1033 = vrot.slane %v1019, %v1032
        %v1034 = vcombine.low %v1009, %v1017
        %v1035 = vcombine.high %v1009, %v1017
        %v1037 = vunpack.c.l.s4 1934713408
        %v1038 = vunpack.c.0.s8 %v1037
        %v1039 = vlaneseq
        %v1040 = vshrl.u32 %v1039, 7
        %v1041 = vsub.s32 %v1038, %v1040
        %v1042 = vrot.slane %v1034, %v1041
        %v1044 = vunpack.c.l.s4 1934713408
        %v1045 = vunpack.c.0.s8 %v1044
        %v1046 = vlaneseq
        %v1047 = vshrl.u32 %v1046, 7
        %v1048 = vsub.s32 %v1045, %v1047
        %v1049 = vrot.slane %v1035, %v1048
        %v1050 = vcombine.low %v1026, %v1042
        %v1051 = vcombine.high %v1026, %v1042
        %v1052 = vcombine.low %v1033, %v1049
        %v1053 = vcombine.high %v1033, %v1049
        %v1054 = vld [vmem:[#allocation3] sm:$0xff]
        %1056 = vrot.lane.b32.xlu0 %v1054, 120
        %v1057 = vpop.permute.xlu0 %1056
        %1059 = vrot.lane.b32.xlu0 %v1054, 112
        %v1060 = vpop.permute.xlu0 %1059
        %1062 = vrot.lane.b32.xlu0 %v1054, 104
        %v1063 = vpop.permute.xlu0 %1062
        %v1065 = vcombine.low %v1054, %v1060
        %v1066 = vcombine.high %v1054, %v1060
        %v1068 = vunpack.c.l.s4 1983009808
        %v1069 = vunpack.c.0.s8 %v1068
        %v1070 = vlaneseq
        %v1071 = vshrl.u32 %v1070, 7
        %v1072 = vsub.s32 %v1069, %v1071
        %v1073 = vrot.slane %v1065, %v1072
        %v1075 = vunpack.c.l.s4 1983009808
        %v1076 = vunpack.c.0.s8 %v1075
        %v1077 = vlaneseq
        %v1078 = vshrl.u32 %v1077, 7
        %v1079 = vsub.s32 %v1076, %v1078
        %v1080 = vrot.slane %v1066, %v1079
        %v1081 = vcombine.low %v1057, %v1063
        %v1082 = vcombine.high %v1057, %v1063
        %v1084 = vunpack.c.l.s4 1983009808
        %v1085 = vunpack.c.0.s8 %v1084
        %v1086 = vlaneseq
        %v1087 = vshrl.u32 %v1086, 7
        %v1088 = vsub.s32 %v1085, %v1087
        %v1089 = vrot.slane %v1081, %v1088
        %v1091 = vunpack.c.l.s4 1983009808
        %v1092 = vunpack.c.0.s8 %v1091
        %v1093 = vlaneseq
        %v1094 = vshrl.u32 %v1093, 7
        %v1095 = vsub.s32 %v1092, %v1094
        %v1096 = vrot.slane %v1082, %v1095
        %v1097 = vcombine.low %v1073, %v1089
        %v1098 = vcombine.high %v1073, %v1089
        %v1100 = vunpack.c.l.s4 1934713408
        %v1101 = vunpack.c.0.s8 %v1100
        %v1102 = vlaneseq
        %v1103 = vshrl.u32 %v1102, 7
        %v1104 = vsub.s32 %v1101, %v1103
        %v1105 = vrot.slane %v1097, %v1104
        %v1107 = vunpack.c.l.s4 1934713408
        %v1108 = vunpack.c.0.s8 %v1107
        %v1109 = vlaneseq
        %v1110 = vshrl.u32 %v1109, 7
        %v1111 = vsub.s32 %v1108, %v1110
        %v1112 = vrot.slane %v1098, %v1111
        %v1113 = vcombine.low %v1080, %v1096
        %v1114 = vcombine.high %v1080, %v1096
        %v1116 = vunpack.c.l.s4 1934713408
        %v1117 = vunpack.c.0.s8 %v1116
        %v1118 = vlaneseq
        %v1119 = vshrl.u32 %v1118, 7
        %v1120 = vsub.s32 %v1117, %v1119
        %v1121 = vrot.slane %v1113, %v1120
        %v1123 = vunpack.c.l.s4 1934713408
        %v1124 = vunpack.c.0.s8 %v1123
        %v1125 = vlaneseq
        %v1126 = vshrl.u32 %v1125, 7
        %v1127 = vsub.s32 %v1124, %v1126
        %v1128 = vrot.slane %v1114, %v1127
        %v1129 = vcombine.high %v1105, 0.0
        %v1130 = vcombine.high %v1112, 0.0
        %v1131 = vcombine.high %v1121, 0.0
        %v1132 = vcombine.high %v1128, 0.0
        %v1133 = vcombine.low %v1105, %v1112
        %v1135 = vunpack.c.l.s4 1983009808
        %v1136 = vunpack.c.0.s8 %v1135
        %v1137 = vlaneseq
        %v1138 = vshrl.u32 %v1137, 7
        %v1139 = vsub.s32 %v1136, %v1138
        %v1140 = vrot.slane %v1133, %v1139
        %v1141 = vcombine.low %v1129, %v1130
        %v1143 = vunpack.c.l.s4 1983009808
        %v1144 = vunpack.c.0.s8 %v1143
        %v1145 = vlaneseq
        %v1146 = vshrl.u32 %v1145, 7
        %v1147 = vsub.s32 %v1144, %v1146
        %v1148 = vrot.slane %v1141, %v1147
        %v1149 = vcombine.low %v1121, %v1128
        %v1151 = vunpack.c.l.s4 1983009808
        %v1152 = vunpack.c.0.s8 %v1151
        %v1153 = vlaneseq
        %v1154 = vshrl.u32 %v1153, 7
        %v1155 = vsub.s32 %v1152, %v1154
        %v1156 = vrot.slane %v1149, %v1155
        %v1157 = vcombine.low %v1131, %v1132
        %v1159 = vunpack.c.l.s4 1983009808
        %v1160 = vunpack.c.0.s8 %v1159
        %v1161 = vlaneseq
        %v1162 = vshrl.u32 %v1161, 7
        %v1163 = vsub.s32 %v1160, %v1162
        %v1164 = vrot.slane %v1157, %v1163
        %v1165 = vcombine.low %v1140, %v1148
        %v1166 = vcombine.high %v1140, %v1148
        %v1168 = vunpack.c.l.s4 1934713408
        %v1169 = vunpack.c.0.s8 %v1168
        %v1170 = vlaneseq
        %v1171 = vshrl.u32 %v1170, 7
        %v1172 = vsub.s32 %v1169, %v1171
        %v1173 = vrot.slane %v1165, %v1172
        %v1175 = vunpack.c.l.s4 1934713408
        %v1176 = vunpack.c.0.s8 %v1175
        %v1177 = vlaneseq
        %v1178 = vshrl.u32 %v1177, 7
        %v1179 = vsub.s32 %v1176, %v1178
        %v1180 = vrot.slane %v1166, %v1179
        %v1181 = vcombine.low %v1156, %v1164
        %v1182 = vcombine.high %v1156, %v1164
        %v1184 = vunpack.c.l.s4 1934713408
        %v1185 = vunpack.c.0.s8 %v1184
        %v1186 = vlaneseq
        %v1187 = vshrl.u32 %v1186, 7
        %v1188 = vsub.s32 %v1185, %v1187
        %v1189 = vrot.slane %v1181, %v1188
        %v1191 = vunpack.c.l.s4 1934713408
        %v1192 = vunpack.c.0.s8 %v1191
        %v1193 = vlaneseq
        %v1194 = vshrl.u32 %v1193, 7
        %v1195 = vsub.s32 %v1192, %v1194
        %v1196 = vrot.slane %v1182, %v1195
        %v1197 = vcombine.low %v1173, %v1189
        %v1198 = vcombine.high %v1173, %v1189
        %v1199 = vcombine.low %v1180, %v1196
        %v1200 = vcombine.high %v1180, %v1196
        %vm1201 = vcmask 64512
        %v1203 = vsel %vm1201, %v903, 0
        %v1206 = vsel %vm1201, %v1050, 0
        %1208 = vmatprep.subr.mxu0 0.0
        %1209 = vmatpush1.xpose.msra.mxu0 0.0
        %1210 = vmatprep.subr.mxu0 0.0
        %1211 = vmatpush1.xpose.msra.mxu0 0.0
        %1212 = vmatprep.subr.mxu0 0.0
        %1213 = vmatpush1.xpose.msra.mxu0 0.0
        %1214 = vmatprep.subr.mxu0 0.0
        %1215 = vmatpush1.xpose.msra.mxu0 0.0
        %1216 = vmatprep.subr.mxu0 0.0
        %1217 = vmatpush1.xpose.msra.mxu0 0.0
        %1218 = vmatprep.subr.mxu0 0.0
        %1219 = vmatpush1.xpose.msra.mxu0 0.0
        %1220 = vmatprep.subr.mxu0 0.0
        %1221 = vmatpush1.xpose.msra.mxu0 0.0
        %1222 = vmatprep.subr.mxu0 0.0
        %1223 = vmatpush1.xpose.msra.mxu0 0.0
        %1224 = vmatprep.subr.mxu0 0.0
        %1225 = vmatpush1.xpose.msra.mxu0 0.0
        %1226 = vmatprep.subr.mxu0 0.0
        %1227 = vmatpush1.xpose.msra.mxu0 0.0
        %1228 = vmatprep.subr.mxu0 0.0
        %1229 = vmatpush1.xpose.msra.mxu0 0.0
        %1230 = vmatprep.subr.mxu0 0.0
        %1231 = vmatpush1.xpose.msra.mxu0 0.0
        %1232 = vmatprep.subr.mxu0 0.0
        %1233 = vmatpush1.xpose.msra.mxu0 0.0
        %1234 = vmatprep.subr.mxu0 0.0
        %1235 = vmatpush1.xpose.msra.mxu0 0.0
        %1236 = vmatprep.subr.mxu0 0.0
        %1237 = vmatpush1.xpose.msra.mxu0 0.0
        %1238 = vmatprep.subr.mxu0 0.0
        %1239 = vmatpush1.xpose.msra.mxu0 %v1206
        %1240 = vmatprep.subr.mxu0 0.0
        %1241 = vmatpush2.xpose.msra.mxu0 0.0
        %1242 = vmatprep.subr.mxu0 0.0
        %1243 = vmatpush2.xpose.msra.mxu0 0.0
        %1244 = vmatprep.subr.mxu0 0.0
        %1245 = vmatpush2.xpose.msra.mxu0 0.0
        %1246 = vmatprep.subr.mxu0 0.0
        %1247 = vmatpush2.xpose.msra.mxu0 0.0
        %1248 = vmatprep.subr.mxu0 0.0
        %1249 = vmatpush2.xpose.msra.mxu0 0.0
        %1250 = vmatprep.subr.mxu0 0.0
        %1251 = vmatpush2.xpose.msra.mxu0 0.0
        %1252 = vmatprep.subr.mxu0 0.0
        %1253 = vmatpush2.xpose.msra.mxu0 0.0
        %1254 = vmatprep.subr.mxu0 0.0
        %1255 = vmatpush2.xpose.msra.mxu0 0.0
        %1256 = vmatprep.subr.mxu0 0.0
        %1257 = vmatpush2.xpose.msra.mxu0 0.0
        %1258 = vmatprep.subr.mxu0 0.0
        %1259 = vmatpush2.xpose.msra.mxu0 0.0
        %1260 = vmatprep.subr.mxu0 0.0
        %1261 = vmatpush2.xpose.msra.mxu0 0.0
        %1262 = vmatprep.subr.mxu0 0.0
        %1263 = vmatpush2.xpose.msra.mxu0 0.0
        %1264 = vmatprep.subr.mxu0 0.0
        %1265 = vmatpush2.xpose.msra.mxu0 0.0
        %1266 = vmatprep.subr.mxu0 0.0
        %1267 = vmatpush2.xpose.msra.mxu0 0.0
        %1268 = vmatprep.subr.mxu0 0.0
        %1269 = vmatpush2.xpose.msra.mxu0 0.0
        %1270 = vmatprep.subr.mxu0 0.0
        %1271 = vmatpush2.xpose.msra.mxu0 0.0
        %1272 = vmatprep.mubr.f32.mxu0 0.0
        %1273 = vmatmul.mubr.f32.gmra.mxu0 %v1203
        %v1274 = vpop.f32.mrf.mxu0
        %v1275 = vadd.f32 0.0, %v1274
        %v1276 = vpop.f32.mrf.mxu0
        %1277 = vdwg.mxu0
        %v1279 = vsel %vm1201, %v904, 0
        %v1282 = vsel %vm1201, %v1051, 0
        %1284 = vmatprep.subr.mxu0 0.0
        %1285 = vmatpush1.xpose.msra.mxu0 0.0
        %1286 = vmatprep.subr.mxu0 0.0
        %1287 = vmatpush1.xpose.msra.mxu0 0.0
        %1288 = vmatprep.subr.mxu0 0.0
        %1289 = vmatpush1.xpose.msra.mxu0 0.0
        %1290 = vmatprep.subr.mxu0 0.0
        %1291 = vmatpush1.xpose.msra.mxu0 0.0
        %1292 = vmatprep.subr.mxu0 0.0
        %1293 = vmatpush1.xpose.msra.mxu0 0.0
        %1294 = vmatprep.subr.mxu0 0.0
        %1295 = vmatpush1.xpose.msra.mxu0 0.0
        %1296 = vmatprep.subr.mxu0 0.0
        %1297 = vmatpush1.xpose.msra.mxu0 0.0
        %1298 = vmatprep.subr.mxu0 0.0
        %1299 = vmatpush1.xpose.msra.mxu0 0.0
        %1300 = vmatprep.subr.mxu0 0.0
        %1301 = vmatpush1.xpose.msra.mxu0 0.0
        %1302 = vmatprep.subr.mxu0 0.0
        %1303 = vmatpush1.xpose.msra.mxu0 0.0
        %1304 = vmatprep.subr.mxu0 0.0
        %1305 = vmatpush1.xpose.msra.mxu0 0.0
        %1306 = vmatprep.subr.mxu0 0.0
        %1307 = vmatpush1.xpose.msra.mxu0 0.0
        %1308 = vmatprep.subr.mxu0 0.0
        %1309 = vmatpush1.xpose.msra.mxu0 0.0
        %1310 = vmatprep.subr.mxu0 0.0
        %1311 = vmatpush1.xpose.msra.mxu0 0.0
        %1312 = vmatprep.subr.mxu0 0.0
        %1313 = vmatpush1.xpose.msra.mxu0 0.0
        %1314 = vmatprep.subr.mxu0 0.0
        %1315 = vmatpush1.xpose.msra.mxu0 %v1282
        %1316 = vmatprep.subr.mxu0 0.0
        %1317 = vmatpush2.xpose.msra.mxu0 0.0
        %1318 = vmatprep.subr.mxu0 0.0
        %1319 = vmatpush2.xpose.msra.mxu0 0.0
        %1320 = vmatprep.subr.mxu0 0.0
        %1321 = vmatpush2.xpose.msra.mxu0 0.0
        %1322 = vmatprep.subr.mxu0 0.0
        %1323 = vmatpush2.xpose.msra.mxu0 0.0
        %1324 = vmatprep.subr.mxu0 0.0
        %1325 = vmatpush2.xpose.msra.mxu0 0.0
        %1326 = vmatprep.subr.mxu0 0.0
        %1327 = vmatpush2.xpose.msra.mxu0 0.0
        %1328 = vmatprep.subr.mxu0 0.0
        %1329 = vmatpush2.xpose.msra.mxu0 0.0
        %1330 = vmatprep.subr.mxu0 0.0
        %1331 = vmatpush2.xpose.msra.mxu0 0.0
        %1332 = vmatprep.subr.mxu0 0.0
        %1333 = vmatpush2.xpose.msra.mxu0 0.0
        %1334 = vmatprep.subr.mxu0 0.0
        %1335 = vmatpush2.xpose.msra.mxu0 0.0
        %1336 = vmatprep.subr.mxu0 0.0
        %1337 = vmatpush2.xpose.msra.mxu0 0.0
        %1338 = vmatprep.subr.mxu0 0.0
        %1339 = vmatpush2.xpose.msra.mxu0 0.0
        %1340 = vmatprep.subr.mxu0 0.0
        %1341 = vmatpush2.xpose.msra.mxu0 0.0
        %1342 = vmatprep.subr.mxu0 0.0
        %1343 = vmatpush2.xpose.msra.mxu0 0.0
        %1344 = vmatprep.subr.mxu0 0.0
        %1345 = vmatpush2.xpose.msra.mxu0 0.0
        %1346 = vmatprep.subr.mxu0 0.0
        %1347 = vmatpush2.xpose.msra.mxu0 0.0
        %1348 = vmatprep.mubr.f32.mxu0 0.0
        %1349 = vmatmul.mubr.f32.gmra.mxu0 %v1279
        %v1350 = vpop.f32.mrf.mxu0
        %v1351 = vadd.f32 0.0, %v1350
        %v1352 = vpop.f32.mrf.mxu0
        %1353 = vdwg.mxu0
        %v1355 = vsel %vm1201, %v905, 0
        %v1358 = vsel %vm1201, %v1052, 0
        %1360 = vmatprep.subr.mxu0 0.0
        %1361 = vmatpush1.xpose.msra.mxu0 0.0
        %1362 = vmatprep.subr.mxu0 0.0
        %1363 = vmatpush1.xpose.msra.mxu0 0.0
        %1364 = vmatprep.subr.mxu0 0.0
        %1365 = vmatpush1.xpose.msra.mxu0 0.0
        %1366 = vmatprep.subr.mxu0 0.0
        %1367 = vmatpush1.xpose.msra.mxu0 0.0
        %1368 = vmatprep.subr.mxu0 0.0
        %1369 = vmatpush1.xpose.msra.mxu0 0.0
        %1370 = vmatprep.subr.mxu0 0.0
        %1371 = vmatpush1.xpose.msra.mxu0 0.0
        %1372 = vmatprep.subr.mxu0 0.0
        %1373 = vmatpush1.xpose.msra.mxu0 0.0
        %1374 = vmatprep.subr.mxu0 0.0
        %1375 = vmatpush1.xpose.msra.mxu0 0.0
        %1376 = vmatprep.subr.mxu0 0.0
        %1377 = vmatpush1.xpose.msra.mxu0 0.0
        %1378 = vmatprep.subr.mxu0 0.0
        %1379 = vmatpush1.xpose.msra.mxu0 0.0
        %1380 = vmatprep.subr.mxu0 0.0
        %1381 = vmatpush1.xpose.msra.mxu0 0.0
        %1382 = vmatprep.subr.mxu0 0.0
        %1383 = vmatpush1.xpose.msra.mxu0 0.0
        %1384 = vmatprep.subr.mxu0 0.0
        %1385 = vmatpush1.xpose.msra.mxu0 0.0
        %1386 = vmatprep.subr.mxu0 0.0
        %1387 = vmatpush1.xpose.msra.mxu0 0.0
        %1388 = vmatprep.subr.mxu0 0.0
        %1389 = vmatpush1.xpose.msra.mxu0 0.0
        %1390 = vmatprep.subr.mxu0 0.0
        %1391 = vmatpush1.xpose.msra.mxu0 %v1358
        %1392 = vmatprep.subr.mxu0 0.0
        %1393 = vmatpush2.xpose.msra.mxu0 0.0
        %1394 = vmatprep.subr.mxu0 0.0
        %1395 = vmatpush2.xpose.msra.mxu0 0.0
        %1396 = vmatprep.subr.mxu0 0.0
        %1397 = vmatpush2.xpose.msra.mxu0 0.0
        %1398 = vmatprep.subr.mxu0 0.0
        %1399 = vmatpush2.xpose.msra.mxu0 0.0
        %1400 = vmatprep.subr.mxu0 0.0
        %1401 = vmatpush2.xpose.msra.mxu0 0.0
        %1402 = vmatprep.subr.mxu0 0.0
        %1403 = vmatpush2.xpose.msra.mxu0 0.0
        %1404 = vmatprep.subr.mxu0 0.0
        %1405 = vmatpush2.xpose.msra.mxu0 0.0
        %1406 = vmatprep.subr.mxu0 0.0
        %1407 = vmatpush2.xpose.msra.mxu0 0.0
        %1408 = vmatprep.subr.mxu0 0.0
        %1409 = vmatpush2.xpose.msra.mxu0 0.0
        %1410 = vmatprep.subr.mxu0 0.0
        %1411 = vmatpush2.xpose.msra.mxu0 0.0
        %1412 = vmatprep.subr.mxu0 0.0
        %1413 = vmatpush2.xpose.msra.mxu0 0.0
        %1414 = vmatprep.subr.mxu0 0.0
        %1415 = vmatpush2.xpose.msra.mxu0 0.0
        %1416 = vmatprep.subr.mxu0 0.0
        %1417 = vmatpush2.xpose.msra.mxu0 0.0
        %1418 = vmatprep.subr.mxu0 0.0
        %1419 = vmatpush2.xpose.msra.mxu0 0.0
        %1420 = vmatprep.subr.mxu0 0.0
        %1421 = vmatpush2.xpose.msra.mxu0 0.0
        %1422 = vmatprep.subr.mxu0 0.0
        %1423 = vmatpush2.xpose.msra.mxu0 0.0
        %1424 = vmatprep.mubr.f32.mxu0 0.0
        %1425 = vmatmul.mubr.f32.gmra.mxu0 %v1355
        %v1426 = vpop.f32.mrf.mxu0
        %v1427 = vadd.f32 0.0, %v1426
        %v1428 = vpop.f32.mrf.mxu0
        %1429 = vdwg.mxu0
        %v1431 = vsel %vm1201, %v906, 0
        %v1434 = vsel %vm1201, %v1053, 0
        %1436 = vmatprep.subr.mxu0 0.0
        %1437 = vmatpush1.xpose.msra.mxu0 0.0
        %1438 = vmatprep.subr.mxu0 0.0
        %1439 = vmatpush1.xpose.msra.mxu0 0.0
        %1440 = vmatprep.subr.mxu0 0.0
        %1441 = vmatpush1.xpose.msra.mxu0 0.0
        %1442 = vmatprep.subr.mxu0 0.0
        %1443 = vmatpush1.xpose.msra.mxu0 0.0
        %1444 = vmatprep.subr.mxu0 0.0
        %1445 = vmatpush1.xpose.msra.mxu0 0.0
        %1446 = vmatprep.subr.mxu0 0.0
        %1447 = vmatpush1.xpose.msra.mxu0 0.0
        %1448 = vmatprep.subr.mxu0 0.0
        %1449 = vmatpush1.xpose.msra.mxu0 0.0
        %1450 = vmatprep.subr.mxu0 0.0
        %1451 = vmatpush1.xpose.msra.mxu0 0.0
        %1452 = vmatprep.subr.mxu0 0.0
        %1453 = vmatpush1.xpose.msra.mxu0 0.0
        %1454 = vmatprep.subr.mxu0 0.0
        %1455 = vmatpush1.xpose.msra.mxu0 0.0
        %1456 = vmatprep.subr.mxu0 0.0
        %1457 = vmatpush1.xpose.msra.mxu0 0.0
        %1458 = vmatprep.subr.mxu0 0.0
        %1459 = vmatpush1.xpose.msra.mxu0 0.0
        %1460 = vmatprep.subr.mxu0 0.0
        %1461 = vmatpush1.xpose.msra.mxu0 0.0
        %1462 = vmatprep.subr.mxu0 0.0
        %1463 = vmatpush1.xpose.msra.mxu0 0.0
        %1464 = vmatprep.subr.mxu0 0.0
        %1465 = vmatpush1.xpose.msra.mxu0 0.0
        %1466 = vmatprep.subr.mxu0 0.0
        %1467 = vmatpush1.xpose.msra.mxu0 %v1434
        %1468 = vmatprep.subr.mxu0 0.0
        %1469 = vmatpush2.xpose.msra.mxu0 0.0
        %1470 = vmatprep.subr.mxu0 0.0
        %1471 = vmatpush2.xpose.msra.mxu0 0.0
        %1472 = vmatprep.subr.mxu0 0.0
        %1473 = vmatpush2.xpose.msra.mxu0 0.0
        %1474 = vmatprep.subr.mxu0 0.0
        %1475 = vmatpush2.xpose.msra.mxu0 0.0
        %1476 = vmatprep.subr.mxu0 0.0
        %1477 = vmatpush2.xpose.msra.mxu0 0.0
        %1478 = vmatprep.subr.mxu0 0.0
        %1479 = vmatpush2.xpose.msra.mxu0 0.0
        %1480 = vmatprep.subr.mxu0 0.0
        %1481 = vmatpush2.xpose.msra.mxu0 0.0
        %1482 = vmatprep.subr.mxu0 0.0
        %1483 = vmatpush2.xpose.msra.mxu0 0.0
        %1484 = vmatprep.subr.mxu0 0.0
        %1485 = vmatpush2.xpose.msra.mxu0 0.0
        %1486 = vmatprep.subr.mxu0 0.0
        %1487 = vmatpush2.xpose.msra.mxu0 0.0
        %1488 = vmatprep.subr.mxu0 0.0
        %1489 = vmatpush2.xpose.msra.mxu0 0.0
        %1490 = vmatprep.subr.mxu0 0.0
        %1491 = vmatpush2.xpose.msra.mxu0 0.0
        %1492 = vmatprep.subr.mxu0 0.0
        %1493 = vmatpush2.xpose.msra.mxu0 0.0
        %1494 = vmatprep.subr.mxu0 0.0
        %1495 = vmatpush2.xpose.msra.mxu0 0.0
        %1496 = vmatprep.subr.mxu0 0.0
        %1497 = vmatpush2.xpose.msra.mxu0 0.0
        %1498 = vmatprep.subr.mxu0 0.0
        %1499 = vmatpush2.xpose.msra.mxu0 0.0
        %1500 = vmatprep.mubr.f32.mxu0 0.0
        %1501 = vmatmul.mubr.f32.gmra.mxu0 %v1431
        %v1502 = vpop.f32.mrf.mxu0
        %v1503 = vadd.f32 0.0, %v1502
        %v1504 = vpop.f32.mrf.mxu0
        %1505 = vdwg.mxu0
        %v1506 = vsel %vm1201, %v1275, -inf
        %1507 = vmax.xlane.f32.xlu0 %v1506
        %v1508 = vpop.xlane.xlu0 %1507
        %v1509 = vsel %vm1201, %v1351, -inf
        %1510 = vmax.xlane.f32.xlu0 %v1509
        %v1511 = vpop.xlane.xlu0 %1510
        %v1512 = vsel %vm1201, %v1427, -inf
        %1513 = vmax.xlane.f32.xlu0 %v1512
        %v1514 = vpop.xlane.xlu0 %1513
        %v1515 = vsel %vm1201, %v1503, -inf
        %1516 = vmax.xlane.f32.xlu0 %v1515
        %v1517 = vpop.xlane.xlu0 %1516
        %v1518 = vsub.f32 %v1275, %v1508
        %v1519 = vsub.f32 %v1351, %v1511
        %v1520 = vsub.f32 %v1427, %v1514
        %v1521 = vsub.f32 %v1503, %v1517
        %v1522 = vmul.f32 %v1518, 1.442695
        %v1523 = vpow.pop %v1522
        %v1524 = vmul.f32 %v1519, 1.442695
        %v1525 = vpow.pop %v1524
        %v1526 = vmul.f32 %v1520, 1.442695
        %v1527 = vpow.pop %v1526
        %v1528 = vmul.f32 %v1521, 1.442695
        %v1529 = vpow.pop %v1528
        %v1530 = vsel %vm1201, %v1523, 0.0
        %1531 = vadd.xlane.f32.xlu0 %v1530
        %v1532 = vpop.xlane.xlu0 %1531
        %v1533 = vsel %vm1201, %v1525, 0.0
        %1534 = vadd.xlane.f32.xlu0 %v1533
        %v1535 = vpop.xlane.xlu0 %1534
        %v1536 = vsel %vm1201, %v1527, 0.0
        %1537 = vadd.xlane.f32.xlu0 %v1536
        %v1538 = vpop.xlane.xlu0 %1537
        %v1539 = vsel %vm1201, %v1529, 0.0
        %1540 = vadd.xlane.f32.xlu0 %v1539
        %v1541 = vpop.xlane.xlu0 %1540
        %v1543 = vsel %vm1201, %v1523, 0
        %1545 = vmatprep.subr.mxu0 0.0
        %1546 = vmatpush1.msra.mxu0 0.0
        %1547 = vmatprep.subr.mxu0 0.0
        %1548 = vmatpush1.msra.mxu0 0.0
        %1549 = vmatprep.subr.mxu0 0.0
        %1550 = vmatpush1.msra.mxu0 0.0
        %1551 = vmatprep.subr.mxu0 0.0
        %1552 = vmatpush1.msra.mxu0 0.0
        %1553 = vmatprep.subr.mxu0 0.0
        %1554 = vmatpush1.msra.mxu0 0.0
        %1555 = vmatprep.subr.mxu0 0.0
        %1556 = vmatpush1.msra.mxu0 0.0
        %1557 = vmatprep.subr.mxu0 0.0
        %1558 = vmatpush1.msra.mxu0 0.0
        %1559 = vmatprep.subr.mxu0 0.0
        %1560 = vmatpush1.msra.mxu0 0.0
        %1561 = vmatprep.subr.mxu0 0.0
        %1562 = vmatpush1.msra.mxu0 0.0
        %1563 = vmatprep.subr.mxu0 0.0
        %1564 = vmatpush1.msra.mxu0 0.0
        %1565 = vmatprep.subr.mxu0 0.0
        %1566 = vmatpush1.msra.mxu0 0.0
        %1567 = vmatprep.subr.mxu0 0.0
        %1568 = vmatpush1.msra.mxu0 0.0
        %1569 = vmatprep.subr.mxu0 0.0
        %1570 = vmatpush1.msra.mxu0 0.0
        %1571 = vmatprep.subr.mxu0 0.0
        %1572 = vmatpush1.msra.mxu0 0.0
        %1573 = vmatprep.subr.mxu0 0.0
        %1574 = vmatpush1.msra.mxu0 0.0
        %1575 = vmatprep.subr.mxu0 0.0
        %1576 = vmatpush1.msra.mxu0 %v1197
        %1577 = vmatprep.subr.mxu0 0.0
        %1578 = vmatpush2.msra.mxu0 0.0
        %1579 = vmatprep.subr.mxu0 0.0
        %1580 = vmatpush2.msra.mxu0 0.0
        %1581 = vmatprep.subr.mxu0 0.0
        %1582 = vmatpush2.msra.mxu0 0.0
        %1583 = vmatprep.subr.mxu0 0.0
        %1584 = vmatpush2.msra.mxu0 0.0
        %1585 = vmatprep.subr.mxu0 0.0
        %1586 = vmatpush2.msra.mxu0 0.0
        %1587 = vmatprep.subr.mxu0 0.0
        %1588 = vmatpush2.msra.mxu0 0.0
        %1589 = vmatprep.subr.mxu0 0.0
        %1590 = vmatpush2.msra.mxu0 0.0
        %1591 = vmatprep.subr.mxu0 0.0
        %1592 = vmatpush2.msra.mxu0 0.0
        %1593 = vmatprep.subr.mxu0 0.0
        %1594 = vmatpush2.msra.mxu0 0.0
        %1595 = vmatprep.subr.mxu0 0.0
        %1596 = vmatpush2.msra.mxu0 0.0
        %1597 = vmatprep.subr.mxu0 0.0
        %1598 = vmatpush2.msra.mxu0 0.0
        %1599 = vmatprep.subr.mxu0 0.0
        %1600 = vmatpush2.msra.mxu0 0.0
        %1601 = vmatprep.subr.mxu0 0.0
        %1602 = vmatpush2.msra.mxu0 0.0
        %1603 = vmatprep.subr.mxu0 0.0
        %1604 = vmatpush2.msra.mxu0 0.0
        %1605 = vmatprep.subr.mxu0 0.0
        %1606 = vmatpush2.msra.mxu0 0.0
        %1607 = vmatprep.subr.mxu0 0.0
        %1608 = vmatpush2.msra.mxu0 0.0
        %1609 = vmatprep.mubr.f32.mxu0 0.0
        %1610 = vmatmul.mubr.f32.gmra.mxu0 %v1543
        %v1611 = vpop.f32.mrf.mxu0
        %v1612 = vadd.f32 0.0, %v1611
        %v1613 = vpop.f32.mrf.mxu0
        %1614 = vdwg.mxu0
        %v1616 = vsel %vm1201, %v1525, 0
        %1618 = vmatprep.subr.mxu0 0.0
        %1619 = vmatpush1.msra.mxu0 0.0
        %1620 = vmatprep.subr.mxu0 0.0
        %1621 = vmatpush1.msra.mxu0 0.0
        %1622 = vmatprep.subr.mxu0 0.0
        %1623 = vmatpush1.msra.mxu0 0.0
        %1624 = vmatprep.subr.mxu0 0.0
        %1625 = vmatpush1.msra.mxu0 0.0
        %1626 = vmatprep.subr.mxu0 0.0
        %1627 = vmatpush1.msra.mxu0 0.0
        %1628 = vmatprep.subr.mxu0 0.0
        %1629 = vmatpush1.msra.mxu0 0.0
        %1630 = vmatprep.subr.mxu0 0.0
        %1631 = vmatpush1.msra.mxu0 0.0
        %1632 = vmatprep.subr.mxu0 0.0
        %1633 = vmatpush1.msra.mxu0 0.0
        %1634 = vmatprep.subr.mxu0 0.0
        %1635 = vmatpush1.msra.mxu0 0.0
        %1636 = vmatprep.subr.mxu0 0.0
        %1637 = vmatpush1.msra.mxu0 0.0
        %1638 = vmatprep.subr.mxu0 0.0
        %1639 = vmatpush1.msra.mxu0 0.0
        %1640 = vmatprep.subr.mxu0 0.0
        %1641 = vmatpush1.msra.mxu0 0.0
        %1642 = vmatprep.subr.mxu0 0.0
        %1643 = vmatpush1.msra.mxu0 0.0
        %1644 = vmatprep.subr.mxu0 0.0
        %1645 = vmatpush1.msra.mxu0 0.0
        %1646 = vmatprep.subr.mxu0 0.0
        %1647 = vmatpush1.msra.mxu0 0.0
        %1648 = vmatprep.subr.mxu0 0.0
        %1649 = vmatpush1.msra.mxu0 %v1198
        %1650 = vmatprep.subr.mxu0 0.0
        %1651 = vmatpush2.msra.mxu0 0.0
        %1652 = vmatprep.subr.mxu0 0.0
        %1653 = vmatpush2.msra.mxu0 0.0
        %1654 = vmatprep.subr.mxu0 0.0
        %1655 = vmatpush2.msra.mxu0 0.0
        %1656 = vmatprep.subr.mxu0 0.0
        %1657 = vmatpush2.msra.mxu0 0.0
        %1658 = vmatprep.subr.mxu0 0.0
        %1659 = vmatpush2.msra.mxu0 0.0
        %1660 = vmatprep.subr.mxu0 0.0
        %1661 = vmatpush2.msra.mxu0 0.0
        %1662 = vmatprep.subr.mxu0 0.0
        %1663 = vmatpush2.msra.mxu0 0.0
        %1664 = vmatprep.subr.mxu0 0.0
        %1665 = vmatpush2.msra.mxu0 0.0
        %1666 = vmatprep.subr.mxu0 0.0
        %1667 = vmatpush2.msra.mxu0 0.0
        %1668 = vmatprep.subr.mxu0 0.0
        %1669 = vmatpush2.msra.mxu0 0.0
        %1670 = vmatprep.subr.mxu0 0.0
        %1671 = vmatpush2.msra.mxu0 0.0
        %1672 = vmatprep.subr.mxu0 0.0
        %1673 = vmatpush2.msra.mxu0 0.0
        %1674 = vmatprep.subr.mxu0 0.0
        %1675 = vmatpush2.msra.mxu0 0.0
        %1676 = vmatprep.subr.mxu0 0.0
        %1677 = vmatpush2.msra.mxu0 0.0
        %1678 = vmatprep.subr.mxu0 0.0
        %1679 = vmatpush2.msra.mxu0 0.0
        %1680 = vmatprep.subr.mxu0 0.0
        %1681 = vmatpush2.msra.mxu0 0.0
        %1682 = vmatprep.mubr.f32.mxu0 0.0
        %1683 = vmatmul.mubr.f32.gmra.mxu0 %v1616
        %v1684 = vpop.f32.mrf.mxu0
        %v1685 = vadd.f32 0.0, %v1684
        %v1686 = vpop.f32.mrf.mxu0
        %1687 = vdwg.mxu0
        %v1689 = vsel %vm1201, %v1527, 0
        %1691 = vmatprep.subr.mxu0 0.0
        %1692 = vmatpush1.msra.mxu0 0.0
        %1693 = vmatprep.subr.mxu0 0.0
        %1694 = vmatpush1.msra.mxu0 0.0
        %1695 = vmatprep.subr.mxu0 0.0
        %1696 = vmatpush1.msra.mxu0 0.0
        %1697 = vmatprep.subr.mxu0 0.0
        %1698 = vmatpush1.msra.mxu0 0.0
        %1699 = vmatprep.subr.mxu0 0.0
        %1700 = vmatpush1.msra.mxu0 0.0
        %1701 = vmatprep.subr.mxu0 0.0
        %1702 = vmatpush1.msra.mxu0 0.0
        %1703 = vmatprep.subr.mxu0 0.0
        %1704 = vmatpush1.msra.mxu0 0.0
        %1705 = vmatprep.subr.mxu0 0.0
        %1706 = vmatpush1.msra.mxu0 0.0
        %1707 = vmatprep.subr.mxu0 0.0
        %1708 = vmatpush1.msra.mxu0 0.0
        %1709 = vmatprep.subr.mxu0 0.0
        %1710 = vmatpush1.msra.mxu0 0.0
        %1711 = vmatprep.subr.mxu0 0.0
        %1712 = vmatpush1.msra.mxu0 0.0
        %1713 = vmatprep.subr.mxu0 0.0
        %1714 = vmatpush1.msra.mxu0 0.0
        %1715 = vmatprep.subr.mxu0 0.0
        %1716 = vmatpush1.msra.mxu0 0.0
        %1717 = vmatprep.subr.mxu0 0.0
        %1718 = vmatpush1.msra.mxu0 0.0
        %1719 = vmatprep.subr.mxu0 0.0
        %1720 = vmatpush1.msra.mxu0 0.0
        %1721 = vmatprep.subr.mxu0 0.0
        %1722 = vmatpush1.msra.mxu0 %v1199
        %1723 = vmatprep.subr.mxu0 0.0
        %1724 = vmatpush2.msra.mxu0 0.0
        %1725 = vmatprep.subr.mxu0 0.0
        %1726 = vmatpush2.msra.mxu0 0.0
        %1727 = vmatprep.subr.mxu0 0.0
        %1728 = vmatpush2.msra.mxu0 0.0
        %1729 = vmatprep.subr.mxu0 0.0
        %1730 = vmatpush2.msra.mxu0 0.0
        %1731 = vmatprep.subr.mxu0 0.0
        %1732 = vmatpush2.msra.mxu0 0.0
        %1733 = vmatprep.subr.mxu0 0.0
        %1734 = vmatpush2.msra.mxu0 0.0
        %1735 = vmatprep.subr.mxu0 0.0
        %1736 = vmatpush2.msra.mxu0 0.0
        %1737 = vmatprep.subr.mxu0 0.0
        %1738 = vmatpush2.msra.mxu0 0.0
        %1739 = vmatprep.subr.mxu0 0.0
        %1740 = vmatpush2.msra.mxu0 0.0
        %1741 = vmatprep.subr.mxu0 0.0
        %1742 = vmatpush2.msra.mxu0 0.0
        %1743 = vmatprep.subr.mxu0 0.0
        %1744 = vmatpush2.msra.mxu0 0.0
        %1745 = vmatprep.subr.mxu0 0.0
        %1746 = vmatpush2.msra.mxu0 0.0
        %1747 = vmatprep.subr.mxu0 0.0
        %1748 = vmatpush2.msra.mxu0 0.0
        %1749 = vmatprep.subr.mxu0 0.0
        %1750 = vmatpush2.msra.mxu0 0.0
        %1751 = vmatprep.subr.mxu0 0.0
        %1752 = vmatpush2.msra.mxu0 0.0
        %1753 = vmatprep.subr.mxu0 0.0
        %1754 = vmatpush2.msra.mxu0 0.0
        %1755 = vmatprep.mubr.f32.mxu0 0.0
        %1756 = vmatmul.mubr.f32.gmra.mxu0 %v1689
        %v1757 = vpop.f32.mrf.mxu0
        %v1758 = vadd.f32 0.0, %v1757
        %v1759 = vpop.f32.mrf.mxu0
        %1760 = vdwg.mxu0
        %v1762 = vsel %vm1201, %v1529, 0
        %1764 = vmatprep.subr.mxu0 0.0
        %1765 = vmatpush1.msra.mxu0 0.0
        %1766 = vmatprep.subr.mxu0 0.0
        %1767 = vmatpush1.msra.mxu0 0.0
        %1768 = vmatprep.subr.mxu0 0.0
        %1769 = vmatpush1.msra.mxu0 0.0
        %1770 = vmatprep.subr.mxu0 0.0
        %1771 = vmatpush1.msra.mxu0 0.0
        %1772 = vmatprep.subr.mxu0 0.0
        %1773 = vmatpush1.msra.mxu0 0.0
        %1774 = vmatprep.subr.mxu0 0.0
        %1775 = vmatpush1.msra.mxu0 0.0
        %1776 = vmatprep.subr.mxu0 0.0
        %1777 = vmatpush1.msra.mxu0 0.0
        %1778 = vmatprep.subr.mxu0 0.0
        %1779 = vmatpush1.msra.mxu0 0.0
        %1780 = vmatprep.subr.mxu0 0.0
        %1781 = vmatpush1.msra.mxu0 0.0
        %1782 = vmatprep.subr.mxu0 0.0
        %1783 = vmatpush1.msra.mxu0 0.0
        %1784 = vmatprep.subr.mxu0 0.0
        %1785 = vmatpush1.msra.mxu0 0.0
        %1786 = vmatprep.subr.mxu0 0.0
        %1787 = vmatpush1.msra.mxu0 0.0
        %1788 = vmatprep.subr.mxu0 0.0
        %1789 = vmatpush1.msra.mxu0 0.0
        %1790 = vmatprep.subr.mxu0 0.0
        %1791 = vmatpush1.msra.mxu0 0.0
        %1792 = vmatprep.subr.mxu0 0.0
        %1793 = vmatpush1.msra.mxu0 0.0
        %1794 = vmatprep.subr.mxu0 0.0
        %1795 = vmatpush1.msra.mxu0 %v1200
        %1796 = vmatprep.subr.mxu0 0.0
        %1797 = vmatpush2.msra.mxu0 0.0
        %1798 = vmatprep.subr.mxu0 0.0
        %1799 = vmatpush2.msra.mxu0 0.0
        %1800 = vmatprep.subr.mxu0 0.0
        %1801 = vmatpush2.msra.mxu0 0.0
        %1802 = vmatprep.subr.mxu0 0.0
        %1803 = vmatpush2.msra.mxu0 0.0
        %1804 = vmatprep.subr.mxu0 0.0
        %1805 = vmatpush2.msra.mxu0 0.0
        %1806 = vmatprep.subr.mxu0 0.0
        %1807 = vmatpush2.msra.mxu0 0.0
        %1808 = vmatprep.subr.mxu0 0.0
        %1809 = vmatpush2.msra.mxu0 0.0
        %1810 = vmatprep.subr.mxu0 0.0
        %1811 = vmatpush2.msra.mxu0 0.0
        %1812 = vmatprep.subr.mxu0 0.0
        %1813 = vmatpush2.msra.mxu0 0.0
        %1814 = vmatprep.subr.mxu0 0.0
        %1815 = vmatpush2.msra.mxu0 0.0
        %1816 = vmatprep.subr.mxu0 0.0
        %1817 = vmatpush2.msra.mxu0 0.0
        %1818 = vmatprep.subr.mxu0 0.0
        %1819 = vmatpush2.msra.mxu0 0.0
        %1820 = vmatprep.subr.mxu0 0.0
        %1821 = vmatpush2.msra.mxu0 0.0
        %1822 = vmatprep.subr.mxu0 0.0
        %1823 = vmatpush2.msra.mxu0 0.0
        %1824 = vmatprep.subr.mxu0 0.0
        %1825 = vmatpush2.msra.mxu0 0.0
        %1826 = vmatprep.subr.mxu0 0.0
        %1827 = vmatpush2.msra.mxu0 0.0
        %1828 = vmatprep.mubr.f32.mxu0 0.0
        %1829 = vmatmul.mubr.f32.gmra.mxu0 %v1762
        %v1830 = vpop.f32.mrf.mxu0
        %v1831 = vadd.f32 0.0, %v1830
        %v1832 = vpop.f32.mrf.mxu0
        %1833 = vdwg.mxu0
        %v1834 = vrcp.pop %v1532
        %v1835 = vrcp.pop %v1535
        %v1836 = vrcp.pop %v1538
        %v1837 = vrcp.pop %v1541
        %v1838 = vmul.f32 %v1612, %v1834
        %v1839 = vmul.f32 %v1685, %v1835
        %v1840 = vmul.f32 %v1758, %v1836
        %v1841 = vmul.f32 %v1831, %v1837
        %v1842 = vld [vmem:[#allocation13] sm:$0xff]
        %v1843 = vld [vmem:[#allocation13 + $0x8] sm:$0xff]
        %v1845 = vsel %vm1201, %v1839, 0
        %1847 = vmatprep.subr.mxu0 0.0
        %1848 = vmatpush1.msra.mxu0 0.0
        %1849 = vmatprep.subr.mxu0 0.0
        %1850 = vmatpush1.msra.mxu0 0.0
        %1851 = vmatprep.subr.mxu0 0.0
        %1852 = vmatpush1.msra.mxu0 0.0
        %1853 = vmatprep.subr.mxu0 0.0
        %1854 = vmatpush1.msra.mxu0 0.0
        %1855 = vmatprep.subr.mxu0 0.0
        %1856 = vmatpush1.msra.mxu0 0.0
        %1857 = vmatprep.subr.mxu0 0.0
        %1858 = vmatpush1.msra.mxu0 0.0
        %1859 = vmatprep.subr.mxu0 0.0
        %1860 = vmatpush1.msra.mxu0 0.0
        %1861 = vmatprep.subr.mxu0 0.0
        %1862 = vmatpush1.msra.mxu0 0.0
        %1863 = vmatprep.subr.mxu0 0.0
        %1864 = vmatpush1.msra.mxu0 0.0
        %1865 = vmatprep.subr.mxu0 0.0
        %1866 = vmatpush1.msra.mxu0 0.0
        %1867 = vmatprep.subr.mxu0 0.0
        %1868 = vmatpush1.msra.mxu0 0.0
        %1869 = vmatprep.subr.mxu0 0.0
        %1870 = vmatpush1.msra.mxu0 0.0
        %1871 = vmatprep.subr.mxu0 0.0
        %1872 = vmatpush1.msra.mxu0 0.0
        %1873 = vmatprep.subr.mxu0 0.0
        %1874 = vmatpush1.msra.mxu0 0.0
        %1875 = vmatprep.subr.mxu0 0.0
        %1876 = vmatpush1.msra.mxu0 0.0
        %1877 = vmatprep.subr.mxu0 0.0
        %1878 = vmatpush1.msra.mxu0 %v1843
        %1879 = vmatprep.subr.mxu0 0.0
        %1880 = vmatpush2.msra.mxu0 0.0
        %1881 = vmatprep.subr.mxu0 0.0
        %1882 = vmatpush2.msra.mxu0 0.0
        %1883 = vmatprep.subr.mxu0 0.0
        %1884 = vmatpush2.msra.mxu0 0.0
        %1885 = vmatprep.subr.mxu0 0.0
        %1886 = vmatpush2.msra.mxu0 0.0
        %1887 = vmatprep.subr.mxu0 0.0
        %1888 = vmatpush2.msra.mxu0 0.0
        %1889 = vmatprep.subr.mxu0 0.0
        %1890 = vmatpush2.msra.mxu0 0.0
        %1891 = vmatprep.subr.mxu0 0.0
        %1892 = vmatpush2.msra.mxu0 0.0
        %1893 = vmatprep.subr.mxu0 0.0
        %1894 = vmatpush2.msra.mxu0 0.0
        %1895 = vmatprep.subr.mxu0 0.0
        %1896 = vmatpush2.msra.mxu0 0.0
        %1897 = vmatprep.subr.mxu0 0.0
        %1898 = vmatpush2.msra.mxu0 0.0
        %1899 = vmatprep.subr.mxu0 0.0
        %1900 = vmatpush2.msra.mxu0 0.0
        %1901 = vmatprep.subr.mxu0 0.0
        %1902 = vmatpush2.msra.mxu0 0.0
        %1903 = vmatprep.subr.mxu0 0.0
        %1904 = vmatpush2.msra.mxu0 0.0
        %1905 = vmatprep.subr.mxu0 0.0
        %1906 = vmatpush2.msra.mxu0 0.0
        %1907 = vmatprep.subr.mxu0 0.0
        %1908 = vmatpush2.msra.mxu0 0.0
        %1909 = vmatprep.subr.mxu0 0.0
        %1910 = vmatpush2.msra.mxu0 0.0
        %1911 = vmatprep.mubr.f32.mxu0 0.0
        %1912 = vmatmul.mubr.f32.gmra.mxu0 %v1845
        %v1913 = vpop.f32.mrf.mxu0
        %v1914 = vadd.f32 0.0, %v1913
        %v1915 = vpop.f32.mrf.mxu0
        %1916 = vdwg.mxu0
        %v1918 = vsel %vm1201, %v1838, 0
        %1920 = vmatprep.subr.mxu0 0.0
        %1921 = vmatpush1.msra.mxu0 0.0
        %1922 = vmatprep.subr.mxu0 0.0
        %1923 = vmatpush1.msra.mxu0 0.0
        %1924 = vmatprep.subr.mxu0 0.0
        %1925 = vmatpush1.msra.mxu0 0.0
        %1926 = vmatprep.subr.mxu0 0.0
        %1927 = vmatpush1.msra.mxu0 0.0
        %1928 = vmatprep.subr.mxu0 0.0
        %1929 = vmatpush1.msra.mxu0 0.0
        %1930 = vmatprep.subr.mxu0 0.0
        %1931 = vmatpush1.msra.mxu0 0.0
        %1932 = vmatprep.subr.mxu0 0.0
        %1933 = vmatpush1.msra.mxu0 0.0
        %1934 = vmatprep.subr.mxu0 0.0
        %1935 = vmatpush1.msra.mxu0 0.0
        %1936 = vmatprep.subr.mxu0 0.0
        %1937 = vmatpush1.msra.mxu0 0.0
        %1938 = vmatprep.subr.mxu0 0.0
        %1939 = vmatpush1.msra.mxu0 0.0
        %1940 = vmatprep.subr.mxu0 0.0
        %1941 = vmatpush1.msra.mxu0 0.0
        %1942 = vmatprep.subr.mxu0 0.0
        %1943 = vmatpush1.msra.mxu0 0.0
        %1944 = vmatprep.subr.mxu0 0.0
        %1945 = vmatpush1.msra.mxu0 0.0
        %1946 = vmatprep.subr.mxu0 0.0
        %1947 = vmatpush1.msra.mxu0 0.0
        %1948 = vmatprep.subr.mxu0 0.0
        %1949 = vmatpush1.msra.mxu0 0.0
        %1950 = vmatprep.subr.mxu0 0.0
        %1951 = vmatpush1.msra.mxu0 %v1842
        %1952 = vmatprep.subr.mxu0 0.0
        %1953 = vmatpush2.msra.mxu0 0.0
        %1954 = vmatprep.subr.mxu0 0.0
        %1955 = vmatpush2.msra.mxu0 0.0
        %1956 = vmatprep.subr.mxu0 0.0
        %1957 = vmatpush2.msra.mxu0 0.0
        %1958 = vmatprep.subr.mxu0 0.0
        %1959 = vmatpush2.msra.mxu0 0.0
        %1960 = vmatprep.subr.mxu0 0.0
        %1961 = vmatpush2.msra.mxu0 0.0
        %1962 = vmatprep.subr.mxu0 0.0
        %1963 = vmatpush2.msra.mxu0 0.0
        %1964 = vmatprep.subr.mxu0 0.0
        %1965 = vmatpush2.msra.mxu0 0.0
        %1966 = vmatprep.subr.mxu0 0.0
        %1967 = vmatpush2.msra.mxu0 0.0
        %1968 = vmatprep.subr.mxu0 0.0
        %1969 = vmatpush2.msra.mxu0 0.0
        %1970 = vmatprep.subr.mxu0 0.0
        %1971 = vmatpush2.msra.mxu0 0.0
        %1972 = vmatprep.subr.mxu0 0.0
        %1973 = vmatpush2.msra.mxu0 0.0
        %1974 = vmatprep.subr.mxu0 0.0
        %1975 = vmatpush2.msra.mxu0 0.0
        %1976 = vmatprep.subr.mxu0 0.0
        %1977 = vmatpush2.msra.mxu0 0.0
        %1978 = vmatprep.subr.mxu0 0.0
        %1979 = vmatpush2.msra.mxu0 0.0
        %1980 = vmatprep.subr.mxu0 0.0
        %1981 = vmatpush2.msra.mxu0 0.0
        %1982 = vmatprep.subr.mxu0 0.0
        %1983 = vmatpush2.msra.mxu0 0.0
        %1984 = vmatprep.mubr.f32.mxu0 0.0
        %1985 = vmatmul.mubr.f32.gmra.mxu0 %v1918
        %v1986 = vpop.f32.mrf.mxu0
        %v1987 = vadd.f32 %v1914, %v1986
        %v1988 = vpop.f32.mrf.mxu0
        %1989 = vdwg.mxu0
        %v1990 = vld [vmem:[#allocation13 + $0x10] sm:$0xff]
        %v1992 = vsel %vm1201, %v1840, 0
        %1994 = vmatprep.subr.mxu0 0.0
        %1995 = vmatpush1.msra.mxu0 0.0
        %1996 = vmatprep.subr.mxu0 0.0
        %1997 = vmatpush1.msra.mxu0 0.0
        %1998 = vmatprep.subr.mxu0 0.0
        %1999 = vmatpush1.msra.mxu0 0.0
        %2000 = vmatprep.subr.mxu0 0.0
        %2001 = vmatpush1.msra.mxu0 0.0
        %2002 = vmatprep.subr.mxu0 0.0
        %2003 = vmatpush1.msra.mxu0 0.0
        %2004 = vmatprep.subr.mxu0 0.0
        %2005 = vmatpush1.msra.mxu0 0.0
        %2006 = vmatprep.subr.mxu0 0.0
        %2007 = vmatpush1.msra.mxu0 0.0
        %2008 = vmatprep.subr.mxu0 0.0
        %2009 = vmatpush1.msra.mxu0 0.0
        %2010 = vmatprep.subr.mxu0 0.0
        %2011 = vmatpush1.msra.mxu0 0.0
        %2012 = vmatprep.subr.mxu0 0.0
        %2013 = vmatpush1.msra.mxu0 0.0
        %2014 = vmatprep.subr.mxu0 0.0
        %2015 = vmatpush1.msra.mxu0 0.0
        %2016 = vmatprep.subr.mxu0 0.0
        %2017 = vmatpush1.msra.mxu0 0.0
        %2018 = vmatprep.subr.mxu0 0.0
        %2019 = vmatpush1.msra.mxu0 0.0
        %2020 = vmatprep.subr.mxu0 0.0
        %2021 = vmatpush1.msra.mxu0 0.0
        %2022 = vmatprep.subr.mxu0 0.0
        %2023 = vmatpush1.msra.mxu0 0.0
        %2024 = vmatprep.subr.mxu0 0.0
        %2025 = vmatpush1.msra.mxu0 %v1990
        %2026 = vmatprep.subr.mxu0 0.0
        %2027 = vmatpush2.msra.mxu0 0.0
        %2028 = vmatprep.subr.mxu0 0.0
        %2029 = vmatpush2.msra.mxu0 0.0
        %2030 = vmatprep.subr.mxu0 0.0
        %2031 = vmatpush2.msra.mxu0 0.0
        %2032 = vmatprep.subr.mxu0 0.0
        %2033 = vmatpush2.msra.mxu0 0.0
        %2034 = vmatprep.subr.mxu0 0.0
        %2035 = vmatpush2.msra.mxu0 0.0
        %2036 = vmatprep.subr.mxu0 0.0
        %2037 = vmatpush2.msra.mxu0 0.0
        %2038 = vmatprep.subr.mxu0 0.0
        %2039 = vmatpush2.msra.mxu0 0.0
        %2040 = vmatprep.subr.mxu0 0.0
        %2041 = vmatpush2.msra.mxu0 0.0
        %2042 = vmatprep.subr.mxu0 0.0
        %2043 = vmatpush2.msra.mxu0 0.0
        %2044 = vmatprep.subr.mxu0 0.0
        %2045 = vmatpush2.msra.mxu0 0.0
        %2046 = vmatprep.subr.mxu0 0.0
        %2047 = vmatpush2.msra.mxu0 0.0
        %2048 = vmatprep.subr.mxu0 0.0
        %2049 = vmatpush2.msra.mxu0 0.0
        %2050 = vmatprep.subr.mxu0 0.0
        %2051 = vmatpush2.msra.mxu0 0.0
        %2052 = vmatprep.subr.mxu0 0.0
        %2053 = vmatpush2.msra.mxu0 0.0
        %2054 = vmatprep.subr.mxu0 0.0
        %2055 = vmatpush2.msra.mxu0 0.0
        %2056 = vmatprep.subr.mxu0 0.0
        %2057 = vmatpush2.msra.mxu0 0.0
        %2058 = vmatprep.mubr.f32.mxu0 0.0
        %2059 = vmatmul.mubr.f32.gmra.mxu0 %v1992
        %v2060 = vpop.f32.mrf.mxu0
        %v2061 = vadd.f32 0.0, %v2060
        %v2062 = vpop.f32.mrf.mxu0
        %2063 = vdwg.mxu0
        %v2064 = vadd.f32 %v1987, %v2061
        %v2065 = vld [vmem:[#allocation13 + $0x18] sm:$0xff]
        %v2067 = vsel %vm1201, %v1841, 0
        %2069 = vmatprep.subr.mxu0 0.0
        %2070 = vmatpush1.msra.mxu0 0.0
        %2071 = vmatprep.subr.mxu0 0.0
        %2072 = vmatpush1.msra.mxu0 0.0
        %2073 = vmatprep.subr.mxu0 0.0
        %2074 = vmatpush1.msra.mxu0 0.0
        %2075 = vmatprep.subr.mxu0 0.0
        %2076 = vmatpush1.msra.mxu0 0.0
        %2077 = vmatprep.subr.mxu0 0.0
        %2078 = vmatpush1.msra.mxu0 0.0
        %2079 = vmatprep.subr.mxu0 0.0
        %2080 = vmatpush1.msra.mxu0 0.0
        %2081 = vmatprep.subr.mxu0 0.0
        %2082 = vmatpush1.msra.mxu0 0.0
        %2083 = vmatprep.subr.mxu0 0.0
        %2084 = vmatpush1.msra.mxu0 0.0
        %2085 = vmatprep.subr.mxu0 0.0
        %2086 = vmatpush1.msra.mxu0 0.0
        %2087 = vmatprep.subr.mxu0 0.0
        %2088 = vmatpush1.msra.mxu0 0.0
        %2089 = vmatprep.subr.mxu0 0.0
        %2090 = vmatpush1.msra.mxu0 0.0
        %2091 = vmatprep.subr.mxu0 0.0
        %2092 = vmatpush1.msra.mxu0 0.0
        %2093 = vmatprep.subr.mxu0 0.0
        %2094 = vmatpush1.msra.mxu0 0.0
        %2095 = vmatprep.subr.mxu0 0.0
        %2096 = vmatpush1.msra.mxu0 0.0
        %2097 = vmatprep.subr.mxu0 0.0
        %2098 = vmatpush1.msra.mxu0 0.0
        %2099 = vmatprep.subr.mxu0 0.0
        %2100 = vmatpush1.msra.mxu0 %v2065
        %2101 = vmatprep.subr.mxu0 0.0
        %2102 = vmatpush2.msra.mxu0 0.0
        %2103 = vmatprep.subr.mxu0 0.0
        %2104 = vmatpush2.msra.mxu0 0.0
        %2105 = vmatprep.subr.mxu0 0.0
        %2106 = vmatpush2.msra.mxu0 0.0
        %2107 = vmatprep.subr.mxu0 0.0
        %2108 = vmatpush2.msra.mxu0 0.0
        %2109 = vmatprep.subr.mxu0 0.0
        %2110 = vmatpush2.msra.mxu0 0.0
        %2111 = vmatprep.subr.mxu0 0.0
        %2112 = vmatpush2.msra.mxu0 0.0
        %2113 = vmatprep.subr.mxu0 0.0
        %2114 = vmatpush2.msra.mxu0 0.0
        %2115 = vmatprep.subr.mxu0 0.0
        %2116 = vmatpush2.msra.mxu0 0.0
        %2117 = vmatprep.subr.mxu0 0.0
        %2118 = vmatpush2.msra.mxu0 0.0
        %2119 = vmatprep.subr.mxu0 0.0
        %2120 = vmatpush2.msra.mxu0 0.0
        %2121 = vmatprep.subr.mxu0 0.0
        %2122 = vmatpush2.msra.mxu0 0.0
        %2123 = vmatprep.subr.mxu0 0.0
        %2124 = vmatpush2.msra.mxu0 0.0
        %2125 = vmatprep.subr.mxu0 0.0
        %2126 = vmatpush2.msra.mxu0 0.0
        %2127 = vmatprep.subr.mxu0 0.0
        %2128 = vmatpush2.msra.mxu0 0.0
        %2129 = vmatprep.subr.mxu0 0.0
        %2130 = vmatpush2.msra.mxu0 0.0
        %2131 = vmatprep.subr.mxu0 0.0
        %2132 = vmatpush2.msra.mxu0 0.0
        %2133 = vmatprep.mubr.f32.mxu0 0.0
        %2134 = vmatmul.mubr.f32.gmra.mxu0 %v2067
        %v2135 = vpop.f32.mrf.mxu0
        %v2136 = vadd.f32 0.0, %v2135
        %v2137 = vpop.f32.mrf.mxu0
        %2138 = vdwg.mxu0
        %v2139 = vadd.f32 %v2064, %v2136
        %v2140 = vld [vmem:[%s9] sm:$0x1]
        %v2142 = vlaneseq
        %v2143 = vshrl.u32 %v2142, 7
        %v2144 = vsub.s32 0, %v2143
        %v2145 = vrot.slane %v2140, %v2144
        %v2147 = vadd.f32 %v2139, %v2145
        %2148 = vst.msk [vmem:[%s498] sm:$0xff] %vm686, %v2147
        %s2149 = sand.u32 %s287, 1
        %s2150 = scalar_lea.sflag [#allocation6], %s2149
        %s2151 = sand.u32 %s287, 1
        %s2152 = smul.addr %s2151, 8
        %s2153 = scalar_lea.vmem [#allocation15], %s2152
        // Predicated region
        $region89: #{tpu_custom_call.1} parent=59 // pred_check
          %p2154 = pneg %p297
        $region90: #{tpu_custom_call.1} parent=59 // pred_check_branch
          %2156 = sbr.rel (%p2154) target = $region92
        $region91: #{tpu_custom_call.1} parent=59 // pred_region
          %s2157 = sadd.s32 %s38, %s39
          %s2159 = ssub.s32 128, 128
          %2160 = vsyncadd %s2150, %s2159
          %s2161 = sadd.s32 %s2157, %s37
          %s2162 = smul.addr %s2161, 128
          %s2163 = scalar_lea.hbm %s10, %s2162
          %s2165 = sshll.u32 %s2153, 4
          %s2166 = int_to_ptr.vmem [resolvable:$true] %s2165
          %2168 = dma.vmem_to_hbm [thread:$0]  %s2166, 128, %s2163, %s2150
        $region92: #{tpu_custom_call.1} parent=59 // pred_fallthru
          _
      $region60: #{tpu_custom_call.1} parent=5 // pred_fallthru
        _
      %p2169 = scmp.le.s32.totalorder 2, %s27
      // Predicated region
      $region93: #{tpu_custom_call.1} parent=5 // pred_check
        %p2170 = pneg %p2169
      $region94: #{tpu_custom_call.1} parent=5 // pred_check_branch
        %2172 = sbr.rel (%p2170) target = $region96
      $region95: #{tpu_custom_call.1} parent=5 // pred_region
        %s2173 = ssub.s32 %s27, 2
        // Predicated region
        $region97: #{tpu_custom_call.1} parent=95 // pred_check
          %p2174 = pneg %p303
        $region98: #{tpu_custom_call.1} parent=95 // pred_check_branch
          %2176 = sbr.rel (%p2174) target = $region100
        $region99: #{tpu_custom_call.1} parent=95 // pred_region
          %s2177 = sand.u32 %s288, 1
          %s2178 = scalar_lea.sflag [#allocation6], %s2177
          %s2179 = sand.u32 %s288, 1
          %s2180 = smul.addr %s2179, 8
          %s2181 = scalar_lea.vmem [#allocation15], %s2180
          %2182 = dma.done %s2178, 128
        $region100: #{tpu_custom_call.1} parent=95 // pred_fallthru
          _
      $region96: #{tpu_custom_call.1} parent=5 // pred_fallthru
        _
    $region6: #{tpu_custom_call.1} parent=1 // loop_footer
      %s31 = sadd.s32 1, %s27
    $region7: #{tpu_custom_call.1} parent=1 // loop_footer_branch
      %26 = sbr.rel target = $region3
    $region8: #{tpu_custom_call.1} parent=1 // loop_exit
      _
    %2183 = vsyncpa [#allocation5], 1
    %s2184 = scalar_lea.sflag [#allocation5], 1
    %2185 = vsyncpa %s2184, 1
    %2186 = vsyncpa [#allocation8], 1
    %s2187 = scalar_lea.sflag [#allocation8], 1
    %2188 = vsyncpa %s2187, 1
    %2189 = vsyncpa [#allocation11], 1
    %2190 = vsyncpa [#allocation14], 1
    %2191 = vsyncpa [#allocation6], 1
    %s2192 = scalar_lea.sflag [#allocation6], 1
    %2193 = vsyncpa %s2192, 1

</llo_original>
